<compile_context>
chip_gen: v5e
topology: v5e:2x2
jax: 0.10.0
libtpu: 0.0.40
codegen_flags: <defaults>
</compile_context>

<pallas_src>
import functools

import jax
import jax.numpy as jnp
import numpy as np
from jax import lax
from jax.experimental import pallas as pl
from jax.experimental.pallas import tpu as pltpu


def _round_up(x, m):
    return ((x + m - 1) // m) * m


# Safe on v7x (64 MiB physical VMEM) as well as v5e/v6e (128 MiB).
_VMEM_LIMIT = 48 * 1024 * 1024


# ------------------------------ kernels -------------------------------------


def _layer1_kernel(adj_ref, x_ref, w0_ref, h_ref, acc_ref):
    # hidden = relu(adj @ (x @ w0)); reduction over adj column tiles (axis 1).
    # x and w0 are fully VMEM-resident; the (tk, in_pad) chunk of x is sliced
    # in-kernel, so the x @ w0 intermediate never touches HBM.
    k = pl.program_id(1)
    tk = adj_ref.shape[1]

    @pl.when(k == 0)
    def _():
        acc_ref[...] = jnp.zeros_like(acc_ref)

    start = pl.multiple_of(k * tk, tk)
    xw = jnp.dot(
        x_ref[pl.ds(start, tk), :], w0_ref[...],
        preferred_element_type=jnp.float32,
    ).astype(adj_ref.dtype)
    acc_ref[...] += jnp.dot(
        adj_ref[...], xw, preferred_element_type=jnp.float32
    )

    @pl.when(k == pl.num_programs(1) - 1)
    def _():
        h_ref[...] = jnp.maximum(acc_ref[...], 0.0).astype(h_ref.dtype)


def _layer2_kernel(adj_ref, h_ref, wcat_ref, noise_ref, z_ref, acc_ref):
    # acc = adj @ (hidden @ [Wm || Ws]); finalize: Z = noise*exp(logstd)+mean.
    k = pl.program_id(1)
    tk = adj_ref.shape[1]

    @pl.when(k == 0)
    def _():
        acc_ref[...] = jnp.zeros_like(acc_ref)

    start = pl.multiple_of(k * tk, tk)
    t = jnp.dot(
        h_ref[pl.ds(start, tk), :], wcat_ref[...],
        preferred_element_type=jnp.float32,
    ).astype(adj_ref.dtype)
    acc_ref[...] += jnp.dot(
        adj_ref[...], t, preferred_element_type=jnp.float32
    )

    @pl.when(k == pl.num_programs(1) - 1)
    def _():
        h2p = noise_ref.shape[-1]
        acc = acc_ref[...]
        mean = acc[:, :h2p]
        logstd = acc[:, h2p:]
        z = noise_ref[...].astype(jnp.float32) * jnp.exp(logstd) + mean
        z_ref[...] = z.astype(z_ref.dtype)


def _decoder_kernel(zi_ref, zj_ref, a_ref):
    # logits = Zi @ Zj^T without materializing a transpose:
    # contract last dim of both operands on the MXU, accumulate f32.
    logits = lax.dot_general(
        zi_ref[...],
        zj_ref[...],
        dimension_numbers=(((1,), (1,)), ((), ())),
        preferred_element_type=jnp.float32,
    )
    a_ref[...] = jax.nn.sigmoid(logits).astype(a_ref.dtype)


# --------------------------- pallas_call wrappers ----------------------------


def _layer1(adj, x, w0, tm, tk):
    n_pad = adj.shape[0]
    in_pad = x.shape[1]
    h1p = w0.shape[1]
    itm = adj.dtype.itemsize
    cost = pl.CostEstimate(
        flops=int(2 * n_pad * n_pad * h1p
                  + 2 * (n_pad // tm) * n_pad * in_pad * h1p),
        transcendentals=0,
        bytes_accessed=int(n_pad * n_pad * itm + n_pad * in_pad * itm
                           + in_pad * h1p * itm + n_pad * h1p * itm),
    )
    return pl.pallas_call(
        _layer1_kernel,
        out_shape=jax.ShapeDtypeStruct((n_pad, h1p), adj.dtype),
        grid_spec=pltpu.PrefetchScalarGridSpec(
            num_scalar_prefetch=0,
            grid=(n_pad // tm, n_pad // tk),
            in_specs=[
                pl.BlockSpec((tm, tk), lambda i, k: (i, k)),
                pl.BlockSpec((n_pad, in_pad), lambda i, k: (0, 0)),  # resident
                pl.BlockSpec((in_pad, h1p), lambda i, k: (0, 0)),    # resident
            ],
            out_specs=pl.BlockSpec((tm, h1p), lambda i, k: (i, 0)),
            scratch_shapes=[pltpu.VMEM((tm, h1p), jnp.float32)],
        ),
        compiler_params=pltpu.CompilerParams(
            dimension_semantics=("parallel", "arbitrary"),
            vmem_limit_bytes=_VMEM_LIMIT,
        ),
        cost_estimate=cost,
    )(adj, x, w0)


def _layer2(adj, hidden, wcat, noise, tm, tk):
    n_pad = adj.shape[0]
    h1p = hidden.shape[1]
    two_h2 = wcat.shape[1]
    h2p = noise.shape[1]
    itm = adj.dtype.itemsize
    cost = pl.CostEstimate(
        flops=int(2 * n_pad * n_pad * two_h2
                  + 2 * (n_pad // tm) * n_pad * h1p * two_h2),
        transcendentals=int(n_pad * h2p),
        bytes_accessed=int(n_pad * n_pad * itm + n_pad * h1p * itm
                           + h1p * two_h2 * itm
                           + n_pad * h2p * noise.dtype.itemsize
                           + n_pad * h2p * itm),
    )
    return pl.pallas_call(
        _layer2_kernel,
        out_shape=jax.ShapeDtypeStruct((n_pad, h2p), adj.dtype),
        grid_spec=pltpu.PrefetchScalarGridSpec(
            num_scalar_prefetch=0,
            grid=(n_pad // tm, n_pad // tk),
            in_specs=[
                pl.BlockSpec((tm, tk), lambda i, k: (i, k)),
                pl.BlockSpec((n_pad, h1p), lambda i, k: (0, 0)),     # resident
                pl.BlockSpec((h1p, two_h2), lambda i, k: (0, 0)),    # resident
                pl.BlockSpec((tm, h2p), lambda i, k: (i, 0)),
            ],
            out_specs=pl.BlockSpec((tm, h2p), lambda i, k: (i, 0)),
            scratch_shapes=[pltpu.VMEM((tm, two_h2), jnp.float32)],
        ),
        compiler_params=pltpu.CompilerParams(
            dimension_semantics=("parallel", "arbitrary"),
            vmem_limit_bytes=_VMEM_LIMIT,
        ),
        cost_estimate=cost,
    )(adj, hidden, wcat, noise)


def _decode(z, tm, tn):
    n_pad, h2p = z.shape
    itm = z.dtype.itemsize
    cost = pl.CostEstimate(
        flops=int(2 * n_pad * n_pad * h2p),
        transcendentals=int(n_pad * n_pad),
        # Zi is read once; Zj is re-streamed once per row-tile; output is f32.
        bytes_accessed=int(n_pad * h2p * itm
                           + (n_pad // tm) * n_pad * h2p * itm
                           + n_pad * n_pad * 4),
    )
    return pl.pallas_call(
        _decoder_kernel,
        out_shape=jax.ShapeDtypeStruct((n_pad, n_pad), jnp.float32),
        grid_spec=pltpu.PrefetchScalarGridSpec(
            num_scalar_prefetch=0,
            grid=(n_pad // tm, n_pad // tn),
            in_specs=[
                pl.BlockSpec((tm, h2p), lambda i, j: (i, 0)),
                pl.BlockSpec((tn, h2p), lambda i, j: (j, 0)),
            ],
            out_specs=pl.BlockSpec((tm, tn), lambda i, j: (i, j)),
        ),
        compiler_params=pltpu.CompilerParams(
            dimension_semantics=("parallel", "parallel"),
            vmem_limit_bytes=_VMEM_LIMIT,
        ),
        cost_estimate=cost,
    )(z, z)


# ------------------------------ forward --------------------------------------


def vgae_forward(adj, x, w0, wm, ws, noise, *,
                 tm=512, tn=512, tk=512, compute_dtype=jnp.bfloat16):
    n, in_dim = x.shape
    h1 = w0.shape[1]
    h2 = wm.shape[1]

    # Clamp tiles for small problems (256-aligned for the v6e/v7x MXU, still
    # 128-aligned for v5e), then pad N so every tile divides it.  With the
    # (equal) default tiles the lcm adds no extra padding beyond one tile.
    small = _round_up(n, 256)
    tm, tn, tk = min(tm, small), min(tn, small), min(tk, small)
    tile = int(np.lcm.reduce([tm, tn, tk]))
    n_pad = _round_up(n, tile)
    in_pad = _round_up(in_dim, 128)
    h1_pad = _round_up(h1, 128)
    h2_pad = _round_up(h2, 128)

    def pad(a, rows, cols, dtype):
        if a.shape == (rows, cols):
            return a if a.dtype == dtype else a.astype(dtype)
        out = jnp.zeros((rows, cols), dtype)
        return out.at[: a.shape[0], : a.shape[1]].set(a.astype(dtype))

    adj_p = pad(adj, n_pad, n_pad, compute_dtype)
    x_p = pad(x, n_pad, in_pad, compute_dtype)
    w0_p = pad(w0, in_pad, h1_pad, compute_dtype)

    # Fused mean/logstd weight: cols [0, h2_pad) -> mean, [h2_pad, 2*h2_pad) -> logstd.
    wcat = jnp.zeros((h1_pad, 2 * h2_pad), compute_dtype)
    wcat = wcat.at[:h1, :h2].set(wm.astype(compute_dtype))
    wcat = wcat.at[:h1, h2_pad: h2_pad + h2].set(ws.astype(compute_dtype))

    # TODO(synk): gaussian noise is passed in explicitly (torch.randn in the
    # reference); it could instead be drawn in-kernel via pltpu.prng_*.
    noise_p = pad(noise, n_pad, h2_pad, jnp.float32)

    hidden = _layer1(adj_p, x_p, w0_p, tm, tk)            # [n_pad, h1_pad]  bf16
    z = _layer2(adj_p, hidden, wcat, noise_p, tm, tk)     # [n_pad, h2_pad]  bf16
    a_pred = _decode(z, tm, tn)                           # [n_pad, n_pad]   f32

    if n_pad == n:
        return a_pred
    return a_pred[:n, :n]


# ------------------------------ reference / demo ------------------------------


def glorot_init(key, input_dim, output_dim):
    init_range = np.sqrt(6.0 / (input_dim + output_dim))
    return jax.random.uniform(
        key, (input_dim, output_dim), jnp.float32,
        minval=-init_range, maxval=init_range)


def _ref_forward_bf16(adj, x, w0, wm, ws, noise):
    # Emulates the kernel's bf16 storage / f32 accumulation for a tight check.
    def c(a):
        return a.astype(jnp.bfloat16).astype(jnp.float32)

    adj_c, x_c, w0_c, wm_c, ws_c = map(c, (adj, x, w0, wm, ws))
    xw = c(x_c @ w0_c)
    h = c(jnp.maximum(adj_c @ xw, 0.0))
    t_m = c(h @ wm_c)
    t_s = c(h @ ws_c)
    mean = adj_c @ t_m
    logstd = adj_c @ t_s
    z = c(noise * jnp.exp(logstd) + mean)
    return jax.nn.sigmoid(z @ z.T)


def _ref_forward_f32(adj, x, w0, wm, ws, noise):
    h = jnp.maximum(adj @ (x @ w0), 0.0)
    mean = adj @ (h @ wm)
    logstd = adj @ (h @ ws)
    z = noise * jnp.exp(logstd) + mean
    return jax.nn.sigmoid(z @ z.T)


if __name__ == "__main__":
    N = 16
    INPUT_DIM = 32
    HIDDEN1 = 32
    HIDDEN2 = 16

    key = jax.random.PRNGKey(0)
    k_adj, k_x, k_w0, k_wm, k_ws, k_noise = jax.random.split(key, 6)

    # deterministic synthetic inputs
    adj_raw = (jax.random.uniform(k_adj, (N, N)) > 0.7).astype(jnp.float32)
    adj = adj_raw + adj_raw.T + jnp.eye(N, dtype=jnp.float32)
    deg = jnp.sum(adj, axis=1, keepdims=True)
    adj = adj / jnp.maximum(deg, 1.0)            # row-normalized dense adjacency

    x = jax.random.normal(k_x, (N, INPUT_DIM), jnp.float32)
    w0 = glorot_init(k_w0, INPUT_DIM, HIDDEN1)
    wm = glorot_init(k_wm, HIDDEN1, HIDDEN2)
    ws = glorot_init(k_ws, HIDDEN1, HIDDEN2)
    noise = jax.random.normal(k_noise, (N, HIDDEN2), jnp.float32)

    fwd = jax.jit(functools.partial(vgae_forward))
    a_pred = fwd(adj, x, w0, wm, ws, noise)
    jax.block_until_ready(a_pred)
    a_pred_np = np.asarray(a_pred)

    # Tight check against a bf16-storage-emulating reference (same math).
    a_ref_bf16 = np.asarray(_ref_forward_bf16(adj, x, w0, wm, ws, noise))
    np.testing.assert_allclose(a_pred_np, a_ref_bf16, rtol=1e-3, atol=3e-3)

    # Loose sanity check against the full-f32 reference semantics.
    a_ref_f32 = np.asarray(_ref_forward_f32(adj, x, w0, wm, ws, noise))
    np.testing.assert_allclose(a_pred_np, a_ref_f32, rtol=0.0, atol=1e-1)

    print("KERNEL_OK")
</pallas_src>

<mosaic_0001>
module attributes {stable_mosaic.version = 11 : i64} {
  func.func @_layer1_kernel(%arg0: i32, %arg1: i32, %arg2: memref<256x256xbf16, #tpu.memory_space<vmem>>, %arg3: memref<256x128xbf16, #tpu.memory_space<vmem>>, %arg4: memref<128x128xbf16, #tpu.memory_space<vmem>>, %arg5: memref<256x128xbf16, #tpu.memory_space<vmem>>, %arg6: memref<256x128xf32, #tpu.memory_space<vmem>>) attributes {dimension_semantics = [#tpu.dimension_semantics<parallel>, #tpu.dimension_semantics<arbitrary>], iteration_bounds = array<i64: 1, 1>, scalar_prefetch = 0 : i64, scratch_operands = 1 : i64, tpu.core_type = #tpu.core_type<tc>, window_params = [{transform_indices = @transform_0, window_bounds = array<i64: 256, 256>}, {pipeline_mode = #tpu.pipeline_mode<synchronous>, transform_indices = @transform_1, window_bounds = array<i64: 256, 128>}, {pipeline_mode = #tpu.pipeline_mode<synchronous>, transform_indices = @transform_2, window_bounds = array<i64: 128, 128>}, {transform_indices = @transform_3, window_bounds = array<i64: 256, 128>}]} {
    %c0_i32 = arith.constant 0 : i32
    %0 = arith.cmpi eq, %arg1, %c0_i32 : i32
    %1 = arith.extui %0 : i1 to i32
    %c0_i32_0 = arith.constant 0 : i32
    %2 = arith.cmpi ne, %1, %c0_i32_0 : i32
    scf.if %2 {
      %cst_12 = arith.constant 0.000000e+00 : f32
      %18 = vector.broadcast %cst_12 : f32 to vector<256x128xf32>
      %c0_13 = arith.constant 0 : index
      %c0_14 = arith.constant 0 : index
      %19 = vector.load %arg6[%c0_13, %c0_14] : memref<256x128xf32, #tpu.memory_space<vmem>>, vector<256x128xf32>
      tpu.vector_store %arg6[%c0_13, %c0_14], %18 {strides = array<i32>} : memref<256x128xf32, #tpu.memory_space<vmem>>, vector<256x128xf32>,
    } else {
    }
    %c256_i32 = arith.constant 256 : i32
    %3 = arith.muli %arg1, %c256_i32 : i32
    %4 = tpu.assume_multiple %3, 256 : i32
    %5 = arith.index_cast %4 : i32 to index
    %c0 = arith.constant 0 : index
    %6 = vector.load %arg3[%5, %c0] : memref<256x128xbf16, #tpu.memory_space<vmem>>, vector<256x128xbf16>
    %c0_1 = arith.constant 0 : index
    %c0_2 = arith.constant 0 : index
    %7 = vector.load %arg4[%c0_1, %c0_2] : memref<128x128xbf16, #tpu.memory_space<vmem>>, vector<128x128xbf16>
    %cst = arith.constant dense<0.000000e+00> : vector<256x128xf32>
    %8 = tpu.matmul %6, %7, %cst {dimension_numbers = #tpu.dot_dimension_numbers<[1], [0], [0], [1], [0, 0, 1, 1], [], []>} : vector<256x128xbf16>, vector<128x128xbf16>, vector<256x128xf32> -> vector<256x128xf32>
    %9 = arith.truncf %8 : vector<256x128xf32> to vector<256x128xbf16>
    %c0_3 = arith.constant 0 : index
    %c0_4 = arith.constant 0 : index
    %10 = vector.load %arg6[%c0_3, %c0_4] : memref<256x128xf32, #tpu.memory_space<vmem>>, vector<256x128xf32>
    %c0_5 = arith.constant 0 : index
    %c0_6 = arith.constant 0 : index
    %11 = vector.load %arg2[%c0_5, %c0_6] : memref<256x256xbf16, #tpu.memory_space<vmem>>, vector<256x256xbf16>
    %cst_7 = arith.constant dense<0.000000e+00> : vector<256x128xf32>
    %12 = tpu.matmul %11, %9, %cst_7 {dimension_numbers = #tpu.dot_dimension_numbers<[1], [0], [0], [1], [0, 0, 1, 1], [], []>} : vector<256x256xbf16>, vector<256x128xbf16>, vector<256x128xf32> -> vector<256x128xf32>
    %13 = arith.addf %10, %12 : vector<256x128xf32>
    %c0_8 = arith.constant 0 : index
    %c0_9 = arith.constant 0 : index
    %14 = vector.load %arg6[%c0_8, %c0_9] : memref<256x128xf32, #tpu.memory_space<vmem>>, vector<256x128xf32>
    tpu.vector_store %arg6[%c0_8, %c0_9], %13 {strides = array<i32>} : memref<256x128xf32, #tpu.memory_space<vmem>>, vector<256x128xf32>,
    %c0_i32_10 = arith.constant 0 : i32
    %15 = arith.cmpi eq, %arg1, %c0_i32_10 : i32
    %16 = arith.extui %15 : i1 to i32
    %c0_i32_11 = arith.constant 0 : i32
    %17 = arith.cmpi ne, %16, %c0_i32_11 : i32
    scf.if %17 {
      %c0_12 = arith.constant 0 : index
      %c0_13 = arith.constant 0 : index
      %18 = vector.load %arg6[%c0_12, %c0_13] : memref<256x128xf32, #tpu.memory_space<vmem>>, vector<256x128xf32>
      %cst_14 = arith.constant 0.000000e+00 : f32
      %19 = vector.broadcast %cst_14 : f32 to vector<256x128xf32>
      %20 = arith.maximumf %18, %19 : vector<256x128xf32>
      %21 = arith.truncf %20 : vector<256x128xf32> to vector<256x128xbf16>
      %c0_15 = arith.constant 0 : index
      %c0_16 = arith.constant 0 : index
      %22 = vector.load %arg5[%c0_15, %c0_16] : memref<256x128xbf16, #tpu.memory_space<vmem>>, vector<256x128xbf16>
      tpu.vector_store %arg5[%c0_15, %c0_16], %21 {strides = array<i32>} : memref<256x128xbf16, #tpu.memory_space<vmem>>, vector<256x128xbf16>,
    } else {
    }
    return
  }
  func.func @transform_0(%arg0: i32, %arg1: i32) -> (i32, i32) {
    %c0_i32 = arith.constant 0 : i32
    return %arg0, %arg1 : i32, i32
  }
  func.func @transform_1(%arg0: i32, %arg1: i32) -> (i32, i32) {
    %c0_i32 = arith.constant 0 : i32
    %c0_i32_0 = arith.constant 0 : i32
    %c0_i32_1 = arith.constant 0 : i32
    return %c0_i32, %c0_i32_0 : i32, i32
  }
  func.func @transform_2(%arg0: i32, %arg1: i32) -> (i32, i32) {
    %c0_i32 = arith.constant 0 : i32
    %c0_i32_0 = arith.constant 0 : i32
    %c0_i32_1 = arith.constant 0 : i32
    return %c0_i32, %c0_i32_0 : i32, i32
  }
  func.func @transform_3(%arg0: i32, %arg1: i32) -> (i32, i32) {
    %c0_i32 = arith.constant 0 : i32
    %c0_i32_0 = arith.constant 0 : i32
    return %arg0, %c0_i32 : i32, i32
  }
}

module attributes {stable_mosaic.version = 11 : i64} {
  func.func @_layer2_kernel(%arg0: i32, %arg1: i32, %arg2: memref<256x256xbf16, #tpu.memory_space<vmem>>, %arg3: memref<256x128xbf16, #tpu.memory_space<vmem>>, %arg4: memref<128x256xbf16, #tpu.memory_space<vmem>>, %arg5: memref<256x128xf32, #tpu.memory_space<vmem>>, %arg6: memref<256x128xbf16, #tpu.memory_space<vmem>>, %arg7: memref<256x256xf32, #tpu.memory_space<vmem>>) attributes {dimension_semantics = [#tpu.dimension_semantics<parallel>, #tpu.dimension_semantics<arbitrary>], iteration_bounds = array<i64: 1, 1>, scalar_prefetch = 0 : i64, scratch_operands = 1 : i64, tpu.core_type = #tpu.core_type<tc>, window_params = [{transform_indices = @transform_0, window_bounds = array<i64: 256, 256>}, {pipeline_mode = #tpu.pipeline_mode<synchronous>, transform_indices = @transform_1, window_bounds = array<i64: 256, 128>}, {pipeline_mode = #tpu.pipeline_mode<synchronous>, transform_indices = @transform_2, window_bounds = array<i64: 128, 256>}, {transform_indices = @transform_3, window_bounds = array<i64: 256, 128>}, {transform_indices = @transform_4, window_bounds = array<i64: 256, 128>}]} {
    %c0_i32 = arith.constant 0 : i32
    %0 = arith.cmpi eq, %arg1, %c0_i32 : i32
    %1 = arith.extui %0 : i1 to i32
    %c0_i32_0 = arith.constant 0 : i32
    %2 = arith.cmpi ne, %1, %c0_i32_0 : i32
    scf.if %2 {
      %cst_12 = arith.constant 0.000000e+00 : f32
      %18 = vector.broadcast %cst_12 : f32 to vector<256x256xf32>
      %c0_13 = arith.constant 0 : index
      %c0_14 = arith.constant 0 : index
      %19 = vector.load %arg7[%c0_13, %c0_14] : memref<256x256xf32, #tpu.memory_space<vmem>>, vector<256x256xf32>
      tpu.vector_store %arg7[%c0_13, %c0_14], %18 {strides = array<i32>} : memref<256x256xf32, #tpu.memory_space<vmem>>, vector<256x256xf32>,
    } else {
    }
    %c256_i32 = arith.constant 256 : i32
    %3 = arith.muli %arg1, %c256_i32 : i32
    %4 = tpu.assume_multiple %3, 256 : i32
    %5 = arith.index_cast %4 : i32 to index
    %c0 = arith.constant 0 : index
    %6 = vector.load %arg3[%5, %c0] : memref<256x128xbf16, #tpu.memory_space<vmem>>, vector<256x128xbf16>
    %c0_1 = arith.constant 0 : index
    %c0_2 = arith.constant 0 : index
    %7 = vector.load %arg4[%c0_1, %c0_2] : memref<128x256xbf16, #tpu.memory_space<vmem>>, vector<128x256xbf16>
    %cst = arith.constant dense<0.000000e+00> : vector<256x256xf32>
    %8 = tpu.matmul %6, %7, %cst {dimension_numbers = #tpu.dot_dimension_numbers<[1], [0], [0], [1], [0, 0, 1, 1], [], []>} : vector<256x128xbf16>, vector<128x256xbf16>, vector<256x256xf32> -> vector<256x256xf32>
    %9 = arith.truncf %8 : vector<256x256xf32> to vector<256x256xbf16>
    %c0_3 = arith.constant 0 : index
    %c0_4 = arith.constant 0 : index
    %10 = vector.load %arg7[%c0_3, %c0_4] : memref<256x256xf32, #tpu.memory_space<vmem>>, vector<256x256xf32>
    %c0_5 = arith.constant 0 : index
    %c0_6 = arith.constant 0 : index
    %11 = vector.load %arg2[%c0_5, %c0_6] : memref<256x256xbf16, #tpu.memory_space<vmem>>, vector<256x256xbf16>
    %cst_7 = arith.constant dense<0.000000e+00> : vector<256x256xf32>
    %12 = tpu.matmul %11, %9, %cst_7 {dimension_numbers = #tpu.dot_dimension_numbers<[1], [0], [0], [1], [0, 0, 1, 1], [], []>} : vector<256x256xbf16>, vector<256x256xbf16>, vector<256x256xf32> -> vector<256x256xf32>
    %13 = arith.addf %10, %12 : vector<256x256xf32>
    %c0_8 = arith.constant 0 : index
    %c0_9 = arith.constant 0 : index
    %14 = vector.load %arg7[%c0_8, %c0_9] : memref<256x256xf32, #tpu.memory_space<vmem>>, vector<256x256xf32>
    tpu.vector_store %arg7[%c0_8, %c0_9], %13 {strides = array<i32>} : memref<256x256xf32, #tpu.memory_space<vmem>>, vector<256x256xf32>,
    %c0_i32_10 = arith.constant 0 : i32
    %15 = arith.cmpi eq, %arg1, %c0_i32_10 : i32
    %16 = arith.extui %15 : i1 to i32
    %c0_i32_11 = arith.constant 0 : i32
    %17 = arith.cmpi ne, %16, %c0_i32_11 : i32
    scf.if %17 {
      %c0_12 = arith.constant 0 : index
      %c0_13 = arith.constant 0 : index
      %18 = vector.load %arg7[%c0_12, %c0_13] : memref<256x256xf32, #tpu.memory_space<vmem>>, vector<256x256xf32>
      %19 = vector.extract_strided_slice %18 {offsets = [0, 0], sizes = [256, 128], strides = [1, 1]} : vector<256x256xf32> to vector<256x128xf32>
      %20 = vector.extract_strided_slice %18 {offsets = [0, 128], sizes = [256, 128], strides = [1, 1]} : vector<256x256xf32> to vector<256x128xf32>
      %c0_14 = arith.constant 0 : index
      %c0_15 = arith.constant 0 : index
      %21 = vector.load %arg5[%c0_14, %c0_15] : memref<256x128xf32, #tpu.memory_space<vmem>>, vector<256x128xf32>
      %22 = math.exp %20 : vector<256x128xf32>
      %23 = arith.mulf %21, %22 : vector<256x128xf32>
      %24 = arith.addf %23, %19 : vector<256x128xf32>
      %25 = arith.truncf %24 : vector<256x128xf32> to vector<256x128xbf16>
      %c0_16 = arith.constant 0 : index
      %c0_17 = arith.constant 0 : index
      %26 = vector.load %arg6[%c0_16, %c0_17] : memref<256x128xbf16, #tpu.memory_space<vmem>>, vector<256x128xbf16>
      tpu.vector_store %arg6[%c0_16, %c0_17], %25 {strides = array<i32>} : memref<256x128xbf16, #tpu.memory_space<vmem>>, vector<256x128xbf16>,
    } else {
    }
    return
  }
  func.func @transform_0(%arg0: i32, %arg1: i32) -> (i32, i32) {
    %c0_i32 = arith.constant 0 : i32
    return %arg0, %arg1 : i32, i32
  }
  func.func @transform_1(%arg0: i32, %arg1: i32) -> (i32, i32) {
    %c0_i32 = arith.constant 0 : i32
    %c0_i32_0 = arith.constant 0 : i32
    %c0_i32_1 = arith.constant 0 : i32
    return %c0_i32, %c0_i32_0 : i32, i32
  }
  func.func @transform_2(%arg0: i32, %arg1: i32) -> (i32, i32) {
    %c0_i32 = arith.constant 0 : i32
    %c0_i32_0 = arith.constant 0 : i32
    %c0_i32_1 = arith.constant 0 : i32
    return %c0_i32, %c0_i32_0 : i32, i32
  }
  func.func @transform_3(%arg0: i32, %arg1: i32) -> (i32, i32) {
    %c0_i32 = arith.constant 0 : i32
    %c0_i32_0 = arith.constant 0 : i32
    return %arg0, %c0_i32 : i32, i32
  }
  func.func @transform_4(%arg0: i32, %arg1: i32) -> (i32, i32) {
    %c0_i32 = arith.constant 0 : i32
    %c0_i32_0 = arith.constant 0 : i32
    return %arg0, %c0_i32 : i32, i32
  }
}

module attributes {stable_mosaic.version = 11 : i64} {
  func.func @_decoder_kernel(%arg0: i32, %arg1: i32, %arg2: memref<256x128xbf16, #tpu.memory_space<vmem>>, %arg3: memref<256x128xbf16, #tpu.memory_space<vmem>>, %arg4: memref<256x256xf32, #tpu.memory_space<vmem>>) attributes {dimension_semantics = [#tpu.dimension_semantics<parallel>, #tpu.dimension_semantics<parallel>], iteration_bounds = array<i64: 1, 1>, scalar_prefetch = 0 : i64, scratch_operands = 0 : i64, tpu.core_type = #tpu.core_type<tc>, window_params = [{transform_indices = @transform_0, window_bounds = array<i64: 256, 128>}, {transform_indices = @transform_1, window_bounds = array<i64: 256, 128>}, {transform_indices = @transform_2, window_bounds = array<i64: 256, 256>}]} {
    %c0 = arith.constant 0 : index
    %c0_0 = arith.constant 0 : index
    %0 = vector.load %arg2[%c0, %c0_0] : memref<256x128xbf16, #tpu.memory_space<vmem>>, vector<256x128xbf16>
    %c0_1 = arith.constant 0 : index
    %c0_2 = arith.constant 0 : index
    %1 = vector.load %arg3[%c0_1, %c0_2] : memref<256x128xbf16, #tpu.memory_space<vmem>>, vector<256x128xbf16>
    %cst = arith.constant dense<0.000000e+00> : vector<256x256xf32>
    %2 = tpu.matmul %0, %1, %cst {dimension_numbers = #tpu.dot_dimension_numbers<[1], [1], [0], [0], [0, 0, 1, 0], [], []>} : vector<256x128xbf16>, vector<256x128xbf16>, vector<256x256xf32> -> vector<256x256xf32>
    %3 = arith.negf %2 : vector<256x256xf32>
    %4 = math.exp %3 : vector<256x256xf32>
    %cst_3 = arith.constant 1.000000e+00 : f32
    %5 = vector.broadcast %cst_3 : f32 to vector<256x256xf32>
    %6 = arith.addf %5, %4 : vector<256x256xf32>
    %7 = arith.divf %5, %6 : vector<256x256xf32>
    %c0_4 = arith.constant 0 : index
    %c0_5 = arith.constant 0 : index
    %8 = vector.load %arg4[%c0_4, %c0_5] : memref<256x256xf32, #tpu.memory_space<vmem>>, vector<256x256xf32>
    tpu.vector_store %arg4[%c0_4, %c0_5], %7 {strides = array<i32>} : memref<256x256xf32, #tpu.memory_space<vmem>>, vector<256x256xf32>,
    return
  }
  func.func @transform_0(%arg0: i32, %arg1: i32) -> (i32, i32) {
    %c0_i32 = arith.constant 0 : i32
    %c0_i32_0 = arith.constant 0 : i32
    return %arg0, %c0_i32 : i32, i32
  }
  func.func @transform_1(%arg0: i32, %arg1: i32) -> (i32, i32) {
    %c0_i32 = arith.constant 0 : i32
    %c0_i32_0 = arith.constant 0 : i32
    return %arg1, %c0_i32 : i32, i32
  }
  func.func @transform_2(%arg0: i32, %arg1: i32) -> (i32, i32) {
    %c0_i32 = arith.constant 0 : i32
    return %arg0, %arg1 : i32, i32
  }
}

</mosaic_0001>

<llo_original>
// kernel: vgae_forward.5
$region0: #{vgae_forward.5}
  #allocation0 [shape = 'u32[]', space=smem, size = 0x4, offset = 0x4, fixed_abs, tag = 'smem constant byte address 0x4 - core index']
  #allocation1 [shape = 'u32[72,128]{1,0:T(1,128)}', space=vmem, size = 0x9000, scoped, tag = 'internal scratch']
  %s0 = inlined_call_operand.vmem [shape: bf16[256,128], index: 0, kind: input, shape index: {}, may-alias: {0,1}]
  %s1 = inlined_call_operand.vmem [shape: bf16[256,128], index: 1, kind: input, shape index: {}, may-alias: {0,1}]
  %s2 = inlined_call_operand.vmem [shape: f32[256,256], index: 2, kind: output, shape index: {}]
  %s3 = sld [smem:[#allocation0]]
  $region18: #{vgae_forward.5} parent=0
    _
  %s5 = ssub.s32 1, %s3
  %s6 = scalar_select 0, %s5, %s3
  // Predicated region
  $region2: #{vgae_forward.5} parent=0 // pred_check
    _
  $region3: #{vgae_forward.5} parent=0 // pred_check_branch
    %8 = sbr.rel (0) target = $region5
  $region4: #{vgae_forward.5} parent=0 // pred_region
    _
  $region5: #{vgae_forward.5} parent=0 // pred_fallthru
    _
  // Predicated region
  $region6: #{vgae_forward.5} parent=0 // pred_check
    _
  $region7: #{vgae_forward.5} parent=0 // pred_check_branch
    %10 = sbr.rel (0) target = $region9
  $region8: #{vgae_forward.5} parent=0 // pred_region
    _
  $region9: #{vgae_forward.5} parent=0 // pred_fallthru
    _
  %v11 = vld [vmem:[%s0] sm:$0xf]
  %v12 = vld [vmem:[%s0 + $0x4] sm:$0xf]
  %v13 = vld [vmem:[%s0 + $0x8] sm:$0xf]
  %v14 = vld [vmem:[%s0 + $0xc] sm:$0xf]
  %v15 = vld [vmem:[%s0 + $0x10] sm:$0xf]
  %v16 = vld [vmem:[%s0 + $0x14] sm:$0xf]
  %v17 = vld [vmem:[%s0 + $0x18] sm:$0xf]
  %v18 = vld [vmem:[%s0 + $0x1c] sm:$0xf]
  %v19 = vld [vmem:[%s0 + $0x20] sm:$0xf]
  %v20 = vld [vmem:[%s0 + $0x24] sm:$0xf]
  %v21 = vld [vmem:[%s0 + $0x28] sm:$0xf]
  %v22 = vld [vmem:[%s0 + $0x2c] sm:$0xf]
  %v23 = vld [vmem:[%s0 + $0x30] sm:$0xf]
  %v24 = vld [vmem:[%s0 + $0x34] sm:$0xf]
  %v25 = vld [vmem:[%s0 + $0x38] sm:$0xf]
  %v26 = vld [vmem:[%s0 + $0x3c] sm:$0xf]
  %v27 = vld [vmem:[%s0 + $0x40] sm:$0xf]
  %v28 = vld [vmem:[%s0 + $0x44] sm:$0xf]
  %v29 = vld [vmem:[%s0 + $0x48] sm:$0xf]
  %v30 = vld [vmem:[%s0 + $0x4c] sm:$0xf]
  %v31 = vld [vmem:[%s0 + $0x50] sm:$0xf]
  %v32 = vld [vmem:[%s0 + $0x54] sm:$0xf]
  %v33 = vld [vmem:[%s0 + $0x58] sm:$0xf]
  %v34 = vld [vmem:[%s0 + $0x5c] sm:$0xf]
  %v35 = vld [vmem:[%s0 + $0x60] sm:$0xf]
  %v36 = vld [vmem:[%s0 + $0x64] sm:$0xf]
  %v37 = vld [vmem:[%s0 + $0x68] sm:$0xf]
  %v38 = vld [vmem:[%s0 + $0x6c] sm:$0xf]
  %v39 = vld [vmem:[%s0 + $0x70] sm:$0xf]
  %v40 = vld [vmem:[%s0 + $0x74] sm:$0xf]
  %v41 = vld [vmem:[%s0 + $0x78] sm:$0xf]
  %v42 = vld [vmem:[%s0 + $0x7c] sm:$0xf]
  %v43 = vld [vmem:[%s1] sm:$0xf]
  %v44 = vld [vmem:[%s1 + $0x4] sm:$0xf]
  %v45 = vld [vmem:[%s1 + $0x8] sm:$0xf]
  %v46 = vld [vmem:[%s1 + $0xc] sm:$0xf]
  %v47 = vld [vmem:[%s1 + $0x10] sm:$0xf]
  %v48 = vld [vmem:[%s1 + $0x14] sm:$0xf]
  %v49 = vld [vmem:[%s1 + $0x18] sm:$0xf]
  %v50 = vld [vmem:[%s1 + $0x1c] sm:$0xf]
  %v51 = vld [vmem:[%s1 + $0x20] sm:$0xf]
  %v52 = vld [vmem:[%s1 + $0x24] sm:$0xf]
  %v53 = vld [vmem:[%s1 + $0x28] sm:$0xf]
  %v54 = vld [vmem:[%s1 + $0x2c] sm:$0xf]
  %v55 = vld [vmem:[%s1 + $0x30] sm:$0xf]
  %v56 = vld [vmem:[%s1 + $0x34] sm:$0xf]
  %v57 = vld [vmem:[%s1 + $0x38] sm:$0xf]
  %v58 = vld [vmem:[%s1 + $0x3c] sm:$0xf]
  %v59 = vld [vmem:[%s1 + $0x40] sm:$0xf]
  %v60 = vld [vmem:[%s1 + $0x44] sm:$0xf]
  %v61 = vld [vmem:[%s1 + $0x48] sm:$0xf]
  %v62 = vld [vmem:[%s1 + $0x4c] sm:$0xf]
  %v63 = vld [vmem:[%s1 + $0x50] sm:$0xf]
  %v64 = vld [vmem:[%s1 + $0x54] sm:$0xf]
  %v65 = vld [vmem:[%s1 + $0x58] sm:$0xf]
  %v66 = vld [vmem:[%s1 + $0x5c] sm:$0xf]
  %v67 = vld [vmem:[%s1 + $0x60] sm:$0xf]
  %v68 = vld [vmem:[%s1 + $0x64] sm:$0xf]
  %v69 = vld [vmem:[%s1 + $0x68] sm:$0xf]
  %v70 = vld [vmem:[%s1 + $0x6c] sm:$0xf]
  %v71 = vld [vmem:[%s1 + $0x70] sm:$0xf]
  %v72 = vld [vmem:[%s1 + $0x74] sm:$0xf]
  %v73 = vld [vmem:[%s1 + $0x78] sm:$0xf]
  %v74 = vld [vmem:[%s1 + $0x7c] sm:$0xf]
  %v107 = vunpack.c.l.b16 %v11
  %v108 = vunpack.c.l.b16 %v12
  %v109 = vunpack.c.l.b16 %v13
  %v110 = vunpack.c.l.b16 %v14
  %v111 = vunpack.c.l.b16 %v15
  %v112 = vunpack.c.l.b16 %v16
  %v113 = vunpack.c.l.b16 %v17
  %v114 = vunpack.c.l.b16 %v18
  %v115 = vunpack.c.l.b16 %v19
  %v116 = vunpack.c.l.b16 %v20
  %v117 = vunpack.c.l.b16 %v21
  %v118 = vunpack.c.l.b16 %v22
  %v119 = vunpack.c.l.b16 %v23
  %v120 = vunpack.c.l.b16 %v24
  %v121 = vunpack.c.l.b16 %v25
  %v122 = vunpack.c.l.b16 %v26
  %v123 = vunpack.c.l.b16 %v27
  %v124 = vunpack.c.l.b16 %v28
  %v125 = vunpack.c.l.b16 %v29
  %v126 = vunpack.c.l.b16 %v30
  %v127 = vunpack.c.l.b16 %v31
  %v128 = vunpack.c.l.b16 %v32
  %v129 = vunpack.c.l.b16 %v33
  %v130 = vunpack.c.l.b16 %v34
  %v131 = vunpack.c.l.b16 %v35
  %v132 = vunpack.c.l.b16 %v36
  %v133 = vunpack.c.l.b16 %v37
  %v134 = vunpack.c.l.b16 %v38
  %v135 = vunpack.c.l.b16 %v39
  %v136 = vunpack.c.l.b16 %v40
  %v137 = vunpack.c.l.b16 %v41
  %v138 = vunpack.c.l.b16 %v42
  %v139 = vpack.c.b16 %v108, %v107
  %v140 = vpack.c.b16 %v110, %v109
  %v141 = vpack.c.b16 %v112, %v111
  %v142 = vpack.c.b16 %v114, %v113
  %v143 = vpack.c.b16 %v116, %v115
  %v144 = vpack.c.b16 %v118, %v117
  %v145 = vpack.c.b16 %v120, %v119
  %v146 = vpack.c.b16 %v122, %v121
  %v147 = vpack.c.b16 %v124, %v123
  %v148 = vpack.c.b16 %v126, %v125
  %v149 = vpack.c.b16 %v128, %v127
  %v150 = vpack.c.b16 %v130, %v129
  %v151 = vpack.c.b16 %v132, %v131
  %v152 = vpack.c.b16 %v134, %v133
  %v153 = vpack.c.b16 %v136, %v135
  %v154 = vpack.c.b16 %v138, %v137
  %v203 = vunpack.c.l.b16 %v43
  %v204 = vunpack.c.l.b16 %v44
  %v205 = vunpack.c.l.b16 %v45
  %v206 = vunpack.c.l.b16 %v46
  %v207 = vunpack.c.l.b16 %v47
  %v208 = vunpack.c.l.b16 %v48
  %v209 = vunpack.c.l.b16 %v49
  %v210 = vunpack.c.l.b16 %v50
  %v211 = vunpack.c.l.b16 %v51
  %v212 = vunpack.c.l.b16 %v52
  %v213 = vunpack.c.l.b16 %v53
  %v214 = vunpack.c.l.b16 %v54
  %v215 = vunpack.c.l.b16 %v55
  %v216 = vunpack.c.l.b16 %v56
  %v217 = vunpack.c.l.b16 %v57
  %v218 = vunpack.c.l.b16 %v58
  %v219 = vunpack.c.l.b16 %v59
  %v220 = vunpack.c.l.b16 %v60
  %v221 = vunpack.c.l.b16 %v61
  %v222 = vunpack.c.l.b16 %v62
  %v223 = vunpack.c.l.b16 %v63
  %v224 = vunpack.c.l.b16 %v64
  %v225 = vunpack.c.l.b16 %v65
  %v226 = vunpack.c.l.b16 %v66
  %v227 = vunpack.c.l.b16 %v67
  %v228 = vunpack.c.l.b16 %v68
  %v229 = vunpack.c.l.b16 %v69
  %v230 = vunpack.c.l.b16 %v70
  %v231 = vunpack.c.l.b16 %v71
  %v232 = vunpack.c.l.b16 %v72
  %v233 = vunpack.c.l.b16 %v73
  %v234 = vunpack.c.l.b16 %v74
  %v235 = vpack.c.b16 %v204, %v203
  %v236 = vpack.c.b16 %v206, %v205
  %v237 = vpack.c.b16 %v208, %v207
  %v238 = vpack.c.b16 %v210, %v209
  %v239 = vpack.c.b16 %v212, %v211
  %v240 = vpack.c.b16 %v214, %v213
  %v241 = vpack.c.b16 %v216, %v215
  %v242 = vpack.c.b16 %v218, %v217
  %v243 = vpack.c.b16 %v220, %v219
  %v244 = vpack.c.b16 %v222, %v221
  %v245 = vpack.c.b16 %v224, %v223
  %v246 = vpack.c.b16 %v226, %v225
  %v247 = vpack.c.b16 %v228, %v227
  %v248 = vpack.c.b16 %v230, %v229
  %v249 = vpack.c.b16 %v232, %v231
  %v250 = vpack.c.b16 %v234, %v233
  %267 = vmatpush.bf16.xpose.msra.mxu0 %v242
  %268 = vmatpush.bf16.xpose.msra.mxu0 %v241
  %269 = vmatpush.bf16.xpose.msra.mxu0 %v240
  %270 = vmatpush.bf16.xpose.msra.mxu0 %v239
  %271 = vmatpush.bf16.xpose.msra.mxu0 %v238
  %272 = vmatpush.bf16.xpose.msra.mxu0 %v237
  %273 = vmatpush.bf16.xpose.msra.mxu0 %v236
  %274 = vmatpush.bf16.xpose.msra.mxu0 %v235
  %275 = vmatmul.bf16.gmra.mxu0 %v139
  %v276 = vpop.f32.mrf.mxu0
  %v277 = vadd.f32 0.0, %v276
  %v278 = vpop.f32.mrf.mxu0
  %v279 = vadd.f32 0.0, %v278
  %280 = vmatmul.bf16.gmra.mxu0 %v140
  %v281 = vpop.f32.mrf.mxu0
  %v282 = vadd.f32 0.0, %v281
  %v283 = vpop.f32.mrf.mxu0
  %v284 = vadd.f32 0.0, %v283
  %285 = vmatmul.bf16.gmra.mxu0 %v141
  %v286 = vpop.f32.mrf.mxu0
  %v287 = vadd.f32 0.0, %v286
  %v288 = vpop.f32.mrf.mxu0
  %v289 = vadd.f32 0.0, %v288
  %290 = vmatmul.bf16.gmra.mxu0 %v142
  %v291 = vpop.f32.mrf.mxu0
  %v292 = vadd.f32 0.0, %v291
  %v293 = vpop.f32.mrf.mxu0
  %v294 = vadd.f32 0.0, %v293
  %295 = vmatmul.bf16.gmra.mxu0 %v143
  %v296 = vpop.f32.mrf.mxu0
  %v297 = vadd.f32 0.0, %v296
  %v298 = vpop.f32.mrf.mxu0
  %v299 = vadd.f32 0.0, %v298
  %300 = vmatmul.bf16.gmra.mxu0 %v144
  %v301 = vpop.f32.mrf.mxu0
  %v302 = vadd.f32 0.0, %v301
  %v303 = vpop.f32.mrf.mxu0
  %v304 = vadd.f32 0.0, %v303
  %305 = vmatmul.bf16.gmra.mxu0 %v145
  %v306 = vpop.f32.mrf.mxu0
  %v307 = vadd.f32 0.0, %v306
  %v308 = vpop.f32.mrf.mxu0
  %v309 = vadd.f32 0.0, %v308
  %310 = vmatmul.bf16.gmra.mxu0 %v146
  %v311 = vpop.f32.mrf.mxu0
  %v312 = vadd.f32 0.0, %v311
  %v313 = vpop.f32.mrf.mxu0
  %v314 = vadd.f32 0.0, %v313
  %315 = vmatmul.bf16.gmra.mxu0 %v147
  %v316 = vpop.f32.mrf.mxu0
  %v317 = vadd.f32 0.0, %v316
  %v318 = vpop.f32.mrf.mxu0
  %v319 = vadd.f32 0.0, %v318
  %320 = vmatmul.bf16.gmra.mxu0 %v148
  %v321 = vpop.f32.mrf.mxu0
  %v322 = vadd.f32 0.0, %v321
  %v323 = vpop.f32.mrf.mxu0
  %v324 = vadd.f32 0.0, %v323
  %325 = vmatmul.bf16.gmra.mxu0 %v149
  %v326 = vpop.f32.mrf.mxu0
  %v327 = vadd.f32 0.0, %v326
  %v328 = vpop.f32.mrf.mxu0
  %v329 = vadd.f32 0.0, %v328
  %330 = vmatmul.bf16.gmra.mxu0 %v150
  %v331 = vpop.f32.mrf.mxu0
  %v332 = vadd.f32 0.0, %v331
  %v333 = vpop.f32.mrf.mxu0
  %v334 = vadd.f32 0.0, %v333
  %335 = vmatmul.bf16.gmra.mxu0 %v151
  %v336 = vpop.f32.mrf.mxu0
  %v337 = vadd.f32 0.0, %v336
  %v338 = vpop.f32.mrf.mxu0
  %v339 = vadd.f32 0.0, %v338
  %340 = vmatmul.bf16.gmra.mxu0 %v152
  %v341 = vpop.f32.mrf.mxu0
  %v342 = vadd.f32 0.0, %v341
  %v343 = vpop.f32.mrf.mxu0
  %v344 = vadd.f32 0.0, %v343
  %345 = vmatmul.bf16.gmra.mxu0 %v153
  %v346 = vpop.f32.mrf.mxu0
  %v347 = vadd.f32 0.0, %v346
  %v348 = vpop.f32.mrf.mxu0
  %v349 = vadd.f32 0.0, %v348
  %350 = vmatmul.bf16.gmra.mxu0 %v154
  %v351 = vpop.f32.mrf.mxu0
  %v352 = vadd.f32 0.0, %v351
  %v353 = vpop.f32.mrf.mxu0
  %v354 = vadd.f32 0.0, %v353
  %355 = vdwg.mxu0
  %356 = vmatpush.bf16.xpose.msra.mxu0 %v250
  %357 = vmatpush.bf16.xpose.msra.mxu0 %v249
  %358 = vmatpush.bf16.xpose.msra.mxu0 %v248
  %359 = vmatpush.bf16.xpose.msra.mxu0 %v247
  %360 = vmatpush.bf16.xpose.msra.mxu0 %v246
  %361 = vmatpush.bf16.xpose.msra.mxu0 %v245
  %362 = vmatpush.bf16.xpose.msra.mxu0 %v244
  %363 = vmatpush.bf16.xpose.msra.mxu0 %v243
  %364 = vmatmul.bf16.gmra.mxu0 %v139
  %v365 = vpop.f32.mrf.mxu0
  %v366 = vadd.f32 0.0, %v365
  %v367 = vpop.f32.mrf.mxu0
  %v368 = vadd.f32 0.0, %v367
  %369 = vmatmul.bf16.gmra.mxu0 %v140
  %v370 = vpop.f32.mrf.mxu0
  %v371 = vadd.f32 0.0, %v370
  %v372 = vpop.f32.mrf.mxu0
  %v373 = vadd.f32 0.0, %v372
  %374 = vmatmul.bf16.gmra.mxu0 %v141
  %v375 = vpop.f32.mrf.mxu0
  %v376 = vadd.f32 0.0, %v375
  %v377 = vpop.f32.mrf.mxu0
  %v378 = vadd.f32 0.0, %v377
  %379 = vmatmul.bf16.gmra.mxu0 %v142
  %v380 = vpop.f32.mrf.mxu0
  %v381 = vadd.f32 0.0, %v380
  %v382 = vpop.f32.mrf.mxu0
  %v383 = vadd.f32 0.0, %v382
  %384 = vmatmul.bf16.gmra.mxu0 %v143
  %v385 = vpop.f32.mrf.mxu0
  %v386 = vadd.f32 0.0, %v385
  %v387 = vpop.f32.mrf.mxu0
  %v388 = vadd.f32 0.0, %v387
  %389 = vmatmul.bf16.gmra.mxu0 %v144
  %v390 = vpop.f32.mrf.mxu0
  %v391 = vadd.f32 0.0, %v390
  %v392 = vpop.f32.mrf.mxu0
  %v393 = vadd.f32 0.0, %v392
  %394 = vmatmul.bf16.gmra.mxu0 %v145
  %v395 = vpop.f32.mrf.mxu0
  %v396 = vadd.f32 0.0, %v395
  %v397 = vpop.f32.mrf.mxu0
  %v398 = vadd.f32 0.0, %v397
  %399 = vmatmul.bf16.gmra.mxu0 %v146
  %v400 = vpop.f32.mrf.mxu0
  %v401 = vadd.f32 0.0, %v400
  %v402 = vpop.f32.mrf.mxu0
  %v403 = vadd.f32 0.0, %v402
  %404 = vmatmul.bf16.gmra.mxu0 %v147
  %v405 = vpop.f32.mrf.mxu0
  %v406 = vadd.f32 0.0, %v405
  %v407 = vpop.f32.mrf.mxu0
  %v408 = vadd.f32 0.0, %v407
  %409 = vmatmul.bf16.gmra.mxu0 %v148
  %v410 = vpop.f32.mrf.mxu0
  %v411 = vadd.f32 0.0, %v410
  %v412 = vpop.f32.mrf.mxu0
  %v413 = vadd.f32 0.0, %v412
  %414 = vmatmul.bf16.gmra.mxu0 %v149
  %v415 = vpop.f32.mrf.mxu0
  %v416 = vadd.f32 0.0, %v415
  %v417 = vpop.f32.mrf.mxu0
  %v418 = vadd.f32 0.0, %v417
  %419 = vmatmul.bf16.gmra.mxu0 %v150
  %v420 = vpop.f32.mrf.mxu0
  %v421 = vadd.f32 0.0, %v420
  %v422 = vpop.f32.mrf.mxu0
  %v423 = vadd.f32 0.0, %v422
  %424 = vmatmul.bf16.gmra.mxu0 %v151
  %v425 = vpop.f32.mrf.mxu0
  %v426 = vadd.f32 0.0, %v425
  %v427 = vpop.f32.mrf.mxu0
  %v428 = vadd.f32 0.0, %v427
  %429 = vmatmul.bf16.gmra.mxu0 %v152
  %v430 = vpop.f32.mrf.mxu0
  %v431 = vadd.f32 0.0, %v430
  %v432 = vpop.f32.mrf.mxu0
  %v433 = vadd.f32 0.0, %v432
  %434 = vmatmul.bf16.gmra.mxu0 %v153
  %v435 = vpop.f32.mrf.mxu0
  %v436 = vadd.f32 0.0, %v435
  %v437 = vpop.f32.mrf.mxu0
  %v438 = vadd.f32 0.0, %v437
  %439 = vmatmul.bf16.gmra.mxu0 %v154
  %v440 = vpop.f32.mrf.mxu0
  %v441 = vadd.f32 0.0, %v440
  %v442 = vpop.f32.mrf.mxu0
  %v443 = vadd.f32 0.0, %v442
  %444 = vdwg.mxu0
  %v445 = vxor.u32 %v277, 2147483648
  %v446 = vxor.u32 %v366, 2147483648
  %v447 = vxor.u32 %v279, 2147483648
  %v448 = vxor.u32 %v368, 2147483648
  %v449 = vxor.u32 %v282, 2147483648
  %v450 = vxor.u32 %v371, 2147483648
  %v451 = vxor.u32 %v284, 2147483648
  %v452 = vxor.u32 %v373, 2147483648
  %v453 = vxor.u32 %v287, 2147483648
  %v454 = vxor.u32 %v376, 2147483648
  %v455 = vxor.u32 %v289, 2147483648
  %v456 = vxor.u32 %v378, 2147483648
  %v457 = vxor.u32 %v292, 2147483648
  %v458 = vxor.u32 %v381, 2147483648
  %v459 = vxor.u32 %v294, 2147483648
  %v460 = vxor.u32 %v383, 2147483648
  %v461 = vxor.u32 %v297, 2147483648
  %v462 = vxor.u32 %v386, 2147483648
  %v463 = vxor.u32 %v299, 2147483648
  %v464 = vxor.u32 %v388, 2147483648
  %v465 = vxor.u32 %v302, 2147483648
  %v466 = vxor.u32 %v391, 2147483648
  %v467 = vxor.u32 %v304, 2147483648
  %v468 = vxor.u32 %v393, 2147483648
  %v469 = vxor.u32 %v307, 2147483648
  %v470 = vxor.u32 %v396, 2147483648
  %v471 = vxor.u32 %v309, 2147483648
  %v472 = vxor.u32 %v398, 2147483648
  %v473 = vxor.u32 %v312, 2147483648
  %v474 = vxor.u32 %v401, 2147483648
  %v475 = vxor.u32 %v314, 2147483648
  %v476 = vxor.u32 %v403, 2147483648
  %v477 = vxor.u32 %v317, 2147483648
  %v478 = vxor.u32 %v406, 2147483648
  %v479 = vxor.u32 %v319, 2147483648
  %v480 = vxor.u32 %v408, 2147483648
  %v481 = vxor.u32 %v322, 2147483648
  %v482 = vxor.u32 %v411, 2147483648
  %v483 = vxor.u32 %v324, 2147483648
  %v484 = vxor.u32 %v413, 2147483648
  %v485 = vxor.u32 %v327, 2147483648
  %v486 = vxor.u32 %v416, 2147483648
  %v487 = vxor.u32 %v329, 2147483648
  %v488 = vxor.u32 %v418, 2147483648
  %v489 = vxor.u32 %v332, 2147483648
  %v490 = vxor.u32 %v421, 2147483648
  %v491 = vxor.u32 %v334, 2147483648
  %v492 = vxor.u32 %v423, 2147483648
  %v493 = vxor.u32 %v337, 2147483648
  %v494 = vxor.u32 %v426, 2147483648
  %v495 = vxor.u32 %v339, 2147483648
  %v496 = vxor.u32 %v428, 2147483648
  %v497 = vxor.u32 %v342, 2147483648
  %v498 = vxor.u32 %v431, 2147483648
  %v499 = vxor.u32 %v344, 2147483648
  %v500 = vxor.u32 %v433, 2147483648
  %v501 = vxor.u32 %v347, 2147483648
  %v502 = vxor.u32 %v436, 2147483648
  %v503 = vxor.u32 %v349, 2147483648
  %v504 = vxor.u32 %v438, 2147483648
  %v505 = vxor.u32 %v352, 2147483648
  %v506 = vxor.u32 %v441, 2147483648
  %v507 = vxor.u32 %v354, 2147483648
  %v508 = vxor.u32 %v443, 2147483648
  %v509 = vmul.f32 %v445, 1.442695
  %v510 = vpow.pop %v509
  %v511 = vmul.f32 %v446, 1.442695
  %v512 = vpow.pop %v511
  %v513 = vmul.f32 %v447, 1.442695
  %v514 = vpow.pop %v513
  %v515 = vmul.f32 %v448, 1.442695
  %v516 = vpow.pop %v515
  %v517 = vmul.f32 %v449, 1.442695
  %v518 = vpow.pop %v517
  %v519 = vmul.f32 %v450, 1.442695
  %v520 = vpow.pop %v519
  %v521 = vmul.f32 %v451, 1.442695
  %v522 = vpow.pop %v521
  %v523 = vmul.f32 %v452, 1.442695
  %v524 = vpow.pop %v523
  %v525 = vmul.f32 %v453, 1.442695
  %v526 = vpow.pop %v525
  %v527 = vmul.f32 %v454, 1.442695
  %v528 = vpow.pop %v527
  %v529 = vmul.f32 %v455, 1.442695
  %v530 = vpow.pop %v529
  %v531 = vmul.f32 %v456, 1.442695
  %v532 = vpow.pop %v531
  %v533 = vmul.f32 %v457, 1.442695
  %v534 = vpow.pop %v533
  %v535 = vmul.f32 %v458, 1.442695
  %v536 = vpow.pop %v535
  %v537 = vmul.f32 %v459, 1.442695
  %v538 = vpow.pop %v537
  %v539 = vmul.f32 %v460, 1.442695
  %v540 = vpow.pop %v539
  %v541 = vmul.f32 %v461, 1.442695
  %v542 = vpow.pop %v541
  %v543 = vmul.f32 %v462, 1.442695
  %v544 = vpow.pop %v543
  %v545 = vmul.f32 %v463, 1.442695
  %v546 = vpow.pop %v545
  %v547 = vmul.f32 %v464, 1.442695
  %v548 = vpow.pop %v547
  %v549 = vmul.f32 %v465, 1.442695
  %v550 = vpow.pop %v549
  %v551 = vmul.f32 %v466, 1.442695
  %v552 = vpow.pop %v551
  %v553 = vmul.f32 %v467, 1.442695
  %v554 = vpow.pop %v553
  %v555 = vmul.f32 %v468, 1.442695
  %v556 = vpow.pop %v555
  %v557 = vmul.f32 %v469, 1.442695
  %v558 = vpow.pop %v557
  %v559 = vmul.f32 %v470, 1.442695
  %v560 = vpow.pop %v559
  %v561 = vmul.f32 %v471, 1.442695
  %v562 = vpow.pop %v561
  %v563 = vmul.f32 %v472, 1.442695
  %v564 = vpow.pop %v563
  %v565 = vmul.f32 %v473, 1.442695
  %v566 = vpow.pop %v565
  %v567 = vmul.f32 %v474, 1.442695
  %v568 = vpow.pop %v567
  %v569 = vmul.f32 %v475, 1.442695
  %v570 = vpow.pop %v569
  %v571 = vmul.f32 %v476, 1.442695
  %v572 = vpow.pop %v571
  %v573 = vmul.f32 %v477, 1.442695
  %v574 = vpow.pop %v573
  %v575 = vmul.f32 %v478, 1.442695
  %v576 = vpow.pop %v575
  %v577 = vmul.f32 %v479, 1.442695
  %v578 = vpow.pop %v577
  %v579 = vmul.f32 %v480, 1.442695
  %v580 = vpow.pop %v579
  %v581 = vmul.f32 %v481, 1.442695
  %v582 = vpow.pop %v581
  %v583 = vmul.f32 %v482, 1.442695
  %v584 = vpow.pop %v583
  %v585 = vmul.f32 %v483, 1.442695
  %v586 = vpow.pop %v585
  %v587 = vmul.f32 %v484, 1.442695
  %v588 = vpow.pop %v587
  %v589 = vmul.f32 %v485, 1.442695
  %v590 = vpow.pop %v589
  %v591 = vmul.f32 %v486, 1.442695
  %v592 = vpow.pop %v591
  %v593 = vmul.f32 %v487, 1.442695
  %v594 = vpow.pop %v593
  %v595 = vmul.f32 %v488, 1.442695
  %v596 = vpow.pop %v595
  %v597 = vmul.f32 %v489, 1.442695
  %v598 = vpow.pop %v597
  %v599 = vmul.f32 %v490, 1.442695
  %v600 = vpow.pop %v599
  %v601 = vmul.f32 %v491, 1.442695
  %v602 = vpow.pop %v601
  %v603 = vmul.f32 %v492, 1.442695
  %v604 = vpow.pop %v603
  %v605 = vmul.f32 %v493, 1.442695
  %v606 = vpow.pop %v605
  %v607 = vmul.f32 %v494, 1.442695
  %v608 = vpow.pop %v607
  %v609 = vmul.f32 %v495, 1.442695
  %v610 = vpow.pop %v609
  %v611 = vmul.f32 %v496, 1.442695
  %v612 = vpow.pop %v611
  %v613 = vmul.f32 %v497, 1.442695
  %v614 = vpow.pop %v613
  %v615 = vmul.f32 %v498, 1.442695
  %v616 = vpow.pop %v615
  %v617 = vmul.f32 %v499, 1.442695
  %v618 = vpow.pop %v617
  %v619 = vmul.f32 %v500, 1.442695
  %v620 = vpow.pop %v619
  %v621 = vmul.f32 %v501, 1.442695
  %v622 = vpow.pop %v621
  %v623 = vmul.f32 %v502, 1.442695
  %v624 = vpow.pop %v623
  %v625 = vmul.f32 %v503, 1.442695
  %v626 = vpow.pop %v625
  %v627 = vmul.f32 %v504, 1.442695
  %v628 = vpow.pop %v627
  %v629 = vmul.f32 %v505, 1.442695
  %v630 = vpow.pop %v629
  %v631 = vmul.f32 %v506, 1.442695
  %v632 = vpow.pop %v631
  %v633 = vmul.f32 %v507, 1.442695
  %v634 = vpow.pop %v633
  %v635 = vmul.f32 %v508, 1.442695
  %v636 = vpow.pop %v635
  %v637 = vadd.f32 %v510, 1.0
  %v638 = vadd.f32 %v512, 1.0
  %v639 = vadd.f32 %v514, 1.0
  %v640 = vadd.f32 %v516, 1.0
  %v641 = vadd.f32 %v518, 1.0
  %v642 = vadd.f32 %v520, 1.0
  %v643 = vadd.f32 %v522, 1.0
  %v644 = vadd.f32 %v524, 1.0
  %v645 = vadd.f32 %v526, 1.0
  %v646 = vadd.f32 %v528, 1.0
  %v647 = vadd.f32 %v530, 1.0
  %v648 = vadd.f32 %v532, 1.0
  %v649 = vadd.f32 %v534, 1.0
  %v650 = vadd.f32 %v536, 1.0
  %v651 = vadd.f32 %v538, 1.0
  %v652 = vadd.f32 %v540, 1.0
  %v653 = vadd.f32 %v542, 1.0
  %v654 = vadd.f32 %v544, 1.0
  %v655 = vadd.f32 %v546, 1.0
  %v656 = vadd.f32 %v548, 1.0
  %v657 = vadd.f32 %v550, 1.0
  %v658 = vadd.f32 %v552, 1.0
  %v659 = vadd.f32 %v554, 1.0
  %v660 = vadd.f32 %v556, 1.0
  %v661 = vadd.f32 %v558, 1.0
  %v662 = vadd.f32 %v560, 1.0
  %v663 = vadd.f32 %v562, 1.0
  %v664 = vadd.f32 %v564, 1.0
  %v665 = vadd.f32 %v566, 1.0
  %v666 = vadd.f32 %v568, 1.0
  %v667 = vadd.f32 %v570, 1.0
  %v668 = vadd.f32 %v572, 1.0
  %v669 = vadd.f32 %v574, 1.0
  %v670 = vadd.f32 %v576, 1.0
  %v671 = vadd.f32 %v578, 1.0
  %v672 = vadd.f32 %v580, 1.0
  %v673 = vadd.f32 %v582, 1.0
  %v674 = vadd.f32 %v584, 1.0
  %v675 = vadd.f32 %v586, 1.0
  %v676 = vadd.f32 %v588, 1.0
  %v677 = vadd.f32 %v590, 1.0
  %v678 = vadd.f32 %v592, 1.0
  %v679 = vadd.f32 %v594, 1.0
  %v680 = vadd.f32 %v596, 1.0
  %v681 = vadd.f32 %v598, 1.0
  %v682 = vadd.f32 %v600, 1.0
  %v683 = vadd.f32 %v602, 1.0
  %v684 = vadd.f32 %v604, 1.0
  %v685 = vadd.f32 %v606, 1.0
  %v686 = vadd.f32 %v608, 1.0
  %v687 = vadd.f32 %v610, 1.0
  %v688 = vadd.f32 %v612, 1.0
  %v689 = vadd.f32 %v614, 1.0
  %v690 = vadd.f32 %v616, 1.0
  %v691 = vadd.f32 %v618, 1.0
  %v692 = vadd.f32 %v620, 1.0
  %v693 = vadd.f32 %v622, 1.0
  %v694 = vadd.f32 %v624, 1.0
  %v695 = vadd.f32 %v626, 1.0
  %v696 = vadd.f32 %v628, 1.0
  %v697 = vadd.f32 %v630, 1.0
  %v698 = vadd.f32 %v632, 1.0
  %v699 = vadd.f32 %v634, 1.0
  %v700 = vadd.f32 %v636, 1.0
  %v701 = vrcp.pop %v637
  %v702 = vmul.f32 %v637, %v701
  %v703 = vsub.f32 1.0, %v702
  %v704 = vmul.f32 %v701, %v703
  %v705 = vadd.f32 %v701, %v704
  %vm706 = vweird.f32 %v637
  %vm707 = vweird.f32 %v701
  %vm708 = vmor %vm706, %vm707
  %v709 = vsel %vm708, %v701, %v705
  %v710 = vand.u32 2147483647, %v637
  %vm711 = vcmp.eq.f32.partialorder %v710, 8.507059e+37
  %v712 = vand.u32 %v637, 2147483648
  %v713 = vor.u32 1.1754944e-38, %v712
  %v714 = vsel %vm711, %v713, %v709
  %v715 = vmul.f32 1.0, %v714
  %v716 = vrcp.pop %v638
  %v717 = vmul.f32 %v638, %v716
  %v718 = vsub.f32 1.0, %v717
  %v719 = vmul.f32 %v716, %v718
  %v720 = vadd.f32 %v716, %v719
  %vm721 = vweird.f32 %v638
  %vm722 = vweird.f32 %v716
  %vm723 = vmor %vm721, %vm722
  %v724 = vsel %vm723, %v716, %v720
  %v725 = vand.u32 2147483647, %v638
  %vm726 = vcmp.eq.f32.partialorder %v725, 8.507059e+37
  %v727 = vand.u32 %v638, 2147483648
  %v728 = vor.u32 1.1754944e-38, %v727
  %v729 = vsel %vm726, %v728, %v724
  %v730 = vmul.f32 1.0, %v729
  %v731 = vrcp.pop %v639
  %v732 = vmul.f32 %v639, %v731
  %v733 = vsub.f32 1.0, %v732
  %v734 = vmul.f32 %v731, %v733
  %v735 = vadd.f32 %v731, %v734
  %vm736 = vweird.f32 %v639
  %vm737 = vweird.f32 %v731
  %vm738 = vmor %vm736, %vm737
  %v739 = vsel %vm738, %v731, %v735
  %v740 = vand.u32 2147483647, %v639
  %vm741 = vcmp.eq.f32.partialorder %v740, 8.507059e+37
  %v742 = vand.u32 %v639, 2147483648
  %v743 = vor.u32 1.1754944e-38, %v742
  %v744 = vsel %vm741, %v743, %v739
  %v745 = vmul.f32 1.0, %v744
  %v746 = vrcp.pop %v640
  %v747 = vmul.f32 %v640, %v746
  %v748 = vsub.f32 1.0, %v747
  %v749 = vmul.f32 %v746, %v748
  %v750 = vadd.f32 %v746, %v749
  %vm751 = vweird.f32 %v640
  %vm752 = vweird.f32 %v746
  %vm753 = vmor %vm751, %vm752
  %v754 = vsel %vm753, %v746, %v750
  %v755 = vand.u32 2147483647, %v640
  %vm756 = vcmp.eq.f32.partialorder %v755, 8.507059e+37
  %v757 = vand.u32 %v640, 2147483648
  %v758 = vor.u32 1.1754944e-38, %v757
  %v759 = vsel %vm756, %v758, %v754
  %v760 = vmul.f32 1.0, %v759
  %v761 = vrcp.pop %v641
  %v762 = vmul.f32 %v641, %v761
  %v763 = vsub.f32 1.0, %v762
  %v764 = vmul.f32 %v761, %v763
  %v765 = vadd.f32 %v761, %v764
  %vm766 = vweird.f32 %v641
  %vm767 = vweird.f32 %v761
  %vm768 = vmor %vm766, %vm767
  %v769 = vsel %vm768, %v761, %v765
  %v770 = vand.u32 2147483647, %v641
  %vm771 = vcmp.eq.f32.partialorder %v770, 8.507059e+37
  %v772 = vand.u32 %v641, 2147483648
  %v773 = vor.u32 1.1754944e-38, %v772
  %v774 = vsel %vm771, %v773, %v769
  %v775 = vmul.f32 1.0, %v774
  %v776 = vrcp.pop %v642
  %v777 = vmul.f32 %v642, %v776
  %v778 = vsub.f32 1.0, %v777
  %v779 = vmul.f32 %v776, %v778
  %v780 = vadd.f32 %v776, %v779
  %vm781 = vweird.f32 %v642
  %vm782 = vweird.f32 %v776
  %vm783 = vmor %vm781, %vm782
  %v784 = vsel %vm783, %v776, %v780
  %v785 = vand.u32 2147483647, %v642
  %vm786 = vcmp.eq.f32.partialorder %v785, 8.507059e+37
  %v787 = vand.u32 %v642, 2147483648
  %v788 = vor.u32 1.1754944e-38, %v787
  %v789 = vsel %vm786, %v788, %v784
  %v790 = vmul.f32 1.0, %v789
  %v791 = vrcp.pop %v643
  %v792 = vmul.f32 %v643, %v791
  %v793 = vsub.f32 1.0, %v792
  %v794 = vmul.f32 %v791, %v793
  %v795 = vadd.f32 %v791, %v794
  %vm796 = vweird.f32 %v643
  %vm797 = vweird.f32 %v791
  %vm798 = vmor %vm796, %vm797
  %v799 = vsel %vm798, %v791, %v795
  %v800 = vand.u32 2147483647, %v643
  %vm801 = vcmp.eq.f32.partialorder %v800, 8.507059e+37
  %v802 = vand.u32 %v643, 2147483648
  %v803 = vor.u32 1.1754944e-38, %v802
  %v804 = vsel %vm801, %v803, %v799
  %v805 = vmul.f32 1.0, %v804
  %v806 = vrcp.pop %v644
  %v807 = vmul.f32 %v644, %v806
  %v808 = vsub.f32 1.0, %v807
  %v809 = vmul.f32 %v806, %v808
  %v810 = vadd.f32 %v806, %v809
  %vm811 = vweird.f32 %v644
  %vm812 = vweird.f32 %v806
  %vm813 = vmor %vm811, %vm812
  %v814 = vsel %vm813, %v806, %v810
  %v815 = vand.u32 2147483647, %v644
  %vm816 = vcmp.eq.f32.partialorder %v815, 8.507059e+37
  %v817 = vand.u32 %v644, 2147483648
  %v818 = vor.u32 1.1754944e-38, %v817
  %v819 = vsel %vm816, %v818, %v814
  %v820 = vmul.f32 1.0, %v819
  %v821 = vrcp.pop %v645
  %v822 = vmul.f32 %v645, %v821
  %v823 = vsub.f32 1.0, %v822
  %v824 = vmul.f32 %v821, %v823
  %v825 = vadd.f32 %v821, %v824
  %vm826 = vweird.f32 %v645
  %vm827 = vweird.f32 %v821
  %vm828 = vmor %vm826, %vm827
  %v829 = vsel %vm828, %v821, %v825
  %v830 = vand.u32 2147483647, %v645
  %vm831 = vcmp.eq.f32.partialorder %v830, 8.507059e+37
  %v832 = vand.u32 %v645, 2147483648
  %v833 = vor.u32 1.1754944e-38, %v832
  %v834 = vsel %vm831, %v833, %v829
  %v835 = vmul.f32 1.0, %v834
  %v836 = vrcp.pop %v646
  %v837 = vmul.f32 %v646, %v836
  %v838 = vsub.f32 1.0, %v837
  %v839 = vmul.f32 %v836, %v838
  %v840 = vadd.f32 %v836, %v839
  %vm841 = vweird.f32 %v646
  %vm842 = vweird.f32 %v836
  %vm843 = vmor %vm841, %vm842
  %v844 = vsel %vm843, %v836, %v840
  %v845 = vand.u32 2147483647, %v646
  %vm846 = vcmp.eq.f32.partialorder %v845, 8.507059e+37
  %v847 = vand.u32 %v646, 2147483648
  %v848 = vor.u32 1.1754944e-38, %v847
  %v849 = vsel %vm846, %v848, %v844
  %v850 = vmul.f32 1.0, %v849
  %v851 = vrcp.pop %v647
  %v852 = vmul.f32 %v647, %v851
  %v853 = vsub.f32 1.0, %v852
  %v854 = vmul.f32 %v851, %v853
  %v855 = vadd.f32 %v851, %v854
  %vm856 = vweird.f32 %v647
  %vm857 = vweird.f32 %v851
  %vm858 = vmor %vm856, %vm857
  %v859 = vsel %vm858, %v851, %v855
  %v860 = vand.u32 2147483647, %v647
  %vm861 = vcmp.eq.f32.partialorder %v860, 8.507059e+37
  %v862 = vand.u32 %v647, 2147483648
  %v863 = vor.u32 1.1754944e-38, %v862
  %v864 = vsel %vm861, %v863, %v859
  %v865 = vmul.f32 1.0, %v864
  %v866 = vrcp.pop %v648
  %v867 = vmul.f32 %v648, %v866
  %v868 = vsub.f32 1.0, %v867
  %v869 = vmul.f32 %v866, %v868
  %v870 = vadd.f32 %v866, %v869
  %vm871 = vweird.f32 %v648
  %vm872 = vweird.f32 %v866
  %vm873 = vmor %vm871, %vm872
  %v874 = vsel %vm873, %v866, %v870
  %v875 = vand.u32 2147483647, %v648
  %vm876 = vcmp.eq.f32.partialorder %v875, 8.507059e+37
  %v877 = vand.u32 %v648, 2147483648
  %v878 = vor.u32 1.1754944e-38, %v877
  %v879 = vsel %vm876, %v878, %v874
  %v880 = vmul.f32 1.0, %v879
  %v881 = vrcp.pop %v649
  %v882 = vmul.f32 %v649, %v881
  %v883 = vsub.f32 1.0, %v882
  %v884 = vmul.f32 %v881, %v883
  %v885 = vadd.f32 %v881, %v884
  %vm886 = vweird.f32 %v649
  %vm887 = vweird.f32 %v881
  %vm888 = vmor %vm886, %vm887
  %v889 = vsel %vm888, %v881, %v885
  %v890 = vand.u32 2147483647, %v649
  %vm891 = vcmp.eq.f32.partialorder %v890, 8.507059e+37
  %v892 = vand.u32 %v649, 2147483648
  %v893 = vor.u32 1.1754944e-38, %v892
  %v894 = vsel %vm891, %v893, %v889
  %v895 = vmul.f32 1.0, %v894
  %v896 = vrcp.pop %v650
  %v897 = vmul.f32 %v650, %v896
  %v898 = vsub.f32 1.0, %v897
  %v899 = vmul.f32 %v896, %v898
  %v900 = vadd.f32 %v896, %v899
  %vm901 = vweird.f32 %v650
  %vm902 = vweird.f32 %v896
  %vm903 = vmor %vm901, %vm902
  %v904 = vsel %vm903, %v896, %v900
  %v905 = vand.u32 2147483647, %v650
  %vm906 = vcmp.eq.f32.partialorder %v905, 8.507059e+37
  %v907 = vand.u32 %v650, 2147483648
  %v908 = vor.u32 1.1754944e-38, %v907
  %v909 = vsel %vm906, %v908, %v904
  %v910 = vmul.f32 1.0, %v909
  %v911 = vrcp.pop %v651
  %v912 = vmul.f32 %v651, %v911
  %v913 = vsub.f32 1.0, %v912
  %v914 = vmul.f32 %v911, %v913
  %v915 = vadd.f32 %v911, %v914
  %vm916 = vweird.f32 %v651
  %vm917 = vweird.f32 %v911
  %vm918 = vmor %vm916, %vm917
  %v919 = vsel %vm918, %v911, %v915
  %v920 = vand.u32 2147483647, %v651
  %vm921 = vcmp.eq.f32.partialorder %v920, 8.507059e+37
  %v922 = vand.u32 %v651, 2147483648
  %v923 = vor.u32 1.1754944e-38, %v922
  %v924 = vsel %vm921, %v923, %v919
  %v925 = vmul.f32 1.0, %v924
  %v926 = vrcp.pop %v652
  %v927 = vmul.f32 %v652, %v926
  %v928 = vsub.f32 1.0, %v927
  %v929 = vmul.f32 %v926, %v928
  %v930 = vadd.f32 %v926, %v929
  %vm931 = vweird.f32 %v652
  %vm932 = vweird.f32 %v926
  %vm933 = vmor %vm931, %vm932
  %v934 = vsel %vm933, %v926, %v930
  %v935 = vand.u32 2147483647, %v652
  %vm936 = vcmp.eq.f32.partialorder %v935, 8.507059e+37
  %v937 = vand.u32 %v652, 2147483648
  %v938 = vor.u32 1.1754944e-38, %v937
  %v939 = vsel %vm936, %v938, %v934
  %v940 = vmul.f32 1.0, %v939
  %v941 = vrcp.pop %v653
  %v942 = vmul.f32 %v653, %v941
  %v943 = vsub.f32 1.0, %v942
  %v944 = vmul.f32 %v941, %v943
  %v945 = vadd.f32 %v941, %v944
  %vm946 = vweird.f32 %v653
  %vm947 = vweird.f32 %v941
  %vm948 = vmor %vm946, %vm947
  %v949 = vsel %vm948, %v941, %v945
  %v950 = vand.u32 2147483647, %v653
  %vm951 = vcmp.eq.f32.partialorder %v950, 8.507059e+37
  %v952 = vand.u32 %v653, 2147483648
  %v953 = vor.u32 1.1754944e-38, %v952
  %v954 = vsel %vm951, %v953, %v949
  %v955 = vmul.f32 1.0, %v954
  %v956 = vrcp.pop %v654
  %v957 = vmul.f32 %v654, %v956
  %v958 = vsub.f32 1.0, %v957
  %v959 = vmul.f32 %v956, %v958
  %v960 = vadd.f32 %v956, %v959
  %vm961 = vweird.f32 %v654
  %vm962 = vweird.f32 %v956
  %vm963 = vmor %vm961, %vm962
  %v964 = vsel %vm963, %v956, %v960
  %v965 = vand.u32 2147483647, %v654
  %vm966 = vcmp.eq.f32.partialorder %v965, 8.507059e+37
  %v967 = vand.u32 %v654, 2147483648
  %v968 = vor.u32 1.1754944e-38, %v967
  %v969 = vsel %vm966, %v968, %v964
  %v970 = vmul.f32 1.0, %v969
  %v971 = vrcp.pop %v655
  %v972 = vmul.f32 %v655, %v971
  %v973 = vsub.f32 1.0, %v972
  %v974 = vmul.f32 %v971, %v973
  %v975 = vadd.f32 %v971, %v974
  %vm976 = vweird.f32 %v655
  %vm977 = vweird.f32 %v971
  %vm978 = vmor %vm976, %vm977
  %v979 = vsel %vm978, %v971, %v975
  %v980 = vand.u32 2147483647, %v655
  %vm981 = vcmp.eq.f32.partialorder %v980, 8.507059e+37
  %v982 = vand.u32 %v655, 2147483648
  %v983 = vor.u32 1.1754944e-38, %v982
  %v984 = vsel %vm981, %v983, %v979
  %v985 = vmul.f32 1.0, %v984
  %v986 = vrcp.pop %v656
  %v987 = vmul.f32 %v656, %v986
  %v988 = vsub.f32 1.0, %v987
  %v989 = vmul.f32 %v986, %v988
  %v990 = vadd.f32 %v986, %v989
  %vm991 = vweird.f32 %v656
  %vm992 = vweird.f32 %v986
  %vm993 = vmor %vm991, %vm992
  %v994 = vsel %vm993, %v986, %v990
  %v995 = vand.u32 2147483647, %v656
  %vm996 = vcmp.eq.f32.partialorder %v995, 8.507059e+37
  %v997 = vand.u32 %v656, 2147483648
  %v998 = vor.u32 1.1754944e-38, %v997
  %v999 = vsel %vm996, %v998, %v994
  %v1000 = vmul.f32 1.0, %v999
  %v1001 = vrcp.pop %v657
  %v1002 = vmul.f32 %v657, %v1001
  %v1003 = vsub.f32 1.0, %v1002
  %v1004 = vmul.f32 %v1001, %v1003
  %v1005 = vadd.f32 %v1001, %v1004
  %vm1006 = vweird.f32 %v657
  %vm1007 = vweird.f32 %v1001
  %vm1008 = vmor %vm1006, %vm1007
  %v1009 = vsel %vm1008, %v1001, %v1005
  %v1010 = vand.u32 2147483647, %v657
  %vm1011 = vcmp.eq.f32.partialorder %v1010, 8.507059e+37
  %v1012 = vand.u32 %v657, 2147483648
  %v1013 = vor.u32 1.1754944e-38, %v1012
  %v1014 = vsel %vm1011, %v1013, %v1009
  %v1015 = vmul.f32 1.0, %v1014
  %v1016 = vrcp.pop %v658
  %v1017 = vmul.f32 %v658, %v1016
  %v1018 = vsub.f32 1.0, %v1017
  %v1019 = vmul.f32 %v1016, %v1018
  %v1020 = vadd.f32 %v1016, %v1019
  %vm1021 = vweird.f32 %v658
  %vm1022 = vweird.f32 %v1016
  %vm1023 = vmor %vm1021, %vm1022
  %v1024 = vsel %vm1023, %v1016, %v1020
  %v1025 = vand.u32 2147483647, %v658
  %vm1026 = vcmp.eq.f32.partialorder %v1025, 8.507059e+37
  %v1027 = vand.u32 %v658, 2147483648
  %v1028 = vor.u32 1.1754944e-38, %v1027
  %v1029 = vsel %vm1026, %v1028, %v1024
  %v1030 = vmul.f32 1.0, %v1029
  %v1031 = vrcp.pop %v659
  %v1032 = vmul.f32 %v659, %v1031
  %v1033 = vsub.f32 1.0, %v1032
  %v1034 = vmul.f32 %v1031, %v1033
  %v1035 = vadd.f32 %v1031, %v1034
  %vm1036 = vweird.f32 %v659
  %vm1037 = vweird.f32 %v1031
  %vm1038 = vmor %vm1036, %vm1037
  %v1039 = vsel %vm1038, %v1031, %v1035
  %v1040 = vand.u32 2147483647, %v659
  %vm1041 = vcmp.eq.f32.partialorder %v1040, 8.507059e+37
  %v1042 = vand.u32 %v659, 2147483648
  %v1043 = vor.u32 1.1754944e-38, %v1042
  %v1044 = vsel %vm1041, %v1043, %v1039
  %v1045 = vmul.f32 1.0, %v1044
  %v1046 = vrcp.pop %v660
  %v1047 = vmul.f32 %v660, %v1046
  %v1048 = vsub.f32 1.0, %v1047
  %v1049 = vmul.f32 %v1046, %v1048
  %v1050 = vadd.f32 %v1046, %v1049
  %vm1051 = vweird.f32 %v660
  %vm1052 = vweird.f32 %v1046
  %vm1053 = vmor %vm1051, %vm1052
  %v1054 = vsel %vm1053, %v1046, %v1050
  %v1055 = vand.u32 2147483647, %v660
  %vm1056 = vcmp.eq.f32.partialorder %v1055, 8.507059e+37
  %v1057 = vand.u32 %v660, 2147483648
  %v1058 = vor.u32 1.1754944e-38, %v1057
  %v1059 = vsel %vm1056, %v1058, %v1054
  %v1060 = vmul.f32 1.0, %v1059
  %v1061 = vrcp.pop %v661
  %v1062 = vmul.f32 %v661, %v1061
  %v1063 = vsub.f32 1.0, %v1062
  %v1064 = vmul.f32 %v1061, %v1063
  %v1065 = vadd.f32 %v1061, %v1064
  %vm1066 = vweird.f32 %v661
  %vm1067 = vweird.f32 %v1061
  %vm1068 = vmor %vm1066, %vm1067
  %v1069 = vsel %vm1068, %v1061, %v1065
  %v1070 = vand.u32 2147483647, %v661
  %vm1071 = vcmp.eq.f32.partialorder %v1070, 8.507059e+37
  %v1072 = vand.u32 %v661, 2147483648
  %v1073 = vor.u32 1.1754944e-38, %v1072
  %v1074 = vsel %vm1071, %v1073, %v1069
  %v1075 = vmul.f32 1.0, %v1074
  %v1076 = vrcp.pop %v662
  %v1077 = vmul.f32 %v662, %v1076
  %v1078 = vsub.f32 1.0, %v1077
  %v1079 = vmul.f32 %v1076, %v1078
  %v1080 = vadd.f32 %v1076, %v1079
  %vm1081 = vweird.f32 %v662
  %vm1082 = vweird.f32 %v1076
  %vm1083 = vmor %vm1081, %vm1082
  %v1084 = vsel %vm1083, %v1076, %v1080
  %v1085 = vand.u32 2147483647, %v662
  %vm1086 = vcmp.eq.f32.partialorder %v1085, 8.507059e+37
  %v1087 = vand.u32 %v662, 2147483648
  %v1088 = vor.u32 1.1754944e-38, %v1087
  %v1089 = vsel %vm1086, %v1088, %v1084
  %v1090 = vmul.f32 1.0, %v1089
  %v1091 = vrcp.pop %v663
  %v1092 = vmul.f32 %v663, %v1091
  %v1093 = vsub.f32 1.0, %v1092
  %v1094 = vmul.f32 %v1091, %v1093
  %v1095 = vadd.f32 %v1091, %v1094
  %vm1096 = vweird.f32 %v663
  %vm1097 = vweird.f32 %v1091
  %vm1098 = vmor %vm1096, %vm1097
  %v1099 = vsel %vm1098, %v1091, %v1095
  %v1100 = vand.u32 2147483647, %v663
  %vm1101 = vcmp.eq.f32.partialorder %v1100, 8.507059e+37
  %v1102 = vand.u32 %v663, 2147483648
  %v1103 = vor.u32 1.1754944e-38, %v1102
  %v1104 = vsel %vm1101, %v1103, %v1099
  %v1105 = vmul.f32 1.0, %v1104
  %v1106 = vrcp.pop %v664
  %v1107 = vmul.f32 %v664, %v1106
  %v1108 = vsub.f32 1.0, %v1107
  %v1109 = vmul.f32 %v1106, %v1108
  %v1110 = vadd.f32 %v1106, %v1109
  %vm1111 = vweird.f32 %v664
  %vm1112 = vweird.f32 %v1106
  %vm1113 = vmor %vm1111, %vm1112
  %v1114 = vsel %vm1113, %v1106, %v1110
  %v1115 = vand.u32 2147483647, %v664
  %vm1116 = vcmp.eq.f32.partialorder %v1115, 8.507059e+37
  %v1117 = vand.u32 %v664, 2147483648
  %v1118 = vor.u32 1.1754944e-38, %v1117
  %v1119 = vsel %vm1116, %v1118, %v1114
  %v1120 = vmul.f32 1.0, %v1119
  %v1121 = vrcp.pop %v665
  %v1122 = vmul.f32 %v665, %v1121
  %v1123 = vsub.f32 1.0, %v1122
  %v1124 = vmul.f32 %v1121, %v1123
  %v1125 = vadd.f32 %v1121, %v1124
  %vm1126 = vweird.f32 %v665
  %vm1127 = vweird.f32 %v1121
  %vm1128 = vmor %vm1126, %vm1127
  %v1129 = vsel %vm1128, %v1121, %v1125
  %v1130 = vand.u32 2147483647, %v665
  %vm1131 = vcmp.eq.f32.partialorder %v1130, 8.507059e+37
  %v1132 = vand.u32 %v665, 2147483648
  %v1133 = vor.u32 1.1754944e-38, %v1132
  %v1134 = vsel %vm1131, %v1133, %v1129
  %v1135 = vmul.f32 1.0, %v1134
  %v1136 = vrcp.pop %v666
  %v1137 = vmul.f32 %v666, %v1136
  %v1138 = vsub.f32 1.0, %v1137
  %v1139 = vmul.f32 %v1136, %v1138
  %v1140 = vadd.f32 %v1136, %v1139
  %vm1141 = vweird.f32 %v666
  %vm1142 = vweird.f32 %v1136
  %vm1143 = vmor %vm1141, %vm1142
  %v1144 = vsel %vm1143, %v1136, %v1140
  %v1145 = vand.u32 2147483647, %v666
  %vm1146 = vcmp.eq.f32.partialorder %v1145, 8.507059e+37
  %v1147 = vand.u32 %v666, 2147483648
  %v1148 = vor.u32 1.1754944e-38, %v1147
  %v1149 = vsel %vm1146, %v1148, %v1144
  %v1150 = vmul.f32 1.0, %v1149
  %v1151 = vrcp.pop %v667
  %v1152 = vmul.f32 %v667, %v1151
  %v1153 = vsub.f32 1.0, %v1152
  %v1154 = vmul.f32 %v1151, %v1153
  %v1155 = vadd.f32 %v1151, %v1154
  %vm1156 = vweird.f32 %v667
  %vm1157 = vweird.f32 %v1151
  %vm1158 = vmor %vm1156, %vm1157
  %v1159 = vsel %vm1158, %v1151, %v1155
  %v1160 = vand.u32 2147483647, %v667
  %vm1161 = vcmp.eq.f32.partialorder %v1160, 8.507059e+37
  %v1162 = vand.u32 %v667, 2147483648
  %v1163 = vor.u32 1.1754944e-38, %v1162
  %v1164 = vsel %vm1161, %v1163, %v1159
  %v1165 = vmul.f32 1.0, %v1164
  %v1166 = vrcp.pop %v668
  %v1167 = vmul.f32 %v668, %v1166
  %v1168 = vsub.f32 1.0, %v1167
  %v1169 = vmul.f32 %v1166, %v1168
  %v1170 = vadd.f32 %v1166, %v1169
  %vm1171 = vweird.f32 %v668
  %vm1172 = vweird.f32 %v1166
  %vm1173 = vmor %vm1171, %vm1172
  %v1174 = vsel %vm1173, %v1166, %v1170
  %v1175 = vand.u32 2147483647, %v668
  %vm1176 = vcmp.eq.f32.partialorder %v1175, 8.507059e+37
  %v1177 = vand.u32 %v668, 2147483648
  %v1178 = vor.u32 1.1754944e-38, %v1177
  %v1179 = vsel %vm1176, %v1178, %v1174
  %v1180 = vmul.f32 1.0, %v1179
  %v1181 = vrcp.pop %v669
  %v1182 = vmul.f32 %v669, %v1181
  %v1183 = vsub.f32 1.0, %v1182
  %v1184 = vmul.f32 %v1181, %v1183
  %v1185 = vadd.f32 %v1181, %v1184
  %vm1186 = vweird.f32 %v669
  %vm1187 = vweird.f32 %v1181
  %vm1188 = vmor %vm1186, %vm1187
  %v1189 = vsel %vm1188, %v1181, %v1185
  %v1190 = vand.u32 2147483647, %v669
  %vm1191 = vcmp.eq.f32.partialorder %v1190, 8.507059e+37
  %v1192 = vand.u32 %v669, 2147483648
  %v1193 = vor.u32 1.1754944e-38, %v1192
  %v1194 = vsel %vm1191, %v1193, %v1189
  %v1195 = vmul.f32 1.0, %v1194
  %v1196 = vrcp.pop %v670
  %v1197 = vmul.f32 %v670, %v1196
  %v1198 = vsub.f32 1.0, %v1197
  %v1199 = vmul.f32 %v1196, %v1198
  %v1200 = vadd.f32 %v1196, %v1199
  %vm1201 = vweird.f32 %v670
  %vm1202 = vweird.f32 %v1196
  %vm1203 = vmor %vm1201, %vm1202
  %v1204 = vsel %vm1203, %v1196, %v1200
  %v1205 = vand.u32 2147483647, %v670
  %vm1206 = vcmp.eq.f32.partialorder %v1205, 8.507059e+37
  %v1207 = vand.u32 %v670, 2147483648
  %v1208 = vor.u32 1.1754944e-38, %v1207
  %v1209 = vsel %vm1206, %v1208, %v1204
  %v1210 = vmul.f32 1.0, %v1209
  %v1211 = vrcp.pop %v671
  %v1212 = vmul.f32 %v671, %v1211
  %v1213 = vsub.f32 1.0, %v1212
  %v1214 = vmul.f32 %v1211, %v1213
  %v1215 = vadd.f32 %v1211, %v1214
  %vm1216 = vweird.f32 %v671
  %vm1217 = vweird.f32 %v1211
  %vm1218 = vmor %vm1216, %vm1217
  %v1219 = vsel %vm1218, %v1211, %v1215
  %v1220 = vand.u32 2147483647, %v671
  %vm1221 = vcmp.eq.f32.partialorder %v1220, 8.507059e+37
  %v1222 = vand.u32 %v671, 2147483648
  %v1223 = vor.u32 1.1754944e-38, %v1222
  %v1224 = vsel %vm1221, %v1223, %v1219
  %v1225 = vmul.f32 1.0, %v1224
  %v1226 = vrcp.pop %v672
  %v1227 = vmul.f32 %v672, %v1226
  %v1228 = vsub.f32 1.0, %v1227
  %v1229 = vmul.f32 %v1226, %v1228
  %v1230 = vadd.f32 %v1226, %v1229
  %vm1231 = vweird.f32 %v672
  %vm1232 = vweird.f32 %v1226
  %vm1233 = vmor %vm1231, %vm1232
  %v1234 = vsel %vm1233, %v1226, %v1230
  %v1235 = vand.u32 2147483647, %v672
  %vm1236 = vcmp.eq.f32.partialorder %v1235, 8.507059e+37
  %v1237 = vand.u32 %v672, 2147483648
  %v1238 = vor.u32 1.1754944e-38, %v1237
  %v1239 = vsel %vm1236, %v1238, %v1234
  %v1240 = vmul.f32 1.0, %v1239
  %v1241 = vrcp.pop %v673
  %v1242 = vmul.f32 %v673, %v1241
  %v1243 = vsub.f32 1.0, %v1242
  %v1244 = vmul.f32 %v1241, %v1243
  %v1245 = vadd.f32 %v1241, %v1244
  %vm1246 = vweird.f32 %v673
  %vm1247 = vweird.f32 %v1241
  %vm1248 = vmor %vm1246, %vm1247
  %v1249 = vsel %vm1248, %v1241, %v1245
  %v1250 = vand.u32 2147483647, %v673
  %vm1251 = vcmp.eq.f32.partialorder %v1250, 8.507059e+37
  %v1252 = vand.u32 %v673, 2147483648
  %v1253 = vor.u32 1.1754944e-38, %v1252
  %v1254 = vsel %vm1251, %v1253, %v1249
  %v1255 = vmul.f32 1.0, %v1254
  %v1256 = vrcp.pop %v674
  %v1257 = vmul.f32 %v674, %v1256
  %v1258 = vsub.f32 1.0, %v1257
  %v1259 = vmul.f32 %v1256, %v1258
  %v1260 = vadd.f32 %v1256, %v1259
  %vm1261 = vweird.f32 %v674
  %vm1262 = vweird.f32 %v1256
  %vm1263 = vmor %vm1261, %vm1262
  %v1264 = vsel %vm1263, %v1256, %v1260
  %v1265 = vand.u32 2147483647, %v674
  %vm1266 = vcmp.eq.f32.partialorder %v1265, 8.507059e+37
  %v1267 = vand.u32 %v674, 2147483648
  %v1268 = vor.u32 1.1754944e-38, %v1267
  %v1269 = vsel %vm1266, %v1268, %v1264
  %v1270 = vmul.f32 1.0, %v1269
  %v1271 = vrcp.pop %v675
  %v1272 = vmul.f32 %v675, %v1271
  %v1273 = vsub.f32 1.0, %v1272
  %v1274 = vmul.f32 %v1271, %v1273
  %v1275 = vadd.f32 %v1271, %v1274
  %vm1276 = vweird.f32 %v675
  %vm1277 = vweird.f32 %v1271
  %vm1278 = vmor %vm1276, %vm1277
  %v1279 = vsel %vm1278, %v1271, %v1275
  %v1280 = vand.u32 2147483647, %v675
  %vm1281 = vcmp.eq.f32.partialorder %v1280, 8.507059e+37
  %v1282 = vand.u32 %v675, 2147483648
  %v1283 = vor.u32 1.1754944e-38, %v1282
  %v1284 = vsel %vm1281, %v1283, %v1279
  %v1285 = vmul.f32 1.0, %v1284
  %v1286 = vrcp.pop %v676
  %v1287 = vmul.f32 %v676, %v1286
  %v1288 = vsub.f32 1.0, %v1287
  %v1289 = vmul.f32 %v1286, %v1288
  %v1290 = vadd.f32 %v1286, %v1289
  %vm1291 = vweird.f32 %v676
  %vm1292 = vweird.f32 %v1286
  %vm1293 = vmor %vm1291, %vm1292
  %v1294 = vsel %vm1293, %v1286, %v1290
  %v1295 = vand.u32 2147483647, %v676
  %vm1296 = vcmp.eq.f32.partialorder %v1295, 8.507059e+37
  %v1297 = vand.u32 %v676, 2147483648
  %v1298 = vor.u32 1.1754944e-38, %v1297
  %v1299 = vsel %vm1296, %v1298, %v1294
  %v1300 = vmul.f32 1.0, %v1299
  %v1301 = vrcp.pop %v677
  %v1302 = vmul.f32 %v677, %v1301
  %v1303 = vsub.f32 1.0, %v1302
  %v1304 = vmul.f32 %v1301, %v1303
  %v1305 = vadd.f32 %v1301, %v1304
  %vm1306 = vweird.f32 %v677
  %vm1307 = vweird.f32 %v1301
  %vm1308 = vmor %vm1306, %vm1307
  %v1309 = vsel %vm1308, %v1301, %v1305
  %v1310 = vand.u32 2147483647, %v677
  %vm1311 = vcmp.eq.f32.partialorder %v1310, 8.507059e+37
  %v1312 = vand.u32 %v677, 2147483648
  %v1313 = vor.u32 1.1754944e-38, %v1312
  %v1314 = vsel %vm1311, %v1313, %v1309
  %v1315 = vmul.f32 1.0, %v1314
  %v1316 = vrcp.pop %v678
  %v1317 = vmul.f32 %v678, %v1316
  %v1318 = vsub.f32 1.0, %v1317
  %v1319 = vmul.f32 %v1316, %v1318
  %v1320 = vadd.f32 %v1316, %v1319
  %vm1321 = vweird.f32 %v678
  %vm1322 = vweird.f32 %v1316
  %vm1323 = vmor %vm1321, %vm1322
  %v1324 = vsel %vm1323, %v1316, %v1320
  %v1325 = vand.u32 2147483647, %v678
  %vm1326 = vcmp.eq.f32.partialorder %v1325, 8.507059e+37
  %v1327 = vand.u32 %v678, 2147483648
  %v1328 = vor.u32 1.1754944e-38, %v1327
  %v1329 = vsel %vm1326, %v1328, %v1324
  %v1330 = vmul.f32 1.0, %v1329
  %v1331 = vrcp.pop %v679
  %v1332 = vmul.f32 %v679, %v1331
  %v1333 = vsub.f32 1.0, %v1332
  %v1334 = vmul.f32 %v1331, %v1333
  %v1335 = vadd.f32 %v1331, %v1334
  %vm1336 = vweird.f32 %v679
  %vm1337 = vweird.f32 %v1331
  %vm1338 = vmor %vm1336, %vm1337
  %v1339 = vsel %vm1338, %v1331, %v1335
  %v1340 = vand.u32 2147483647, %v679
  %vm1341 = vcmp.eq.f32.partialorder %v1340, 8.507059e+37
  %v1342 = vand.u32 %v679, 2147483648
  %v1343 = vor.u32 1.1754944e-38, %v1342
  %v1344 = vsel %vm1341, %v1343, %v1339
  %v1345 = vmul.f32 1.0, %v1344
  %v1346 = vrcp.pop %v680
  %v1347 = vmul.f32 %v680, %v1346
  %v1348 = vsub.f32 1.0, %v1347
  %v1349 = vmul.f32 %v1346, %v1348
  %v1350 = vadd.f32 %v1346, %v1349
  %vm1351 = vweird.f32 %v680
  %vm1352 = vweird.f32 %v1346
  %vm1353 = vmor %vm1351, %vm1352
  %v1354 = vsel %vm1353, %v1346, %v1350
  %v1355 = vand.u32 2147483647, %v680
  %vm1356 = vcmp.eq.f32.partialorder %v1355, 8.507059e+37
  %v1357 = vand.u32 %v680, 2147483648
  %v1358 = vor.u32 1.1754944e-38, %v1357
  %v1359 = vsel %vm1356, %v1358, %v1354
  %v1360 = vmul.f32 1.0, %v1359
  %v1361 = vrcp.pop %v681
  %v1362 = vmul.f32 %v681, %v1361
  %v1363 = vsub.f32 1.0, %v1362
  %v1364 = vmul.f32 %v1361, %v1363
  %v1365 = vadd.f32 %v1361, %v1364
  %vm1366 = vweird.f32 %v681
  %vm1367 = vweird.f32 %v1361
  %vm1368 = vmor %vm1366, %vm1367
  %v1369 = vsel %vm1368, %v1361, %v1365
  %v1370 = vand.u32 2147483647, %v681
  %vm1371 = vcmp.eq.f32.partialorder %v1370, 8.507059e+37
  %v1372 = vand.u32 %v681, 2147483648
  %v1373 = vor.u32 1.1754944e-38, %v1372
  %v1374 = vsel %vm1371, %v1373, %v1369
  %v1375 = vmul.f32 1.0, %v1374
  %v1376 = vrcp.pop %v682
  %v1377 = vmul.f32 %v682, %v1376
  %v1378 = vsub.f32 1.0, %v1377
  %v1379 = vmul.f32 %v1376, %v1378
  %v1380 = vadd.f32 %v1376, %v1379
  %vm1381 = vweird.f32 %v682
  %vm1382 = vweird.f32 %v1376
  %vm1383 = vmor %vm1381, %vm1382
  %v1384 = vsel %vm1383, %v1376, %v1380
  %v1385 = vand.u32 2147483647, %v682
  %vm1386 = vcmp.eq.f32.partialorder %v1385, 8.507059e+37
  %v1387 = vand.u32 %v682, 2147483648
  %v1388 = vor.u32 1.1754944e-38, %v1387
  %v1389 = vsel %vm1386, %v1388, %v1384
  %v1390 = vmul.f32 1.0, %v1389
  %v1391 = vrcp.pop %v683
  %v1392 = vmul.f32 %v683, %v1391
  %v1393 = vsub.f32 1.0, %v1392
  %v1394 = vmul.f32 %v1391, %v1393
  %v1395 = vadd.f32 %v1391, %v1394
  %vm1396 = vweird.f32 %v683
  %vm1397 = vweird.f32 %v1391
  %vm1398 = vmor %vm1396, %vm1397
  %v1399 = vsel %vm1398, %v1391, %v1395
  %v1400 = vand.u32 2147483647, %v683
  %vm1401 = vcmp.eq.f32.partialorder %v1400, 8.507059e+37
  %v1402 = vand.u32 %v683, 2147483648
  %v1403 = vor.u32 1.1754944e-38, %v1402
  %v1404 = vsel %vm1401, %v1403, %v1399
  %v1405 = vmul.f32 1.0, %v1404
  %v1406 = vrcp.pop %v684
  %v1407 = vmul.f32 %v684, %v1406
  %v1408 = vsub.f32 1.0, %v1407
  %v1409 = vmul.f32 %v1406, %v1408
  %v1410 = vadd.f32 %v1406, %v1409
  %vm1411 = vweird.f32 %v684
  %vm1412 = vweird.f32 %v1406
  %vm1413 = vmor %vm1411, %vm1412
  %v1414 = vsel %vm1413, %v1406, %v1410
  %v1415 = vand.u32 2147483647, %v684
  %vm1416 = vcmp.eq.f32.partialorder %v1415, 8.507059e+37
  %v1417 = vand.u32 %v684, 2147483648
  %v1418 = vor.u32 1.1754944e-38, %v1417
  %v1419 = vsel %vm1416, %v1418, %v1414
  %v1420 = vmul.f32 1.0, %v1419
  %v1421 = vrcp.pop %v685
  %v1422 = vmul.f32 %v685, %v1421
  %v1423 = vsub.f32 1.0, %v1422
  %v1424 = vmul.f32 %v1421, %v1423
  %v1425 = vadd.f32 %v1421, %v1424
  %vm1426 = vweird.f32 %v685
  %vm1427 = vweird.f32 %v1421
  %vm1428 = vmor %vm1426, %vm1427
  %v1429 = vsel %vm1428, %v1421, %v1425
  %v1430 = vand.u32 2147483647, %v685
  %vm1431 = vcmp.eq.f32.partialorder %v1430, 8.507059e+37
  %v1432 = vand.u32 %v685, 2147483648
  %v1433 = vor.u32 1.1754944e-38, %v1432
  %v1434 = vsel %vm1431, %v1433, %v1429
  %v1435 = vmul.f32 1.0, %v1434
  %v1436 = vrcp.pop %v686
  %v1437 = vmul.f32 %v686, %v1436
  %v1438 = vsub.f32 1.0, %v1437
  %v1439 = vmul.f32 %v1436, %v1438
  %v1440 = vadd.f32 %v1436, %v1439
  %vm1441 = vweird.f32 %v686
  %vm1442 = vweird.f32 %v1436
  %vm1443 = vmor %vm1441, %vm1442
  %v1444 = vsel %vm1443, %v1436, %v1440
  %v1445 = vand.u32 2147483647, %v686
  %vm1446 = vcmp.eq.f32.partialorder %v1445, 8.507059e+37
  %v1447 = vand.u32 %v686, 2147483648
  %v1448 = vor.u32 1.1754944e-38, %v1447
  %v1449 = vsel %vm1446, %v1448, %v1444
  %v1450 = vmul.f32 1.0, %v1449
  %v1451 = vrcp.pop %v687
  %v1452 = vmul.f32 %v687, %v1451
  %v1453 = vsub.f32 1.0, %v1452
  %v1454 = vmul.f32 %v1451, %v1453
  %v1455 = vadd.f32 %v1451, %v1454
  %vm1456 = vweird.f32 %v687
  %vm1457 = vweird.f32 %v1451
  %vm1458 = vmor %vm1456, %vm1457
  %v1459 = vsel %vm1458, %v1451, %v1455
  %v1460 = vand.u32 2147483647, %v687
  %vm1461 = vcmp.eq.f32.partialorder %v1460, 8.507059e+37
  %v1462 = vand.u32 %v687, 2147483648
  %v1463 = vor.u32 1.1754944e-38, %v1462
  %v1464 = vsel %vm1461, %v1463, %v1459
  %v1465 = vmul.f32 1.0, %v1464
  %v1466 = vrcp.pop %v688
  %v1467 = vmul.f32 %v688, %v1466
  %v1468 = vsub.f32 1.0, %v1467
  %v1469 = vmul.f32 %v1466, %v1468
  %v1470 = vadd.f32 %v1466, %v1469
  %vm1471 = vweird.f32 %v688
  %vm1472 = vweird.f32 %v1466
  %vm1473 = vmor %vm1471, %vm1472
  %v1474 = vsel %vm1473, %v1466, %v1470
  %v1475 = vand.u32 2147483647, %v688
  %vm1476 = vcmp.eq.f32.partialorder %v1475, 8.507059e+37
  %v1477 = vand.u32 %v688, 2147483648
  %v1478 = vor.u32 1.1754944e-38, %v1477
  %v1479 = vsel %vm1476, %v1478, %v1474
  %v1480 = vmul.f32 1.0, %v1479
  %v1481 = vrcp.pop %v689
  %v1482 = vmul.f32 %v689, %v1481
  %v1483 = vsub.f32 1.0, %v1482
  %v1484 = vmul.f32 %v1481, %v1483
  %v1485 = vadd.f32 %v1481, %v1484
  %vm1486 = vweird.f32 %v689
  %vm1487 = vweird.f32 %v1481
  %vm1488 = vmor %vm1486, %vm1487
  %v1489 = vsel %vm1488, %v1481, %v1485
  %v1490 = vand.u32 2147483647, %v689
  %vm1491 = vcmp.eq.f32.partialorder %v1490, 8.507059e+37
  %v1492 = vand.u32 %v689, 2147483648
  %v1493 = vor.u32 1.1754944e-38, %v1492
  %v1494 = vsel %vm1491, %v1493, %v1489
  %v1495 = vmul.f32 1.0, %v1494
  %v1496 = vrcp.pop %v690
  %v1497 = vmul.f32 %v690, %v1496
  %v1498 = vsub.f32 1.0, %v1497
  %v1499 = vmul.f32 %v1496, %v1498
  %v1500 = vadd.f32 %v1496, %v1499
  %vm1501 = vweird.f32 %v690
  %vm1502 = vweird.f32 %v1496
  %vm1503 = vmor %vm1501, %vm1502
  %v1504 = vsel %vm1503, %v1496, %v1500
  %v1505 = vand.u32 2147483647, %v690
  %vm1506 = vcmp.eq.f32.partialorder %v1505, 8.507059e+37
  %v1507 = vand.u32 %v690, 2147483648
  %v1508 = vor.u32 1.1754944e-38, %v1507
  %v1509 = vsel %vm1506, %v1508, %v1504
  %v1510 = vmul.f32 1.0, %v1509
  %v1511 = vrcp.pop %v691
  %v1512 = vmul.f32 %v691, %v1511
  %v1513 = vsub.f32 1.0, %v1512
  %v1514 = vmul.f32 %v1511, %v1513
  %v1515 = vadd.f32 %v1511, %v1514
  %vm1516 = vweird.f32 %v691
  %vm1517 = vweird.f32 %v1511
  %vm1518 = vmor %vm1516, %vm1517
  %v1519 = vsel %vm1518, %v1511, %v1515
  %v1520 = vand.u32 2147483647, %v691
  %vm1521 = vcmp.eq.f32.partialorder %v1520, 8.507059e+37
  %v1522 = vand.u32 %v691, 2147483648
  %v1523 = vor.u32 1.1754944e-38, %v1522
  %v1524 = vsel %vm1521, %v1523, %v1519
  %v1525 = vmul.f32 1.0, %v1524
  %v1526 = vrcp.pop %v692
  %v1527 = vmul.f32 %v692, %v1526
  %v1528 = vsub.f32 1.0, %v1527
  %v1529 = vmul.f32 %v1526, %v1528
  %v1530 = vadd.f32 %v1526, %v1529
  %vm1531 = vweird.f32 %v692
  %vm1532 = vweird.f32 %v1526
  %vm1533 = vmor %vm1531, %vm1532
  %v1534 = vsel %vm1533, %v1526, %v1530
  %v1535 = vand.u32 2147483647, %v692
  %vm1536 = vcmp.eq.f32.partialorder %v1535, 8.507059e+37
  %v1537 = vand.u32 %v692, 2147483648
  %v1538 = vor.u32 1.1754944e-38, %v1537
  %v1539 = vsel %vm1536, %v1538, %v1534
  %v1540 = vmul.f32 1.0, %v1539
  %v1541 = vrcp.pop %v693
  %v1542 = vmul.f32 %v693, %v1541
  %v1543 = vsub.f32 1.0, %v1542
  %v1544 = vmul.f32 %v1541, %v1543
  %v1545 = vadd.f32 %v1541, %v1544
  %vm1546 = vweird.f32 %v693
  %vm1547 = vweird.f32 %v1541
  %vm1548 = vmor %vm1546, %vm1547
  %v1549 = vsel %vm1548, %v1541, %v1545
  %v1550 = vand.u32 2147483647, %v693
  %vm1551 = vcmp.eq.f32.partialorder %v1550, 8.507059e+37
  %v1552 = vand.u32 %v693, 2147483648
  %v1553 = vor.u32 1.1754944e-38, %v1552
  %v1554 = vsel %vm1551, %v1553, %v1549
  %v1555 = vmul.f32 1.0, %v1554
  %v1556 = vrcp.pop %v694
  %v1557 = vmul.f32 %v694, %v1556
  %v1558 = vsub.f32 1.0, %v1557
  %v1559 = vmul.f32 %v1556, %v1558
  %v1560 = vadd.f32 %v1556, %v1559
  %vm1561 = vweird.f32 %v694
  %vm1562 = vweird.f32 %v1556
  %vm1563 = vmor %vm1561, %vm1562
  %v1564 = vsel %vm1563, %v1556, %v1560
  %v1565 = vand.u32 2147483647, %v694
  %vm1566 = vcmp.eq.f32.partialorder %v1565, 8.507059e+37
  %v1567 = vand.u32 %v694, 2147483648
  %v1568 = vor.u32 1.1754944e-38, %v1567
  %v1569 = vsel %vm1566, %v1568, %v1564
  %v1570 = vmul.f32 1.0, %v1569
  %v1571 = vrcp.pop %v695
  %v1572 = vmul.f32 %v695, %v1571
  %v1573 = vsub.f32 1.0, %v1572
  %v1574 = vmul.f32 %v1571, %v1573
  %v1575 = vadd.f32 %v1571, %v1574
  %vm1576 = vweird.f32 %v695
  %vm1577 = vweird.f32 %v1571
  %vm1578 = vmor %vm1576, %vm1577
  %v1579 = vsel %vm1578, %v1571, %v1575
  %v1580 = vand.u32 2147483647, %v695
  %vm1581 = vcmp.eq.f32.partialorder %v1580, 8.507059e+37
  %v1582 = vand.u32 %v695, 2147483648
  %v1583 = vor.u32 1.1754944e-38, %v1582
  %v1584 = vsel %vm1581, %v1583, %v1579
  %v1585 = vmul.f32 1.0, %v1584
  %v1586 = vrcp.pop %v696
  %v1587 = vmul.f32 %v696, %v1586
  %v1588 = vsub.f32 1.0, %v1587
  %v1589 = vmul.f32 %v1586, %v1588
  %v1590 = vadd.f32 %v1586, %v1589
  %vm1591 = vweird.f32 %v696
  %vm1592 = vweird.f32 %v1586
  %vm1593 = vmor %vm1591, %vm1592
  %v1594 = vsel %vm1593, %v1586, %v1590
  %v1595 = vand.u32 2147483647, %v696
  %vm1596 = vcmp.eq.f32.partialorder %v1595, 8.507059e+37
  %v1597 = vand.u32 %v696, 2147483648
  %v1598 = vor.u32 1.1754944e-38, %v1597
  %v1599 = vsel %vm1596, %v1598, %v1594
  %v1600 = vmul.f32 1.0, %v1599
  %v1601 = vrcp.pop %v697
  %v1602 = vmul.f32 %v697, %v1601
  %v1603 = vsub.f32 1.0, %v1602
  %v1604 = vmul.f32 %v1601, %v1603
  %v1605 = vadd.f32 %v1601, %v1604
  %vm1606 = vweird.f32 %v697
  %vm1607 = vweird.f32 %v1601
  %vm1608 = vmor %vm1606, %vm1607
  %v1609 = vsel %vm1608, %v1601, %v1605
  %v1610 = vand.u32 2147483647, %v697
  %vm1611 = vcmp.eq.f32.partialorder %v1610, 8.507059e+37
  %v1612 = vand.u32 %v697, 2147483648
  %v1613 = vor.u32 1.1754944e-38, %v1612
  %v1614 = vsel %vm1611, %v1613, %v1609
  %v1615 = vmul.f32 1.0, %v1614
  %v1616 = vrcp.pop %v698
  %v1617 = vmul.f32 %v698, %v1616
  %v1618 = vsub.f32 1.0, %v1617
  %v1619 = vmul.f32 %v1616, %v1618
  %v1620 = vadd.f32 %v1616, %v1619
  %vm1621 = vweird.f32 %v698
  %vm1622 = vweird.f32 %v1616
  %vm1623 = vmor %vm1621, %vm1622
  %v1624 = vsel %vm1623, %v1616, %v1620
  %v1625 = vand.u32 2147483647, %v698
  %vm1626 = vcmp.eq.f32.partialorder %v1625, 8.507059e+37
  %v1627 = vand.u32 %v698, 2147483648
  %v1628 = vor.u32 1.1754944e-38, %v1627
  %v1629 = vsel %vm1626, %v1628, %v1624
  %v1630 = vmul.f32 1.0, %v1629
  %v1631 = vrcp.pop %v699
  %v1632 = vmul.f32 %v699, %v1631
  %v1633 = vsub.f32 1.0, %v1632
  %v1634 = vmul.f32 %v1631, %v1633
  %v1635 = vadd.f32 %v1631, %v1634
  %vm1636 = vweird.f32 %v699
  %vm1637 = vweird.f32 %v1631
  %vm1638 = vmor %vm1636, %vm1637
  %v1639 = vsel %vm1638, %v1631, %v1635
  %v1640 = vand.u32 2147483647, %v699
  %vm1641 = vcmp.eq.f32.partialorder %v1640, 8.507059e+37
  %v1642 = vand.u32 %v699, 2147483648
  %v1643 = vor.u32 1.1754944e-38, %v1642
  %v1644 = vsel %vm1641, %v1643, %v1639
  %v1645 = vmul.f32 1.0, %v1644
  %v1646 = vrcp.pop %v700
  %v1647 = vmul.f32 %v700, %v1646
  %v1648 = vsub.f32 1.0, %v1647
  %v1649 = vmul.f32 %v1646, %v1648
  %v1650 = vadd.f32 %v1646, %v1649
  %vm1651 = vweird.f32 %v700
  %vm1652 = vweird.f32 %v1646
  %vm1653 = vmor %vm1651, %vm1652
  %v1654 = vsel %vm1653, %v1646, %v1650
  %v1655 = vand.u32 2147483647, %v700
  %vm1656 = vcmp.eq.f32.partialorder %v1655, 8.507059e+37
  %v1657 = vand.u32 %v700, 2147483648
  %v1658 = vor.u32 1.1754944e-38, %v1657
  %v1659 = vsel %vm1656, %v1658, %v1654
  %v1660 = vmul.f32 1.0, %v1659
  %1661 = vst [vmem:[%s2] sm:$0xff] %v715
  %1662 = vst [vmem:[%s2 + $0x8] sm:$0xff] %v730
  %1663 = vst [vmem:[%s2 + $0x10] sm:$0xff] %v745
  %1664 = vst [vmem:[%s2 + $0x18] sm:$0xff] %v760
  %1665 = vst [vmem:[%s2 + $0x20] sm:$0xff] %v775
  %1666 = vst [vmem:[%s2 + $0x28] sm:$0xff] %v790
  %1667 = vst [vmem:[%s2 + $0x30] sm:$0xff] %v805
  %1668 = vst [vmem:[%s2 + $0x38] sm:$0xff] %v820
  %1669 = vst [vmem:[%s2 + $0x40] sm:$0xff] %v835
  %1670 = vst [vmem:[%s2 + $0x48] sm:$0xff] %v850
  %1671 = vst [vmem:[%s2 + $0x50] sm:$0xff] %v865
  %1672 = vst [vmem:[%s2 + $0x58] sm:$0xff] %v880
  %1673 = vst [vmem:[%s2 + $0x60] sm:$0xff] %v895
  %1674 = vst [vmem:[%s2 + $0x68] sm:$0xff] %v910
  %1675 = vst [vmem:[%s2 + $0x70] sm:$0xff] %v925
  %1676 = vst [vmem:[%s2 + $0x78] sm:$0xff] %v940
  %1677 = vst [vmem:[%s2 + $0x80] sm:$0xff] %v955
  %1678 = vst [vmem:[%s2 + $0x88] sm:$0xff] %v970
  %1679 = vst [vmem:[%s2 + $0x90] sm:$0xff] %v985
  %1680 = vst [vmem:[%s2 + $0x98] sm:$0xff] %v1000
  %1681 = vst [vmem:[%s2 + $0xa0] sm:$0xff] %v1015
  %1682 = vst [vmem:[%s2 + $0xa8] sm:$0xff] %v1030
  %1683 = vst [vmem:[%s2 + $0xb0] sm:$0xff] %v1045
  %1684 = vst [vmem:[%s2 + $0xb8] sm:$0xff] %v1060
  %1685 = vst [vmem:[%s2 + $0xc0] sm:$0xff] %v1075
  %1686 = vst [vmem:[%s2 + $0xc8] sm:$0xff] %v1090
  %1687 = vst [vmem:[%s2 + $0xd0] sm:$0xff] %v1105
  %1688 = vst [vmem:[%s2 + $0xd8] sm:$0xff] %v1120
  %1689 = vst [vmem:[%s2 + $0xe0] sm:$0xff] %v1135
  %1690 = vst [vmem:[%s2 + $0xe8] sm:$0xff] %v1150
  %1691 = vst [vmem:[%s2 + $0xf0] sm:$0xff] %v1165
  %1692 = vst [vmem:[%s2 + $0xf8] sm:$0xff] %v1180
  %1693 = vst [vmem:[%s2 + $0x100] sm:$0xff] %v1195
  %1694 = vst [vmem:[%s2 + $0x108] sm:$0xff] %v1210
  %1695 = vst [vmem:[%s2 + $0x110] sm:$0xff] %v1225
  %1696 = vst [vmem:[%s2 + $0x118] sm:$0xff] %v1240
  %1697 = vst [vmem:[%s2 + $0x120] sm:$0xff] %v1255
  %1698 = vst [vmem:[%s2 + $0x128] sm:$0xff] %v1270
  %1699 = vst [vmem:[%s2 + $0x130] sm:$0xff] %v1285
  %1700 = vst [vmem:[%s2 + $0x138] sm:$0xff] %v1300
  %1701 = vst [vmem:[%s2 + $0x140] sm:$0xff] %v1315
  %1702 = vst [vmem:[%s2 + $0x148] sm:$0xff] %v1330
  %1703 = vst [vmem:[%s2 + $0x150] sm:$0xff] %v1345
  %1704 = vst [vmem:[%s2 + $0x158] sm:$0xff] %v1360
  %1705 = vst [vmem:[%s2 + $0x160] sm:$0xff] %v1375
  %1706 = vst [vmem:[%s2 + $0x168] sm:$0xff] %v1390
  %1707 = vst [vmem:[%s2 + $0x170] sm:$0xff] %v1405
  %1708 = vst [vmem:[%s2 + $0x178] sm:$0xff] %v1420
  %1709 = vst [vmem:[%s2 + $0x180] sm:$0xff] %v1435
  %1710 = vst [vmem:[%s2 + $0x188] sm:$0xff] %v1450
  %1711 = vst [vmem:[%s2 + $0x190] sm:$0xff] %v1465
  %1712 = vst [vmem:[%s2 + $0x198] sm:$0xff] %v1480
  %1713 = vst [vmem:[%s2 + $0x1a0] sm:$0xff] %v1495
  %1714 = vst [vmem:[%s2 + $0x1a8] sm:$0xff] %v1510
  %1715 = vst [vmem:[%s2 + $0x1b0] sm:$0xff] %v1525
  %1716 = vst [vmem:[%s2 + $0x1b8] sm:$0xff] %v1540
  %1717 = vst [vmem:[%s2 + $0x1c0] sm:$0xff] %v1555
  %1718 = vst [vmem:[%s2 + $0x1c8] sm:$0xff] %v1570
  %1719 = vst [vmem:[%s2 + $0x1d0] sm:$0xff] %v1585
  %1720 = vst [vmem:[%s2 + $0x1d8] sm:$0xff] %v1600
  %1721 = vst [vmem:[%s2 + $0x1e0] sm:$0xff] %v1615
  %1722 = vst [vmem:[%s2 + $0x1e8] sm:$0xff] %v1630
  %1723 = vst [vmem:[%s2 + $0x1f0] sm:$0xff] %v1645
  %1724 = vst [vmem:[%s2 + $0x1f8] sm:$0xff] %v1660
  // Predicated region
  $region10: #{vgae_forward.5} parent=0 // pred_check
    _
  $region11: #{vgae_forward.5} parent=0 // pred_check_branch
    %1726 = sbr.rel (0) target = $region13
  $region12: #{vgae_forward.5} parent=0 // pred_region
    _
  $region13: #{vgae_forward.5} parent=0 // pred_fallthru
    _
  // Predicated region
  $region14: #{vgae_forward.5} parent=0 // pred_check
    _
  $region15: #{vgae_forward.5} parent=0 // pred_check_branch
    %1728 = sbr.rel (0) target = $region17
  $region16: #{vgae_forward.5} parent=0 // pred_region
    _
  $region17: #{vgae_forward.5} parent=0 // pred_fallthru
    _

// kernel: vgae_forward.3
$region0: #{vgae_forward.3}
  #allocation0 [shape = 'u32[]', space=smem, size = 0x4, offset = 0x4, fixed_abs, tag = 'smem constant byte address 0x4 - core index']
  #allocation1 [shape = 'u32[72,128]{1,0:T(1,128)}', space=vmem, size = 0x9000, scoped, tag = 'internal scratch']
  #allocation2 [shape = 'f32[256,128]{1,0:T(8,128)}', space=vmem, size = 0x20000, scoped, tag = 'scratch operand']
  %s0 = inlined_call_operand.vmem [shape: bf16[256,256], index: 0, kind: input, shape index: {}]
  %s1 = inlined_call_operand.vmem [shape: bf16[256,128], index: 1, kind: input, shape index: {}]
  %s2 = inlined_call_operand.vmem [shape: bf16[128,128], index: 2, kind: input, shape index: {}]
  %s3 = inlined_call_operand.vmem [shape: bf16[256,128], index: 3, kind: output, shape index: {}]
  %s4 = sld [smem:[#allocation0]]
  $region30: #{vgae_forward.3} parent=0
    _
  %s6 = ssub.s32 1, %s4
  %s7 = scalar_select 0, %s6, %s4
  // Predicated region
  $region2: #{vgae_forward.3} parent=0 // pred_check
    _
  $region3: #{vgae_forward.3} parent=0 // pred_check_branch
    %9 = sbr.rel (0) target = $region5
  $region4: #{vgae_forward.3} parent=0 // pred_region
    _
  $region5: #{vgae_forward.3} parent=0 // pred_fallthru
    _
  // Predicated region
  $region6: #{vgae_forward.3} parent=0 // pred_check
    _
  $region7: #{vgae_forward.3} parent=0 // pred_check_branch
    %11 = sbr.rel (0) target = $region9
  $region8: #{vgae_forward.3} parent=0 // pred_region
    _
  $region9: #{vgae_forward.3} parent=0 // pred_fallthru
    _
  // Predicated region
  $region10: #{vgae_forward.3} parent=0 // pred_check
    _
  $region11: #{vgae_forward.3} parent=0 // pred_check_branch
    %13 = sbr.rel (0) target = $region13
  $region12: #{vgae_forward.3} parent=0 // pred_region
    _
  $region13: #{vgae_forward.3} parent=0 // pred_fallthru
    _
  %p14 = scmp.eq.s32.totalorder 0, 0
  // Predicated region
  $region14: #{vgae_forward.3} parent=0 // pred_check
    %p15 = pneg %p14
  $region15: #{vgae_forward.3} parent=0 // pred_check_branch
    %17 = sbr.rel (%p15) target = $region17
  $region16: #{vgae_forward.3} parent=0 // pred_region
    %18 = vst [vmem:[#allocation2] sm:$0xff] 0.0
    %19 = vst [vmem:[#allocation2 + $0x8] sm:$0xff] 0.0
    %20 = vst [vmem:[#allocation2 + $0x10] sm:$0xff] 0.0
    %21 = vst [vmem:[#allocation2 + $0x18] sm:$0xff] 0.0
    %22 = vst [vmem:[#allocation2 + $0x20] sm:$0xff] 0.0
    %23 = vst [vmem:[#allocation2 + $0x28] sm:$0xff] 0.0
    %24 = vst [vmem:[#allocation2 + $0x30] sm:$0xff] 0.0
    %25 = vst [vmem:[#allocation2 + $0x38] sm:$0xff] 0.0
    %26 = vst [vmem:[#allocation2 + $0x40] sm:$0xff] 0.0
    %27 = vst [vmem:[#allocation2 + $0x48] sm:$0xff] 0.0
    %28 = vst [vmem:[#allocation2 + $0x50] sm:$0xff] 0.0
    %29 = vst [vmem:[#allocation2 + $0x58] sm:$0xff] 0.0
    %30 = vst [vmem:[#allocation2 + $0x60] sm:$0xff] 0.0
    %31 = vst [vmem:[#allocation2 + $0x68] sm:$0xff] 0.0
    %32 = vst [vmem:[#allocation2 + $0x70] sm:$0xff] 0.0
    %33 = vst [vmem:[#allocation2 + $0x78] sm:$0xff] 0.0
    %34 = vst [vmem:[#allocation2 + $0x80] sm:$0xff] 0.0
    %35 = vst [vmem:[#allocation2 + $0x88] sm:$0xff] 0.0
    %36 = vst [vmem:[#allocation2 + $0x90] sm:$0xff] 0.0
    %37 = vst [vmem:[#allocation2 + $0x98] sm:$0xff] 0.0
    %38 = vst [vmem:[#allocation2 + $0xa0] sm:$0xff] 0.0
    %39 = vst [vmem:[#allocation2 + $0xa8] sm:$0xff] 0.0
    %40 = vst [vmem:[#allocation2 + $0xb0] sm:$0xff] 0.0
    %41 = vst [vmem:[#allocation2 + $0xb8] sm:$0xff] 0.0
    %42 = vst [vmem:[#allocation2 + $0xc0] sm:$0xff] 0.0
    %43 = vst [vmem:[#allocation2 + $0xc8] sm:$0xff] 0.0
    %44 = vst [vmem:[#allocation2 + $0xd0] sm:$0xff] 0.0
    %45 = vst [vmem:[#allocation2 + $0xd8] sm:$0xff] 0.0
    %46 = vst [vmem:[#allocation2 + $0xe0] sm:$0xff] 0.0
    %47 = vst [vmem:[#allocation2 + $0xe8] sm:$0xff] 0.0
    %48 = vst [vmem:[#allocation2 + $0xf0] sm:$0xff] 0.0
    %49 = vst [vmem:[#allocation2 + $0xf8] sm:$0xff] 0.0
  $region17: #{vgae_forward.3} parent=0 // pred_fallthru
    _
  %s50 = smul.u32 0, 256
  %s51 = sshra.s32 %s50, 3
  %s52 = sand.u32 %s50, 7
  %s53 = smul.addr %s51, 4
  %s54 = scalar_lea.vmem %s1, %s53
  %v55 = vld [vmem:[%s54] sm:$0xf]
  %v56 = vld [vmem:[%s54 + $0x4] sm:$0xf]
  %v57 = vld [vmem:[%s54 + $0x8] sm:$0xf]
  %v58 = vld [vmem:[%s54 + $0xc] sm:$0xf]
  %v59 = vld [vmem:[%s54 + $0x10] sm:$0xf]
  %v60 = vld [vmem:[%s54 + $0x14] sm:$0xf]
  %v61 = vld [vmem:[%s54 + $0x18] sm:$0xf]
  %v62 = vld [vmem:[%s54 + $0x1c] sm:$0xf]
  %v63 = vld [vmem:[%s54 + $0x20] sm:$0xf]
  %v64 = vld [vmem:[%s54 + $0x24] sm:$0xf]
  %v65 = vld [vmem:[%s54 + $0x28] sm:$0xf]
  %v66 = vld [vmem:[%s54 + $0x2c] sm:$0xf]
  %v67 = vld [vmem:[%s54 + $0x30] sm:$0xf]
  %v68 = vld [vmem:[%s54 + $0x34] sm:$0xf]
  %v69 = vld [vmem:[%s54 + $0x38] sm:$0xf]
  %v70 = vld [vmem:[%s54 + $0x3c] sm:$0xf]
  %v71 = vld [vmem:[%s54 + $0x40] sm:$0xf]
  %v72 = vld [vmem:[%s54 + $0x44] sm:$0xf]
  %v73 = vld [vmem:[%s54 + $0x48] sm:$0xf]
  %v74 = vld [vmem:[%s54 + $0x4c] sm:$0xf]
  %v75 = vld [vmem:[%s54 + $0x50] sm:$0xf]
  %v76 = vld [vmem:[%s54 + $0x54] sm:$0xf]
  %v77 = vld [vmem:[%s54 + $0x58] sm:$0xf]
  %v78 = vld [vmem:[%s54 + $0x5c] sm:$0xf]
  %v79 = vld [vmem:[%s54 + $0x60] sm:$0xf]
  %v80 = vld [vmem:[%s54 + $0x64] sm:$0xf]
  %v81 = vld [vmem:[%s54 + $0x68] sm:$0xf]
  %v82 = vld [vmem:[%s54 + $0x6c] sm:$0xf]
  %v83 = vld [vmem:[%s54 + $0x70] sm:$0xf]
  %v84 = vld [vmem:[%s54 + $0x74] sm:$0xf]
  %v85 = vld [vmem:[%s54 + $0x78] sm:$0xf]
  %v86 = vld [vmem:[%s54 + $0x7c] sm:$0xf]
  %v87 = vld [vmem:[%s2] sm:$0xf]
  %v88 = vld [vmem:[%s2 + $0x4] sm:$0xf]
  %v89 = vld [vmem:[%s2 + $0x8] sm:$0xf]
  %v90 = vld [vmem:[%s2 + $0xc] sm:$0xf]
  %v91 = vld [vmem:[%s2 + $0x10] sm:$0xf]
  %v92 = vld [vmem:[%s2 + $0x14] sm:$0xf]
  %v93 = vld [vmem:[%s2 + $0x18] sm:$0xf]
  %v94 = vld [vmem:[%s2 + $0x1c] sm:$0xf]
  %v95 = vld [vmem:[%s2 + $0x20] sm:$0xf]
  %v96 = vld [vmem:[%s2 + $0x24] sm:$0xf]
  %v97 = vld [vmem:[%s2 + $0x28] sm:$0xf]
  %v98 = vld [vmem:[%s2 + $0x2c] sm:$0xf]
  %v99 = vld [vmem:[%s2 + $0x30] sm:$0xf]
  %v100 = vld [vmem:[%s2 + $0x34] sm:$0xf]
  %v101 = vld [vmem:[%s2 + $0x38] sm:$0xf]
  %v102 = vld [vmem:[%s2 + $0x3c] sm:$0xf]
  %v135 = vunpack.c.l.b16 %v55
  %v136 = vunpack.c.l.b16 %v56
  %v137 = vunpack.c.l.b16 %v57
  %v138 = vunpack.c.l.b16 %v58
  %v139 = vunpack.c.l.b16 %v59
  %v140 = vunpack.c.l.b16 %v60
  %v141 = vunpack.c.l.b16 %v61
  %v142 = vunpack.c.l.b16 %v62
  %v143 = vunpack.c.l.b16 %v63
  %v144 = vunpack.c.l.b16 %v64
  %v145 = vunpack.c.l.b16 %v65
  %v146 = vunpack.c.l.b16 %v66
  %v147 = vunpack.c.l.b16 %v67
  %v148 = vunpack.c.l.b16 %v68
  %v149 = vunpack.c.l.b16 %v69
  %v150 = vunpack.c.l.b16 %v70
  %v151 = vunpack.c.l.b16 %v71
  %v152 = vunpack.c.l.b16 %v72
  %v153 = vunpack.c.l.b16 %v73
  %v154 = vunpack.c.l.b16 %v74
  %v155 = vunpack.c.l.b16 %v75
  %v156 = vunpack.c.l.b16 %v76
  %v157 = vunpack.c.l.b16 %v77
  %v158 = vunpack.c.l.b16 %v78
  %v159 = vunpack.c.l.b16 %v79
  %v160 = vunpack.c.l.b16 %v80
  %v161 = vunpack.c.l.b16 %v81
  %v162 = vunpack.c.l.b16 %v82
  %v163 = vunpack.c.l.b16 %v83
  %v164 = vunpack.c.l.b16 %v84
  %v165 = vunpack.c.l.b16 %v85
  %v166 = vunpack.c.l.b16 %v86
  %v167 = vpack.c.b16 %v136, %v135
  %v168 = vpack.c.b16 %v138, %v137
  %v169 = vpack.c.b16 %v140, %v139
  %v170 = vpack.c.b16 %v142, %v141
  %v171 = vpack.c.b16 %v144, %v143
  %v172 = vpack.c.b16 %v146, %v145
  %v173 = vpack.c.b16 %v148, %v147
  %v174 = vpack.c.b16 %v150, %v149
  %v175 = vpack.c.b16 %v152, %v151
  %v176 = vpack.c.b16 %v154, %v153
  %v177 = vpack.c.b16 %v156, %v155
  %v178 = vpack.c.b16 %v158, %v157
  %v179 = vpack.c.b16 %v160, %v159
  %v180 = vpack.c.b16 %v162, %v161
  %v181 = vpack.c.b16 %v164, %v163
  %v182 = vpack.c.b16 %v166, %v165
  %v215 = vunpack.c.l.b16 %v87
  %v216 = vunpack.c.l.b16 %v88
  %v217 = vunpack.c.l.b16 %v89
  %v218 = vunpack.c.l.b16 %v90
  %v219 = vunpack.c.l.b16 %v91
  %v220 = vunpack.c.l.b16 %v92
  %v221 = vunpack.c.l.b16 %v93
  %v222 = vunpack.c.l.b16 %v94
  %v223 = vunpack.c.l.b16 %v95
  %v224 = vunpack.c.l.b16 %v96
  %v225 = vunpack.c.l.b16 %v97
  %v226 = vunpack.c.l.b16 %v98
  %v227 = vunpack.c.l.b16 %v99
  %v228 = vunpack.c.l.b16 %v100
  %v229 = vunpack.c.l.b16 %v101
  %v230 = vunpack.c.l.b16 %v102
  %v231 = vpack.c.b16 %v216, %v215
  %v232 = vpack.c.b16 %v218, %v217
  %v233 = vpack.c.b16 %v220, %v219
  %v234 = vpack.c.b16 %v222, %v221
  %v235 = vpack.c.b16 %v224, %v223
  %v236 = vpack.c.b16 %v226, %v225
  %v237 = vpack.c.b16 %v228, %v227
  %v238 = vpack.c.b16 %v230, %v229
  %247 = vmatpush.bf16.msra.mxu0 %v238
  %248 = vmatpush.bf16.msra.mxu0 %v237
  %249 = vmatpush.bf16.msra.mxu0 %v236
  %250 = vmatpush.bf16.msra.mxu0 %v235
  %251 = vmatpush.bf16.msra.mxu0 %v234
  %252 = vmatpush.bf16.msra.mxu0 %v233
  %253 = vmatpush.bf16.msra.mxu0 %v232
  %254 = vmatpush.bf16.msra.mxu0 %v231
  %255 = vmatmul.bf16.gmra.mxu0 %v167
  %v256 = vpop.f32.mrf.mxu0
  %v257 = vadd.f32 0.0, %v256
  %v258 = vpop.f32.mrf.mxu0
  %v259 = vadd.f32 0.0, %v258
  %260 = vmatmul.bf16.gmra.mxu0 %v168
  %v261 = vpop.f32.mrf.mxu0
  %v262 = vadd.f32 0.0, %v261
  %v263 = vpop.f32.mrf.mxu0
  %v264 = vadd.f32 0.0, %v263
  %265 = vmatmul.bf16.gmra.mxu0 %v169
  %v266 = vpop.f32.mrf.mxu0
  %v267 = vadd.f32 0.0, %v266
  %v268 = vpop.f32.mrf.mxu0
  %v269 = vadd.f32 0.0, %v268
  %270 = vmatmul.bf16.gmra.mxu0 %v170
  %v271 = vpop.f32.mrf.mxu0
  %v272 = vadd.f32 0.0, %v271
  %v273 = vpop.f32.mrf.mxu0
  %v274 = vadd.f32 0.0, %v273
  %275 = vmatmul.bf16.gmra.mxu0 %v171
  %v276 = vpop.f32.mrf.mxu0
  %v277 = vadd.f32 0.0, %v276
  %v278 = vpop.f32.mrf.mxu0
  %v279 = vadd.f32 0.0, %v278
  %280 = vmatmul.bf16.gmra.mxu0 %v172
  %v281 = vpop.f32.mrf.mxu0
  %v282 = vadd.f32 0.0, %v281
  %v283 = vpop.f32.mrf.mxu0
  %v284 = vadd.f32 0.0, %v283
  %285 = vmatmul.bf16.gmra.mxu0 %v173
  %v286 = vpop.f32.mrf.mxu0
  %v287 = vadd.f32 0.0, %v286
  %v288 = vpop.f32.mrf.mxu0
  %v289 = vadd.f32 0.0, %v288
  %290 = vmatmul.bf16.gmra.mxu0 %v174
  %v291 = vpop.f32.mrf.mxu0
  %v292 = vadd.f32 0.0, %v291
  %v293 = vpop.f32.mrf.mxu0
  %v294 = vadd.f32 0.0, %v293
  %295 = vmatmul.bf16.gmra.mxu0 %v175
  %v296 = vpop.f32.mrf.mxu0
  %v297 = vadd.f32 0.0, %v296
  %v298 = vpop.f32.mrf.mxu0
  %v299 = vadd.f32 0.0, %v298
  %300 = vmatmul.bf16.gmra.mxu0 %v176
  %v301 = vpop.f32.mrf.mxu0
  %v302 = vadd.f32 0.0, %v301
  %v303 = vpop.f32.mrf.mxu0
  %v304 = vadd.f32 0.0, %v303
  %305 = vmatmul.bf16.gmra.mxu0 %v177
  %v306 = vpop.f32.mrf.mxu0
  %v307 = vadd.f32 0.0, %v306
  %v308 = vpop.f32.mrf.mxu0
  %v309 = vadd.f32 0.0, %v308
  %310 = vmatmul.bf16.gmra.mxu0 %v178
  %v311 = vpop.f32.mrf.mxu0
  %v312 = vadd.f32 0.0, %v311
  %v313 = vpop.f32.mrf.mxu0
  %v314 = vadd.f32 0.0, %v313
  %315 = vmatmul.bf16.gmra.mxu0 %v179
  %v316 = vpop.f32.mrf.mxu0
  %v317 = vadd.f32 0.0, %v316
  %v318 = vpop.f32.mrf.mxu0
  %v319 = vadd.f32 0.0, %v318
  %320 = vmatmul.bf16.gmra.mxu0 %v180
  %v321 = vpop.f32.mrf.mxu0
  %v322 = vadd.f32 0.0, %v321
  %v323 = vpop.f32.mrf.mxu0
  %v324 = vadd.f32 0.0, %v323
  %325 = vmatmul.bf16.gmra.mxu0 %v181
  %v326 = vpop.f32.mrf.mxu0
  %v327 = vadd.f32 0.0, %v326
  %v328 = vpop.f32.mrf.mxu0
  %v329 = vadd.f32 0.0, %v328
  %330 = vmatmul.bf16.gmra.mxu0 %v182
  %v331 = vpop.f32.mrf.mxu0
  %v332 = vadd.f32 0.0, %v331
  %v333 = vpop.f32.mrf.mxu0
  %v334 = vadd.f32 0.0, %v333
  %335 = vdwg.mxu0
  %v336 = vpack.c.bf16 %v259, %v257
  %v337 = vpack.c.bf16 %v264, %v262
  %v338 = vpack.c.bf16 %v269, %v267
  %v339 = vpack.c.bf16 %v274, %v272
  %v340 = vpack.c.bf16 %v279, %v277
  %v341 = vpack.c.bf16 %v284, %v282
  %v342 = vpack.c.bf16 %v289, %v287
  %v343 = vpack.c.bf16 %v294, %v292
  %v344 = vpack.c.bf16 %v299, %v297
  %v345 = vpack.c.bf16 %v304, %v302
  %v346 = vpack.c.bf16 %v309, %v307
  %v347 = vpack.c.bf16 %v314, %v312
  %v348 = vpack.c.bf16 %v319, %v317
  %v349 = vpack.c.bf16 %v324, %v322
  %v350 = vpack.c.bf16 %v329, %v327
  %v351 = vpack.c.bf16 %v334, %v332
  %v352 = vld [vmem:[#allocation2] sm:$0xff]
  %v353 = vld [vmem:[#allocation2 + $0x8] sm:$0xff]
  %v354 = vld [vmem:[#allocation2 + $0x10] sm:$0xff]
  %v355 = vld [vmem:[#allocation2 + $0x18] sm:$0xff]
  %v356 = vld [vmem:[#allocation2 + $0x20] sm:$0xff]
  %v357 = vld [vmem:[#allocation2 + $0x28] sm:$0xff]
  %v358 = vld [vmem:[#allocation2 + $0x30] sm:$0xff]
  %v359 = vld [vmem:[#allocation2 + $0x38] sm:$0xff]
  %v360 = vld [vmem:[#allocation2 + $0x40] sm:$0xff]
  %v361 = vld [vmem:[#allocation2 + $0x48] sm:$0xff]
  %v362 = vld [vmem:[#allocation2 + $0x50] sm:$0xff]
  %v363 = vld [vmem:[#allocation2 + $0x58] sm:$0xff]
  %v364 = vld [vmem:[#allocation2 + $0x60] sm:$0xff]
  %v365 = vld [vmem:[#allocation2 + $0x68] sm:$0xff]
  %v366 = vld [vmem:[#allocation2 + $0x70] sm:$0xff]
  %v367 = vld [vmem:[#allocation2 + $0x78] sm:$0xff]
  %v368 = vld [vmem:[#allocation2 + $0x80] sm:$0xff]
  %v369 = vld [vmem:[#allocation2 + $0x88] sm:$0xff]
  %v370 = vld [vmem:[#allocation2 + $0x90] sm:$0xff]
  %v371 = vld [vmem:[#allocation2 + $0x98] sm:$0xff]
  %v372 = vld [vmem:[#allocation2 + $0xa0] sm:$0xff]
  %v373 = vld [vmem:[#allocation2 + $0xa8] sm:$0xff]
  %v374 = vld [vmem:[#allocation2 + $0xb0] sm:$0xff]
  %v375 = vld [vmem:[#allocation2 + $0xb8] sm:$0xff]
  %v376 = vld [vmem:[#allocation2 + $0xc0] sm:$0xff]
  %v377 = vld [vmem:[#allocation2 + $0xc8] sm:$0xff]
  %v378 = vld [vmem:[#allocation2 + $0xd0] sm:$0xff]
  %v379 = vld [vmem:[#allocation2 + $0xd8] sm:$0xff]
  %v380 = vld [vmem:[#allocation2 + $0xe0] sm:$0xff]
  %v381 = vld [vmem:[#allocation2 + $0xe8] sm:$0xff]
  %v382 = vld [vmem:[#allocation2 + $0xf0] sm:$0xff]
  %v383 = vld [vmem:[#allocation2 + $0xf8] sm:$0xff]
  %v384 = vld [vmem:[%s0] sm:$0xff]
  %v385 = vld [vmem:[%s0 + $0x8] sm:$0xff]
  %v386 = vld [vmem:[%s0 + $0x10] sm:$0xff]
  %v387 = vld [vmem:[%s0 + $0x18] sm:$0xff]
  %v388 = vld [vmem:[%s0 + $0x20] sm:$0xff]
  %v389 = vld [vmem:[%s0 + $0x28] sm:$0xff]
  %v390 = vld [vmem:[%s0 + $0x30] sm:$0xff]
  %v391 = vld [vmem:[%s0 + $0x38] sm:$0xff]
  %v392 = vld [vmem:[%s0 + $0x40] sm:$0xff]
  %v393 = vld [vmem:[%s0 + $0x48] sm:$0xff]
  %v394 = vld [vmem:[%s0 + $0x50] sm:$0xff]
  %v395 = vld [vmem:[%s0 + $0x58] sm:$0xff]
  %v396 = vld [vmem:[%s0 + $0x60] sm:$0xff]
  %v397 = vld [vmem:[%s0 + $0x68] sm:$0xff]
  %v398 = vld [vmem:[%s0 + $0x70] sm:$0xff]
  %v399 = vld [vmem:[%s0 + $0x78] sm:$0xff]
  %v400 = vld [vmem:[%s0 + $0x80] sm:$0xff]
  %v401 = vld [vmem:[%s0 + $0x88] sm:$0xff]
  %v402 = vld [vmem:[%s0 + $0x90] sm:$0xff]
  %v403 = vld [vmem:[%s0 + $0x98] sm:$0xff]
  %v404 = vld [vmem:[%s0 + $0xa0] sm:$0xff]
  %v405 = vld [vmem:[%s0 + $0xa8] sm:$0xff]
  %v406 = vld [vmem:[%s0 + $0xb0] sm:$0xff]
  %v407 = vld [vmem:[%s0 + $0xb8] sm:$0xff]
  %v408 = vld [vmem:[%s0 + $0xc0] sm:$0xff]
  %v409 = vld [vmem:[%s0 + $0xc8] sm:$0xff]
  %v410 = vld [vmem:[%s0 + $0xd0] sm:$0xff]
  %v411 = vld [vmem:[%s0 + $0xd8] sm:$0xff]
  %v412 = vld [vmem:[%s0 + $0xe0] sm:$0xff]
  %v413 = vld [vmem:[%s0 + $0xe8] sm:$0xff]
  %v414 = vld [vmem:[%s0 + $0xf0] sm:$0xff]
  %v415 = vld [vmem:[%s0 + $0xf8] sm:$0xff]
  %v448 = vunpack.c.l.b16 %v384
  %v449 = vunpack.c.h.b16 %v384
  %v450 = vunpack.c.l.b16 %v385
  %v451 = vunpack.c.h.b16 %v385
  %v452 = vunpack.c.l.b16 %v386
  %v453 = vunpack.c.h.b16 %v386
  %v454 = vunpack.c.l.b16 %v387
  %v455 = vunpack.c.h.b16 %v387
  %v456 = vunpack.c.l.b16 %v388
  %v457 = vunpack.c.h.b16 %v388
  %v458 = vunpack.c.l.b16 %v389
  %v459 = vunpack.c.h.b16 %v389
  %v460 = vunpack.c.l.b16 %v390
  %v461 = vunpack.c.h.b16 %v390
  %v462 = vunpack.c.l.b16 %v391
  %v463 = vunpack.c.h.b16 %v391
  %v464 = vunpack.c.l.b16 %v392
  %v465 = vunpack.c.h.b16 %v392
  %v466 = vunpack.c.l.b16 %v393
  %v467 = vunpack.c.h.b16 %v393
  %v468 = vunpack.c.l.b16 %v394
  %v469 = vunpack.c.h.b16 %v394
  %v470 = vunpack.c.l.b16 %v395
  %v471 = vunpack.c.h.b16 %v395
  %v472 = vunpack.c.l.b16 %v396
  %v473 = vunpack.c.h.b16 %v396
  %v474 = vunpack.c.l.b16 %v397
  %v475 = vunpack.c.h.b16 %v397
  %v476 = vunpack.c.l.b16 %v398
  %v477 = vunpack.c.h.b16 %v398
  %v478 = vunpack.c.l.b16 %v399
  %v479 = vunpack.c.h.b16 %v399
  %v480 = vunpack.c.l.b16 %v400
  %v481 = vunpack.c.h.b16 %v400
  %v482 = vunpack.c.l.b16 %v401
  %v483 = vunpack.c.h.b16 %v401
  %v484 = vunpack.c.l.b16 %v402
  %v485 = vunpack.c.h.b16 %v402
  %v486 = vunpack.c.l.b16 %v403
  %v487 = vunpack.c.h.b16 %v403
  %v488 = vunpack.c.l.b16 %v404
  %v489 = vunpack.c.h.b16 %v404
  %v490 = vunpack.c.l.b16 %v405
  %v491 = vunpack.c.h.b16 %v405
  %v492 = vunpack.c.l.b16 %v406
  %v493 = vunpack.c.h.b16 %v406
  %v494 = vunpack.c.l.b16 %v407
  %v495 = vunpack.c.h.b16 %v407
  %v496 = vunpack.c.l.b16 %v408
  %v497 = vunpack.c.h.b16 %v408
  %v498 = vunpack.c.l.b16 %v409
  %v499 = vunpack.c.h.b16 %v409
  %v500 = vunpack.c.l.b16 %v410
  %v501 = vunpack.c.h.b16 %v410
  %v502 = vunpack.c.l.b16 %v411
  %v503 = vunpack.c.h.b16 %v411
  %v504 = vunpack.c.l.b16 %v412
  %v505 = vunpack.c.h.b16 %v412
  %v506 = vunpack.c.l.b16 %v413
  %v507 = vunpack.c.h.b16 %v413
  %v508 = vunpack.c.l.b16 %v414
  %v509 = vunpack.c.h.b16 %v414
  %v510 = vunpack.c.l.b16 %v415
  %v511 = vunpack.c.h.b16 %v415
  %v512 = vpack.c.b16 %v450, %v448
  %v513 = vpack.c.b16 %v451, %v449
  %v514 = vpack.c.b16 %v454, %v452
  %v515 = vpack.c.b16 %v455, %v453
  %v516 = vpack.c.b16 %v458, %v456
  %v517 = vpack.c.b16 %v459, %v457
  %v518 = vpack.c.b16 %v462, %v460
  %v519 = vpack.c.b16 %v463, %v461
  %v520 = vpack.c.b16 %v466, %v464
  %v521 = vpack.c.b16 %v467, %v465
  %v522 = vpack.c.b16 %v470, %v468
  %v523 = vpack.c.b16 %v471, %v469
  %v524 = vpack.c.b16 %v474, %v472
  %v525 = vpack.c.b16 %v475, %v473
  %v526 = vpack.c.b16 %v478, %v476
  %v527 = vpack.c.b16 %v479, %v477
  %v528 = vpack.c.b16 %v482, %v480
  %v529 = vpack.c.b16 %v483, %v481
  %v530 = vpack.c.b16 %v486, %v484
  %v531 = vpack.c.b16 %v487, %v485
  %v532 = vpack.c.b16 %v490, %v488
  %v533 = vpack.c.b16 %v491, %v489
  %v534 = vpack.c.b16 %v494, %v492
  %v535 = vpack.c.b16 %v495, %v493
  %v536 = vpack.c.b16 %v498, %v496
  %v537 = vpack.c.b16 %v499, %v497
  %v538 = vpack.c.b16 %v502, %v500
  %v539 = vpack.c.b16 %v503, %v501
  %v540 = vpack.c.b16 %v506, %v504
  %v541 = vpack.c.b16 %v507, %v505
  %v542 = vpack.c.b16 %v510, %v508
  %v543 = vpack.c.b16 %v511, %v509
  %576 = vmatpush.bf16.msra.mxu0 %v343
  %577 = vmatpush.bf16.msra.mxu0 %v342
  %578 = vmatpush.bf16.msra.mxu0 %v341
  %579 = vmatpush.bf16.msra.mxu0 %v340
  %580 = vmatpush.bf16.msra.mxu0 %v339
  %581 = vmatpush.bf16.msra.mxu0 %v338
  %582 = vmatpush.bf16.msra.mxu0 %v337
  %583 = vmatpush.bf16.msra.mxu0 %v336
  %584 = vmatmul.bf16.gmra.mxu0 %v512
  %v585 = vpop.f32.mrf.mxu0
  %v586 = vadd.f32 0.0, %v585
  %v587 = vpop.f32.mrf.mxu0
  %v588 = vadd.f32 0.0, %v587
  %589 = vmatmul.bf16.gmra.mxu0 %v514
  %v590 = vpop.f32.mrf.mxu0
  %v591 = vadd.f32 0.0, %v590
  %v592 = vpop.f32.mrf.mxu0
  %v593 = vadd.f32 0.0, %v592
  %594 = vmatmul.bf16.gmra.mxu0 %v516
  %v595 = vpop.f32.mrf.mxu0
  %v596 = vadd.f32 0.0, %v595
  %v597 = vpop.f32.mrf.mxu0
  %v598 = vadd.f32 0.0, %v597
  %599 = vmatmul.bf16.gmra.mxu0 %v518
  %v600 = vpop.f32.mrf.mxu0
  %v601 = vadd.f32 0.0, %v600
  %v602 = vpop.f32.mrf.mxu0
  %v603 = vadd.f32 0.0, %v602
  %604 = vmatmul.bf16.gmra.mxu0 %v520
  %v605 = vpop.f32.mrf.mxu0
  %v606 = vadd.f32 0.0, %v605
  %v607 = vpop.f32.mrf.mxu0
  %v608 = vadd.f32 0.0, %v607
  %609 = vmatmul.bf16.gmra.mxu0 %v522
  %v610 = vpop.f32.mrf.mxu0
  %v611 = vadd.f32 0.0, %v610
  %v612 = vpop.f32.mrf.mxu0
  %v613 = vadd.f32 0.0, %v612
  %614 = vmatmul.bf16.gmra.mxu0 %v524
  %v615 = vpop.f32.mrf.mxu0
  %v616 = vadd.f32 0.0, %v615
  %v617 = vpop.f32.mrf.mxu0
  %v618 = vadd.f32 0.0, %v617
  %619 = vmatmul.bf16.gmra.mxu0 %v526
  %v620 = vpop.f32.mrf.mxu0
  %v621 = vadd.f32 0.0, %v620
  %v622 = vpop.f32.mrf.mxu0
  %v623 = vadd.f32 0.0, %v622
  %624 = vmatmul.bf16.gmra.mxu0 %v528
  %v625 = vpop.f32.mrf.mxu0
  %v626 = vadd.f32 0.0, %v625
  %v627 = vpop.f32.mrf.mxu0
  %v628 = vadd.f32 0.0, %v627
  %629 = vmatmul.bf16.gmra.mxu0 %v530
  %v630 = vpop.f32.mrf.mxu0
  %v631 = vadd.f32 0.0, %v630
  %v632 = vpop.f32.mrf.mxu0
  %v633 = vadd.f32 0.0, %v632
  %634 = vmatmul.bf16.gmra.mxu0 %v532
  %v635 = vpop.f32.mrf.mxu0
  %v636 = vadd.f32 0.0, %v635
  %v637 = vpop.f32.mrf.mxu0
  %v638 = vadd.f32 0.0, %v637
  %639 = vmatmul.bf16.gmra.mxu0 %v534
  %v640 = vpop.f32.mrf.mxu0
  %v641 = vadd.f32 0.0, %v640
  %v642 = vpop.f32.mrf.mxu0
  %v643 = vadd.f32 0.0, %v642
  %644 = vmatmul.bf16.gmra.mxu0 %v536
  %v645 = vpop.f32.mrf.mxu0
  %v646 = vadd.f32 0.0, %v645
  %v647 = vpop.f32.mrf.mxu0
  %v648 = vadd.f32 0.0, %v647
  %649 = vmatmul.bf16.gmra.mxu0 %v538
  %v650 = vpop.f32.mrf.mxu0
  %v651 = vadd.f32 0.0, %v650
  %v652 = vpop.f32.mrf.mxu0
  %v653 = vadd.f32 0.0, %v652
  %654 = vmatmul.bf16.gmra.mxu0 %v540
  %v655 = vpop.f32.mrf.mxu0
  %v656 = vadd.f32 0.0, %v655
  %v657 = vpop.f32.mrf.mxu0
  %v658 = vadd.f32 0.0, %v657
  %659 = vmatmul.bf16.gmra.mxu0 %v542
  %v660 = vpop.f32.mrf.mxu0
  %v661 = vadd.f32 0.0, %v660
  %v662 = vpop.f32.mrf.mxu0
  %v663 = vadd.f32 0.0, %v662
  %664 = vdwg.mxu0
  %665 = vmatpush.bf16.msra.mxu0 %v351
  %666 = vmatpush.bf16.msra.mxu0 %v350
  %667 = vmatpush.bf16.msra.mxu0 %v349
  %668 = vmatpush.bf16.msra.mxu0 %v348
  %669 = vmatpush.bf16.msra.mxu0 %v347
  %670 = vmatpush.bf16.msra.mxu0 %v346
  %671 = vmatpush.bf16.msra.mxu0 %v345
  %672 = vmatpush.bf16.msra.mxu0 %v344
  %673 = vmatmul.bf16.gmra.mxu0 %v513
  %v674 = vpop.f32.mrf.mxu0
  %v675 = vadd.f32 %v586, %v674
  %v676 = vpop.f32.mrf.mxu0
  %v677 = vadd.f32 %v588, %v676
  %678 = vmatmul.bf16.gmra.mxu0 %v515
  %v679 = vpop.f32.mrf.mxu0
  %v680 = vadd.f32 %v591, %v679
  %v681 = vpop.f32.mrf.mxu0
  %v682 = vadd.f32 %v593, %v681
  %683 = vmatmul.bf16.gmra.mxu0 %v517
  %v684 = vpop.f32.mrf.mxu0
  %v685 = vadd.f32 %v596, %v684
  %v686 = vpop.f32.mrf.mxu0
  %v687 = vadd.f32 %v598, %v686
  %688 = vmatmul.bf16.gmra.mxu0 %v519
  %v689 = vpop.f32.mrf.mxu0
  %v690 = vadd.f32 %v601, %v689
  %v691 = vpop.f32.mrf.mxu0
  %v692 = vadd.f32 %v603, %v691
  %693 = vmatmul.bf16.gmra.mxu0 %v521
  %v694 = vpop.f32.mrf.mxu0
  %v695 = vadd.f32 %v606, %v694
  %v696 = vpop.f32.mrf.mxu0
  %v697 = vadd.f32 %v608, %v696
  %698 = vmatmul.bf16.gmra.mxu0 %v523
  %v699 = vpop.f32.mrf.mxu0
  %v700 = vadd.f32 %v611, %v699
  %v701 = vpop.f32.mrf.mxu0
  %v702 = vadd.f32 %v613, %v701
  %703 = vmatmul.bf16.gmra.mxu0 %v525
  %v704 = vpop.f32.mrf.mxu0
  %v705 = vadd.f32 %v616, %v704
  %v706 = vpop.f32.mrf.mxu0
  %v707 = vadd.f32 %v618, %v706
  %708 = vmatmul.bf16.gmra.mxu0 %v527
  %v709 = vpop.f32.mrf.mxu0
  %v710 = vadd.f32 %v621, %v709
  %v711 = vpop.f32.mrf.mxu0
  %v712 = vadd.f32 %v623, %v711
  %713 = vmatmul.bf16.gmra.mxu0 %v529
  %v714 = vpop.f32.mrf.mxu0
  %v715 = vadd.f32 %v626, %v714
  %v716 = vpop.f32.mrf.mxu0
  %v717 = vadd.f32 %v628, %v716
  %718 = vmatmul.bf16.gmra.mxu0 %v531
  %v719 = vpop.f32.mrf.mxu0
  %v720 = vadd.f32 %v631, %v719
  %v721 = vpop.f32.mrf.mxu0
  %v722 = vadd.f32 %v633, %v721
  %723 = vmatmul.bf16.gmra.mxu0 %v533
  %v724 = vpop.f32.mrf.mxu0
  %v725 = vadd.f32 %v636, %v724
  %v726 = vpop.f32.mrf.mxu0
  %v727 = vadd.f32 %v638, %v726
  %728 = vmatmul.bf16.gmra.mxu0 %v535
  %v729 = vpop.f32.mrf.mxu0
  %v730 = vadd.f32 %v641, %v729
  %v731 = vpop.f32.mrf.mxu0
  %v732 = vadd.f32 %v643, %v731
  %733 = vmatmul.bf16.gmra.mxu0 %v537
  %v734 = vpop.f32.mrf.mxu0
  %v735 = vadd.f32 %v646, %v734
  %v736 = vpop.f32.mrf.mxu0
  %v737 = vadd.f32 %v648, %v736
  %738 = vmatmul.bf16.gmra.mxu0 %v539
  %v739 = vpop.f32.mrf.mxu0
  %v740 = vadd.f32 %v651, %v739
  %v741 = vpop.f32.mrf.mxu0
  %v742 = vadd.f32 %v653, %v741
  %743 = vmatmul.bf16.gmra.mxu0 %v541
  %v744 = vpop.f32.mrf.mxu0
  %v745 = vadd.f32 %v656, %v744
  %v746 = vpop.f32.mrf.mxu0
  %v747 = vadd.f32 %v658, %v746
  %748 = vmatmul.bf16.gmra.mxu0 %v543
  %v749 = vpop.f32.mrf.mxu0
  %v750 = vadd.f32 %v661, %v749
  %v751 = vpop.f32.mrf.mxu0
  %v752 = vadd.f32 %v663, %v751
  %753 = vdwg.mxu0
  %v754 = vadd.f32 %v352, %v675
  %v755 = vadd.f32 %v353, %v677
  %v756 = vadd.f32 %v354, %v680
  %v757 = vadd.f32 %v355, %v682
  %v758 = vadd.f32 %v356, %v685
  %v759 = vadd.f32 %v357, %v687
  %v760 = vadd.f32 %v358, %v690
  %v761 = vadd.f32 %v359, %v692
  %v762 = vadd.f32 %v360, %v695
  %v763 = vadd.f32 %v361, %v697
  %v764 = vadd.f32 %v362, %v700
  %v765 = vadd.f32 %v363, %v702
  %v766 = vadd.f32 %v364, %v705
  %v767 = vadd.f32 %v365, %v707
  %v768 = vadd.f32 %v366, %v710
  %v769 = vadd.f32 %v367, %v712
  %v770 = vadd.f32 %v368, %v715
  %v771 = vadd.f32 %v369, %v717
  %v772 = vadd.f32 %v370, %v720
  %v773 = vadd.f32 %v371, %v722
  %v774 = vadd.f32 %v372, %v725
  %v775 = vadd.f32 %v373, %v727
  %v776 = vadd.f32 %v374, %v730
  %v777 = vadd.f32 %v375, %v732
  %v778 = vadd.f32 %v376, %v735
  %v779 = vadd.f32 %v377, %v737
  %v780 = vadd.f32 %v378, %v740
  %v781 = vadd.f32 %v379, %v742
  %v782 = vadd.f32 %v380, %v745
  %v783 = vadd.f32 %v381, %v747
  %v784 = vadd.f32 %v382, %v750
  %v785 = vadd.f32 %v383, %v752
  %786 = vst [vmem:[#allocation2] sm:$0xff] %v754
  %787 = vst [vmem:[#allocation2 + $0x8] sm:$0xff] %v755
  %788 = vst [vmem:[#allocation2 + $0x10] sm:$0xff] %v756
  %789 = vst [vmem:[#allocation2 + $0x18] sm:$0xff] %v757
  %790 = vst [vmem:[#allocation2 + $0x20] sm:$0xff] %v758
  %791 = vst [vmem:[#allocation2 + $0x28] sm:$0xff] %v759
  %792 = vst [vmem:[#allocation2 + $0x30] sm:$0xff] %v760
  %793 = vst [vmem:[#allocation2 + $0x38] sm:$0xff] %v761
  %794 = vst [vmem:[#allocation2 + $0x40] sm:$0xff] %v762
  %795 = vst [vmem:[#allocation2 + $0x48] sm:$0xff] %v763
  %796 = vst [vmem:[#allocation2 + $0x50] sm:$0xff] %v764
  %797 = vst [vmem:[#allocation2 + $0x58] sm:$0xff] %v765
  %798 = vst [vmem:[#allocation2 + $0x60] sm:$0xff] %v766
  %799 = vst [vmem:[#allocation2 + $0x68] sm:$0xff] %v767
  %800 = vst [vmem:[#allocation2 + $0x70] sm:$0xff] %v768
  %801 = vst [vmem:[#allocation2 + $0x78] sm:$0xff] %v769
  %802 = vst [vmem:[#allocation2 + $0x80] sm:$0xff] %v770
  %803 = vst [vmem:[#allocation2 + $0x88] sm:$0xff] %v771
  %804 = vst [vmem:[#allocation2 + $0x90] sm:$0xff] %v772
  %805 = vst [vmem:[#allocation2 + $0x98] sm:$0xff] %v773
  %806 = vst [vmem:[#allocation2 + $0xa0] sm:$0xff] %v774
  %807 = vst [vmem:[#allocation2 + $0xa8] sm:$0xff] %v775
  %808 = vst [vmem:[#allocation2 + $0xb0] sm:$0xff] %v776
  %809 = vst [vmem:[#allocation2 + $0xb8] sm:$0xff] %v777
  %810 = vst [vmem:[#allocation2 + $0xc0] sm:$0xff] %v778
  %811 = vst [vmem:[#allocation2 + $0xc8] sm:$0xff] %v779
  %812 = vst [vmem:[#allocation2 + $0xd0] sm:$0xff] %v780
  %813 = vst [vmem:[#allocation2 + $0xd8] sm:$0xff] %v781
  %814 = vst [vmem:[#allocation2 + $0xe0] sm:$0xff] %v782
  %815 = vst [vmem:[#allocation2 + $0xe8] sm:$0xff] %v783
  %816 = vst [vmem:[#allocation2 + $0xf0] sm:$0xff] %v784
  %817 = vst [vmem:[#allocation2 + $0xf8] sm:$0xff] %v785
  // Predicated region
  $region18: #{vgae_forward.3} parent=0 // pred_check
    %p818 = pneg %p14
  $region19: #{vgae_forward.3} parent=0 // pred_check_branch
    %820 = sbr.rel (%p818) target = $region21
  $region20: #{vgae_forward.3} parent=0 // pred_region
    %v821 = vld [vmem:[#allocation2] sm:$0xff]
    %v822 = vld [vmem:[#allocation2 + $0x8] sm:$0xff]
    %v823 = vld [vmem:[#allocation2 + $0x10] sm:$0xff]
    %v824 = vld [vmem:[#allocation2 + $0x18] sm:$0xff]
    %v825 = vld [vmem:[#allocation2 + $0x20] sm:$0xff]
    %v826 = vld [vmem:[#allocation2 + $0x28] sm:$0xff]
    %v827 = vld [vmem:[#allocation2 + $0x30] sm:$0xff]
    %v828 = vld [vmem:[#allocation2 + $0x38] sm:$0xff]
    %v829 = vld [vmem:[#allocation2 + $0x40] sm:$0xff]
    %v830 = vld [vmem:[#allocation2 + $0x48] sm:$0xff]
    %v831 = vld [vmem:[#allocation2 + $0x50] sm:$0xff]
    %v832 = vld [vmem:[#allocation2 + $0x58] sm:$0xff]
    %v833 = vld [vmem:[#allocation2 + $0x60] sm:$0xff]
    %v834 = vld [vmem:[#allocation2 + $0x68] sm:$0xff]
    %v835 = vld [vmem:[#allocation2 + $0x70] sm:$0xff]
    %v836 = vld [vmem:[#allocation2 + $0x78] sm:$0xff]
    %v837 = vld [vmem:[#allocation2 + $0x80] sm:$0xff]
    %v838 = vld [vmem:[#allocation2 + $0x88] sm:$0xff]
    %v839 = vld [vmem:[#allocation2 + $0x90] sm:$0xff]
    %v840 = vld [vmem:[#allocation2 + $0x98] sm:$0xff]
    %v841 = vld [vmem:[#allocation2 + $0xa0] sm:$0xff]
    %v842 = vld [vmem:[#allocation2 + $0xa8] sm:$0xff]
    %v843 = vld [vmem:[#allocation2 + $0xb0] sm:$0xff]
    %v844 = vld [vmem:[#allocation2 + $0xb8] sm:$0xff]
    %v845 = vld [vmem:[#allocation2 + $0xc0] sm:$0xff]
    %v846 = vld [vmem:[#allocation2 + $0xc8] sm:$0xff]
    %v847 = vld [vmem:[#allocation2 + $0xd0] sm:$0xff]
    %v848 = vld [vmem:[#allocation2 + $0xd8] sm:$0xff]
    %v849 = vld [vmem:[#allocation2 + $0xe0] sm:$0xff]
    %v850 = vld [vmem:[#allocation2 + $0xe8] sm:$0xff]
    %v851 = vld [vmem:[#allocation2 + $0xf0] sm:$0xff]
    %v852 = vld [vmem:[#allocation2 + $0xf8] sm:$0xff]
    %v853 = vmax.f32 %v821, 0.0
    %v854 = vmax.f32 %v822, 0.0
    %v855 = vmax.f32 %v823, 0.0
    %v856 = vmax.f32 %v824, 0.0
    %v857 = vmax.f32 %v825, 0.0
    %v858 = vmax.f32 %v826, 0.0
    %v859 = vmax.f32 %v827, 0.0
    %v860 = vmax.f32 %v828, 0.0
    %v861 = vmax.f32 %v829, 0.0
    %v862 = vmax.f32 %v830, 0.0
    %v863 = vmax.f32 %v831, 0.0
    %v864 = vmax.f32 %v832, 0.0
    %v865 = vmax.f32 %v833, 0.0
    %v866 = vmax.f32 %v834, 0.0
    %v867 = vmax.f32 %v835, 0.0
    %v868 = vmax.f32 %v836, 0.0
    %v869 = vmax.f32 %v837, 0.0
    %v870 = vmax.f32 %v838, 0.0
    %v871 = vmax.f32 %v839, 0.0
    %v872 = vmax.f32 %v840, 0.0
    %v873 = vmax.f32 %v841, 0.0
    %v874 = vmax.f32 %v842, 0.0
    %v875 = vmax.f32 %v843, 0.0
    %v876 = vmax.f32 %v844, 0.0
    %v877 = vmax.f32 %v845, 0.0
    %v878 = vmax.f32 %v846, 0.0
    %v879 = vmax.f32 %v847, 0.0
    %v880 = vmax.f32 %v848, 0.0
    %v881 = vmax.f32 %v849, 0.0
    %v882 = vmax.f32 %v850, 0.0
    %v883 = vmax.f32 %v851, 0.0
    %v884 = vmax.f32 %v852, 0.0
    %v885 = vpack.c.bf16 %v853, %v853
    %v886 = vpack.c.bf16 %v854, %v854
    %v887 = vpack.c.bf16 %v855, %v855
    %v888 = vpack.c.bf16 %v856, %v856
    %v889 = vpack.c.bf16 %v857, %v857
    %v890 = vpack.c.bf16 %v858, %v858
    %v891 = vpack.c.bf16 %v859, %v859
    %v892 = vpack.c.bf16 %v860, %v860
    %v893 = vpack.c.bf16 %v861, %v861
    %v894 = vpack.c.bf16 %v862, %v862
    %v895 = vpack.c.bf16 %v863, %v863
    %v896 = vpack.c.bf16 %v864, %v864
    %v897 = vpack.c.bf16 %v865, %v865
    %v898 = vpack.c.bf16 %v866, %v866
    %v899 = vpack.c.bf16 %v867, %v867
    %v900 = vpack.c.bf16 %v868, %v868
    %v901 = vpack.c.bf16 %v869, %v869
    %v902 = vpack.c.bf16 %v870, %v870
    %v903 = vpack.c.bf16 %v871, %v871
    %v904 = vpack.c.bf16 %v872, %v872
    %v905 = vpack.c.bf16 %v873, %v873
    %v906 = vpack.c.bf16 %v874, %v874
    %v907 = vpack.c.bf16 %v875, %v875
    %v908 = vpack.c.bf16 %v876, %v876
    %v909 = vpack.c.bf16 %v877, %v877
    %v910 = vpack.c.bf16 %v878, %v878
    %v911 = vpack.c.bf16 %v879, %v879
    %v912 = vpack.c.bf16 %v880, %v880
    %v913 = vpack.c.bf16 %v881, %v881
    %v914 = vpack.c.bf16 %v882, %v882
    %v915 = vpack.c.bf16 %v883, %v883
    %v916 = vpack.c.bf16 %v884, %v884
    %917 = vst [vmem:[%s3] sm:$0xf] %v885
    %918 = vst [vmem:[%s3 + $0x4] sm:$0xf] %v886
    %919 = vst [vmem:[%s3 + $0x8] sm:$0xf] %v887
    %920 = vst [vmem:[%s3 + $0xc] sm:$0xf] %v888
    %921 = vst [vmem:[%s3 + $0x10] sm:$0xf] %v889
    %922 = vst [vmem:[%s3 + $0x14] sm:$0xf] %v890
    %923 = vst [vmem:[%s3 + $0x18] sm:$0xf] %v891
    %924 = vst [vmem:[%s3 + $0x1c] sm:$0xf] %v892
    %925 = vst [vmem:[%s3 + $0x20] sm:$0xf] %v893
    %926 = vst [vmem:[%s3 + $0x24] sm:$0xf] %v894
    %927 = vst [vmem:[%s3 + $0x28] sm:$0xf] %v895
    %928 = vst [vmem:[%s3 + $0x2c] sm:$0xf] %v896
    %929 = vst [vmem:[%s3 + $0x30] sm:$0xf] %v897
    %930 = vst [vmem:[%s3 + $0x34] sm:$0xf] %v898
    %931 = vst [vmem:[%s3 + $0x38] sm:$0xf] %v899
    %932 = vst [vmem:[%s3 + $0x3c] sm:$0xf] %v900
    %933 = vst [vmem:[%s3 + $0x40] sm:$0xf] %v901
    %934 = vst [vmem:[%s3 + $0x44] sm:$0xf] %v902
    %935 = vst [vmem:[%s3 + $0x48] sm:$0xf] %v903
    %936 = vst [vmem:[%s3 + $0x4c] sm:$0xf] %v904
    %937 = vst [vmem:[%s3 + $0x50] sm:$0xf] %v905
    %938 = vst [vmem:[%s3 + $0x54] sm:$0xf] %v906
    %939 = vst [vmem:[%s3 + $0x58] sm:$0xf] %v907
    %940 = vst [vmem:[%s3 + $0x5c] sm:$0xf] %v908
    %941 = vst [vmem:[%s3 + $0x60] sm:$0xf] %v909
    %942 = vst [vmem:[%s3 + $0x64] sm:$0xf] %v910
    %943 = vst [vmem:[%s3 + $0x68] sm:$0xf] %v911
    %944 = vst [vmem:[%s3 + $0x6c] sm:$0xf] %v912
    %945 = vst [vmem:[%s3 + $0x70] sm:$0xf] %v913
    %946 = vst [vmem:[%s3 + $0x74] sm:$0xf] %v914
    %947 = vst [vmem:[%s3 + $0x78] sm:$0xf] %v915
    %948 = vst [vmem:[%s3 + $0x7c] sm:$0xf] %v916
  $region21: #{vgae_forward.3} parent=0 // pred_fallthru
    _
  // Predicated region
  $region22: #{vgae_forward.3} parent=0 // pred_check
    _
  $region23: #{vgae_forward.3} parent=0 // pred_check_branch
    %950 = sbr.rel (0) target = $region25
  $region24: #{vgae_forward.3} parent=0 // pred_region
    _
  $region25: #{vgae_forward.3} parent=0 // pred_fallthru
    _
  // Predicated region
  $region26: #{vgae_forward.3} parent=0 // pred_check
    _
  $region27: #{vgae_forward.3} parent=0 // pred_check_branch
    %952 = sbr.rel (0) target = $region29
  $region28: #{vgae_forward.3} parent=0 // pred_region
    _
  $region29: #{vgae_forward.3} parent=0 // pred_fallthru
    _

// kernel: vgae_forward.4
$region0: #{vgae_forward.4}
  #allocation0 [shape = 'u32[]', space=smem, size = 0x4, offset = 0x4, fixed_abs, tag = 'smem constant byte address 0x4 - core index']
  #allocation1 [shape = 'u32[72,128]{1,0:T(1,128)}', space=vmem, size = 0x9000, scoped, tag = 'internal scratch']
  #allocation2 [shape = 'f32[256,256]{1,0:T(8,128)}', space=vmem, size = 0x40000, scoped, tag = 'scratch operand']
  %s0 = inlined_call_operand.vmem [shape: bf16[256,256], index: 0, kind: input, shape index: {}]
  %s1 = inlined_call_operand.vmem [shape: bf16[256,128], index: 1, kind: input, shape index: {}]
  %s2 = inlined_call_operand.vmem [shape: bf16[128,256], index: 2, kind: input, shape index: {}]
  %s3 = inlined_call_operand.vmem [shape: f32[256,128], index: 3, kind: input, shape index: {}]
  %s4 = inlined_call_operand.vmem [shape: bf16[256,128], index: 4, kind: output, shape index: {}]
  %s5 = sld [smem:[#allocation0]]
  $region34: #{vgae_forward.4} parent=0
    _
  %s7 = ssub.s32 1, %s5
  %s8 = scalar_select 0, %s7, %s5
  // Predicated region
  $region2: #{vgae_forward.4} parent=0 // pred_check
    _
  $region3: #{vgae_forward.4} parent=0 // pred_check_branch
    %10 = sbr.rel (0) target = $region5
  $region4: #{vgae_forward.4} parent=0 // pred_region
    _
  $region5: #{vgae_forward.4} parent=0 // pred_fallthru
    _
  // Predicated region
  $region6: #{vgae_forward.4} parent=0 // pred_check
    _
  $region7: #{vgae_forward.4} parent=0 // pred_check_branch
    %12 = sbr.rel (0) target = $region9
  $region8: #{vgae_forward.4} parent=0 // pred_region
    _
  $region9: #{vgae_forward.4} parent=0 // pred_fallthru
    _
  // Predicated region
  $region10: #{vgae_forward.4} parent=0 // pred_check
    _
  $region11: #{vgae_forward.4} parent=0 // pred_check_branch
    %14 = sbr.rel (0) target = $region13
  $region12: #{vgae_forward.4} parent=0 // pred_region
    _
  $region13: #{vgae_forward.4} parent=0 // pred_fallthru
    _
  // Predicated region
  $region14: #{vgae_forward.4} parent=0 // pred_check
    _
  $region15: #{vgae_forward.4} parent=0 // pred_check_branch
    %16 = sbr.rel (0) target = $region17
  $region16: #{vgae_forward.4} parent=0 // pred_region
    _
  $region17: #{vgae_forward.4} parent=0 // pred_fallthru
    _
  %p17 = scmp.eq.s32.totalorder 0, 0
  // Predicated region
  $region18: #{vgae_forward.4} parent=0 // pred_check
    %p18 = pneg %p17
  $region19: #{vgae_forward.4} parent=0 // pred_check_branch
    %20 = sbr.rel (%p18) target = $region21
  $region20: #{vgae_forward.4} parent=0 // pred_region
    %21 = vst [vmem:[#allocation2] sm:$0xff] 0.0
    %22 = vst [vmem:[#allocation2 + $0x8] sm:$0xff] 0.0
    %23 = vst [vmem:[#allocation2 + $0x10] sm:$0xff] 0.0
    %24 = vst [vmem:[#allocation2 + $0x18] sm:$0xff] 0.0
    %25 = vst [vmem:[#allocation2 + $0x20] sm:$0xff] 0.0
    %26 = vst [vmem:[#allocation2 + $0x28] sm:$0xff] 0.0
    %27 = vst [vmem:[#allocation2 + $0x30] sm:$0xff] 0.0
    %28 = vst [vmem:[#allocation2 + $0x38] sm:$0xff] 0.0
    %29 = vst [vmem:[#allocation2 + $0x40] sm:$0xff] 0.0
    %30 = vst [vmem:[#allocation2 + $0x48] sm:$0xff] 0.0
    %31 = vst [vmem:[#allocation2 + $0x50] sm:$0xff] 0.0
    %32 = vst [vmem:[#allocation2 + $0x58] sm:$0xff] 0.0
    %33 = vst [vmem:[#allocation2 + $0x60] sm:$0xff] 0.0
    %34 = vst [vmem:[#allocation2 + $0x68] sm:$0xff] 0.0
    %35 = vst [vmem:[#allocation2 + $0x70] sm:$0xff] 0.0
    %36 = vst [vmem:[#allocation2 + $0x78] sm:$0xff] 0.0
    %37 = vst [vmem:[#allocation2 + $0x80] sm:$0xff] 0.0
    %38 = vst [vmem:[#allocation2 + $0x88] sm:$0xff] 0.0
    %39 = vst [vmem:[#allocation2 + $0x90] sm:$0xff] 0.0
    %40 = vst [vmem:[#allocation2 + $0x98] sm:$0xff] 0.0
    %41 = vst [vmem:[#allocation2 + $0xa0] sm:$0xff] 0.0
    %42 = vst [vmem:[#allocation2 + $0xa8] sm:$0xff] 0.0
    %43 = vst [vmem:[#allocation2 + $0xb0] sm:$0xff] 0.0
    %44 = vst [vmem:[#allocation2 + $0xb8] sm:$0xff] 0.0
    %45 = vst [vmem:[#allocation2 + $0xc0] sm:$0xff] 0.0
    %46 = vst [vmem:[#allocation2 + $0xc8] sm:$0xff] 0.0
    %47 = vst [vmem:[#allocation2 + $0xd0] sm:$0xff] 0.0
    %48 = vst [vmem:[#allocation2 + $0xd8] sm:$0xff] 0.0
    %49 = vst [vmem:[#allocation2 + $0xe0] sm:$0xff] 0.0
    %50 = vst [vmem:[#allocation2 + $0xe8] sm:$0xff] 0.0
    %51 = vst [vmem:[#allocation2 + $0xf0] sm:$0xff] 0.0
    %52 = vst [vmem:[#allocation2 + $0xf8] sm:$0xff] 0.0
    %53 = vst [vmem:[#allocation2 + $0x100] sm:$0xff] 0.0
    %54 = vst [vmem:[#allocation2 + $0x108] sm:$0xff] 0.0
    %55 = vst [vmem:[#allocation2 + $0x110] sm:$0xff] 0.0
    %56 = vst [vmem:[#allocation2 + $0x118] sm:$0xff] 0.0
    %57 = vst [vmem:[#allocation2 + $0x120] sm:$0xff] 0.0
    %58 = vst [vmem:[#allocation2 + $0x128] sm:$0xff] 0.0
    %59 = vst [vmem:[#allocation2 + $0x130] sm:$0xff] 0.0
    %60 = vst [vmem:[#allocation2 + $0x138] sm:$0xff] 0.0
    %61 = vst [vmem:[#allocation2 + $0x140] sm:$0xff] 0.0
    %62 = vst [vmem:[#allocation2 + $0x148] sm:$0xff] 0.0
    %63 = vst [vmem:[#allocation2 + $0x150] sm:$0xff] 0.0
    %64 = vst [vmem:[#allocation2 + $0x158] sm:$0xff] 0.0
    %65 = vst [vmem:[#allocation2 + $0x160] sm:$0xff] 0.0
    %66 = vst [vmem:[#allocation2 + $0x168] sm:$0xff] 0.0
    %67 = vst [vmem:[#allocation2 + $0x170] sm:$0xff] 0.0
    %68 = vst [vmem:[#allocation2 + $0x178] sm:$0xff] 0.0
    %69 = vst [vmem:[#allocation2 + $0x180] sm:$0xff] 0.0
    %70 = vst [vmem:[#allocation2 + $0x188] sm:$0xff] 0.0
    %71 = vst [vmem:[#allocation2 + $0x190] sm:$0xff] 0.0
    %72 = vst [vmem:[#allocation2 + $0x198] sm:$0xff] 0.0
    %73 = vst [vmem:[#allocation2 + $0x1a0] sm:$0xff] 0.0
    %74 = vst [vmem:[#allocation2 + $0x1a8] sm:$0xff] 0.0
    %75 = vst [vmem:[#allocation2 + $0x1b0] sm:$0xff] 0.0
    %76 = vst [vmem:[#allocation2 + $0x1b8] sm:$0xff] 0.0
    %77 = vst [vmem:[#allocation2 + $0x1c0] sm:$0xff] 0.0
    %78 = vst [vmem:[#allocation2 + $0x1c8] sm:$0xff] 0.0
    %79 = vst [vmem:[#allocation2 + $0x1d0] sm:$0xff] 0.0
    %80 = vst [vmem:[#allocation2 + $0x1d8] sm:$0xff] 0.0
    %81 = vst [vmem:[#allocation2 + $0x1e0] sm:$0xff] 0.0
    %82 = vst [vmem:[#allocation2 + $0x1e8] sm:$0xff] 0.0
    %83 = vst [vmem:[#allocation2 + $0x1f0] sm:$0xff] 0.0
    %84 = vst [vmem:[#allocation2 + $0x1f8] sm:$0xff] 0.0
  $region21: #{vgae_forward.4} parent=0 // pred_fallthru
    _
  %s85 = smul.u32 0, 256
  %s86 = sshra.s32 %s85, 3
  %s87 = sand.u32 %s85, 7
  %s88 = smul.addr %s86, 4
  %s89 = scalar_lea.vmem %s1, %s88
  %v90 = vld [vmem:[%s89] sm:$0xf]
  %v91 = vld [vmem:[%s89 + $0x4] sm:$0xf]
  %v92 = vld [vmem:[%s89 + $0x8] sm:$0xf]
  %v93 = vld [vmem:[%s89 + $0xc] sm:$0xf]
  %v94 = vld [vmem:[%s89 + $0x10] sm:$0xf]
  %v95 = vld [vmem:[%s89 + $0x14] sm:$0xf]
  %v96 = vld [vmem:[%s89 + $0x18] sm:$0xf]
  %v97 = vld [vmem:[%s89 + $0x1c] sm:$0xf]
  %v98 = vld [vmem:[%s89 + $0x20] sm:$0xf]
  %v99 = vld [vmem:[%s89 + $0x24] sm:$0xf]
  %v100 = vld [vmem:[%s89 + $0x28] sm:$0xf]
  %v101 = vld [vmem:[%s89 + $0x2c] sm:$0xf]
  %v102 = vld [vmem:[%s89 + $0x30] sm:$0xf]
  %v103 = vld [vmem:[%s89 + $0x34] sm:$0xf]
  %v104 = vld [vmem:[%s89 + $0x38] sm:$0xf]
  %v105 = vld [vmem:[%s89 + $0x3c] sm:$0xf]
  %v106 = vld [vmem:[%s89 + $0x40] sm:$0xf]
  %v107 = vld [vmem:[%s89 + $0x44] sm:$0xf]
  %v108 = vld [vmem:[%s89 + $0x48] sm:$0xf]
  %v109 = vld [vmem:[%s89 + $0x4c] sm:$0xf]
  %v110 = vld [vmem:[%s89 + $0x50] sm:$0xf]
  %v111 = vld [vmem:[%s89 + $0x54] sm:$0xf]
  %v112 = vld [vmem:[%s89 + $0x58] sm:$0xf]
  %v113 = vld [vmem:[%s89 + $0x5c] sm:$0xf]
  %v114 = vld [vmem:[%s89 + $0x60] sm:$0xf]
  %v115 = vld [vmem:[%s89 + $0x64] sm:$0xf]
  %v116 = vld [vmem:[%s89 + $0x68] sm:$0xf]
  %v117 = vld [vmem:[%s89 + $0x6c] sm:$0xf]
  %v118 = vld [vmem:[%s89 + $0x70] sm:$0xf]
  %v119 = vld [vmem:[%s89 + $0x74] sm:$0xf]
  %v120 = vld [vmem:[%s89 + $0x78] sm:$0xf]
  %v121 = vld [vmem:[%s89 + $0x7c] sm:$0xf]
  %v122 = vld [vmem:[%s2] sm:$0xff]
  %v123 = vld [vmem:[%s2 + $0x8] sm:$0xff]
  %v124 = vld [vmem:[%s2 + $0x10] sm:$0xff]
  %v125 = vld [vmem:[%s2 + $0x18] sm:$0xff]
  %v126 = vld [vmem:[%s2 + $0x20] sm:$0xff]
  %v127 = vld [vmem:[%s2 + $0x28] sm:$0xff]
  %v128 = vld [vmem:[%s2 + $0x30] sm:$0xff]
  %v129 = vld [vmem:[%s2 + $0x38] sm:$0xff]
  %v130 = vld [vmem:[%s2 + $0x40] sm:$0xff]
  %v131 = vld [vmem:[%s2 + $0x48] sm:$0xff]
  %v132 = vld [vmem:[%s2 + $0x50] sm:$0xff]
  %v133 = vld [vmem:[%s2 + $0x58] sm:$0xff]
  %v134 = vld [vmem:[%s2 + $0x60] sm:$0xff]
  %v135 = vld [vmem:[%s2 + $0x68] sm:$0xff]
  %v136 = vld [vmem:[%s2 + $0x70] sm:$0xff]
  %v137 = vld [vmem:[%s2 + $0x78] sm:$0xff]
  %v170 = vunpack.c.l.b16 %v90
  %v171 = vunpack.c.l.b16 %v91
  %v172 = vunpack.c.l.b16 %v92
  %v173 = vunpack.c.l.b16 %v93
  %v174 = vunpack.c.l.b16 %v94
  %v175 = vunpack.c.l.b16 %v95
  %v176 = vunpack.c.l.b16 %v96
  %v177 = vunpack.c.l.b16 %v97
  %v178 = vunpack.c.l.b16 %v98
  %v179 = vunpack.c.l.b16 %v99
  %v180 = vunpack.c.l.b16 %v100
  %v181 = vunpack.c.l.b16 %v101
  %v182 = vunpack.c.l.b16 %v102
  %v183 = vunpack.c.l.b16 %v103
  %v184 = vunpack.c.l.b16 %v104
  %v185 = vunpack.c.l.b16 %v105
  %v186 = vunpack.c.l.b16 %v106
  %v187 = vunpack.c.l.b16 %v107
  %v188 = vunpack.c.l.b16 %v108
  %v189 = vunpack.c.l.b16 %v109
  %v190 = vunpack.c.l.b16 %v110
  %v191 = vunpack.c.l.b16 %v111
  %v192 = vunpack.c.l.b16 %v112
  %v193 = vunpack.c.l.b16 %v113
  %v194 = vunpack.c.l.b16 %v114
  %v195 = vunpack.c.l.b16 %v115
  %v196 = vunpack.c.l.b16 %v116
  %v197 = vunpack.c.l.b16 %v117
  %v198 = vunpack.c.l.b16 %v118
  %v199 = vunpack.c.l.b16 %v119
  %v200 = vunpack.c.l.b16 %v120
  %v201 = vunpack.c.l.b16 %v121
  %v202 = vpack.c.b16 %v171, %v170
  %v203 = vpack.c.b16 %v173, %v172
  %v204 = vpack.c.b16 %v175, %v174
  %v205 = vpack.c.b16 %v177, %v176
  %v206 = vpack.c.b16 %v179, %v178
  %v207 = vpack.c.b16 %v181, %v180
  %v208 = vpack.c.b16 %v183, %v182
  %v209 = vpack.c.b16 %v185, %v184
  %v210 = vpack.c.b16 %v187, %v186
  %v211 = vpack.c.b16 %v189, %v188
  %v212 = vpack.c.b16 %v191, %v190
  %v213 = vpack.c.b16 %v193, %v192
  %v214 = vpack.c.b16 %v195, %v194
  %v215 = vpack.c.b16 %v197, %v196
  %v216 = vpack.c.b16 %v199, %v198
  %v217 = vpack.c.b16 %v201, %v200
  %v250 = vunpack.c.l.b16 %v122
  %v251 = vunpack.c.h.b16 %v122
  %v252 = vunpack.c.l.b16 %v123
  %v253 = vunpack.c.h.b16 %v123
  %v254 = vunpack.c.l.b16 %v124
  %v255 = vunpack.c.h.b16 %v124
  %v256 = vunpack.c.l.b16 %v125
  %v257 = vunpack.c.h.b16 %v125
  %v258 = vunpack.c.l.b16 %v126
  %v259 = vunpack.c.h.b16 %v126
  %v260 = vunpack.c.l.b16 %v127
  %v261 = vunpack.c.h.b16 %v127
  %v262 = vunpack.c.l.b16 %v128
  %v263 = vunpack.c.h.b16 %v128
  %v264 = vunpack.c.l.b16 %v129
  %v265 = vunpack.c.h.b16 %v129
  %v266 = vunpack.c.l.b16 %v130
  %v267 = vunpack.c.h.b16 %v130
  %v268 = vunpack.c.l.b16 %v131
  %v269 = vunpack.c.h.b16 %v131
  %v270 = vunpack.c.l.b16 %v132
  %v271 = vunpack.c.h.b16 %v132
  %v272 = vunpack.c.l.b16 %v133
  %v273 = vunpack.c.h.b16 %v133
  %v274 = vunpack.c.l.b16 %v134
  %v275 = vunpack.c.h.b16 %v134
  %v276 = vunpack.c.l.b16 %v135
  %v277 = vunpack.c.h.b16 %v135
  %v278 = vunpack.c.l.b16 %v136
  %v279 = vunpack.c.h.b16 %v136
  %v280 = vunpack.c.l.b16 %v137
  %v281 = vunpack.c.h.b16 %v137
  %v282 = vpack.c.b16 %v252, %v250
  %v283 = vpack.c.b16 %v253, %v251
  %v284 = vpack.c.b16 %v256, %v254
  %v285 = vpack.c.b16 %v257, %v255
  %v286 = vpack.c.b16 %v260, %v258
  %v287 = vpack.c.b16 %v261, %v259
  %v288 = vpack.c.b16 %v264, %v262
  %v289 = vpack.c.b16 %v265, %v263
  %v290 = vpack.c.b16 %v268, %v266
  %v291 = vpack.c.b16 %v269, %v267
  %v292 = vpack.c.b16 %v272, %v270
  %v293 = vpack.c.b16 %v273, %v271
  %v294 = vpack.c.b16 %v276, %v274
  %v295 = vpack.c.b16 %v277, %v275
  %v296 = vpack.c.b16 %v280, %v278
  %v297 = vpack.c.b16 %v281, %v279
  %314 = vmatpush.bf16.msra.mxu0 %v296
  %315 = vmatpush.bf16.msra.mxu0 %v294
  %316 = vmatpush.bf16.msra.mxu0 %v292
  %317 = vmatpush.bf16.msra.mxu0 %v290
  %318 = vmatpush.bf16.msra.mxu0 %v288
  %319 = vmatpush.bf16.msra.mxu0 %v286
  %320 = vmatpush.bf16.msra.mxu0 %v284
  %321 = vmatpush.bf16.msra.mxu0 %v282
  %322 = vmatmul.bf16.gmra.mxu0 %v202
  %v323 = vpop.f32.mrf.mxu0
  %v324 = vadd.f32 0.0, %v323
  %v325 = vpop.f32.mrf.mxu0
  %v326 = vadd.f32 0.0, %v325
  %327 = vmatmul.bf16.gmra.mxu0 %v203
  %v328 = vpop.f32.mrf.mxu0
  %v329 = vadd.f32 0.0, %v328
  %v330 = vpop.f32.mrf.mxu0
  %v331 = vadd.f32 0.0, %v330
  %332 = vmatmul.bf16.gmra.mxu0 %v204
  %v333 = vpop.f32.mrf.mxu0
  %v334 = vadd.f32 0.0, %v333
  %v335 = vpop.f32.mrf.mxu0
  %v336 = vadd.f32 0.0, %v335
  %337 = vmatmul.bf16.gmra.mxu0 %v205
  %v338 = vpop.f32.mrf.mxu0
  %v339 = vadd.f32 0.0, %v338
  %v340 = vpop.f32.mrf.mxu0
  %v341 = vadd.f32 0.0, %v340
  %342 = vmatmul.bf16.gmra.mxu0 %v206
  %v343 = vpop.f32.mrf.mxu0
  %v344 = vadd.f32 0.0, %v343
  %v345 = vpop.f32.mrf.mxu0
  %v346 = vadd.f32 0.0, %v345
  %347 = vmatmul.bf16.gmra.mxu0 %v207
  %v348 = vpop.f32.mrf.mxu0
  %v349 = vadd.f32 0.0, %v348
  %v350 = vpop.f32.mrf.mxu0
  %v351 = vadd.f32 0.0, %v350
  %352 = vmatmul.bf16.gmra.mxu0 %v208
  %v353 = vpop.f32.mrf.mxu0
  %v354 = vadd.f32 0.0, %v353
  %v355 = vpop.f32.mrf.mxu0
  %v356 = vadd.f32 0.0, %v355
  %357 = vmatmul.bf16.gmra.mxu0 %v209
  %v358 = vpop.f32.mrf.mxu0
  %v359 = vadd.f32 0.0, %v358
  %v360 = vpop.f32.mrf.mxu0
  %v361 = vadd.f32 0.0, %v360
  %362 = vmatmul.bf16.gmra.mxu0 %v210
  %v363 = vpop.f32.mrf.mxu0
  %v364 = vadd.f32 0.0, %v363
  %v365 = vpop.f32.mrf.mxu0
  %v366 = vadd.f32 0.0, %v365
  %367 = vmatmul.bf16.gmra.mxu0 %v211
  %v368 = vpop.f32.mrf.mxu0
  %v369 = vadd.f32 0.0, %v368
  %v370 = vpop.f32.mrf.mxu0
  %v371 = vadd.f32 0.0, %v370
  %372 = vmatmul.bf16.gmra.mxu0 %v212
  %v373 = vpop.f32.mrf.mxu0
  %v374 = vadd.f32 0.0, %v373
  %v375 = vpop.f32.mrf.mxu0
  %v376 = vadd.f32 0.0, %v375
  %377 = vmatmul.bf16.gmra.mxu0 %v213
  %v378 = vpop.f32.mrf.mxu0
  %v379 = vadd.f32 0.0, %v378
  %v380 = vpop.f32.mrf.mxu0
  %v381 = vadd.f32 0.0, %v380
  %382 = vmatmul.bf16.gmra.mxu0 %v214
  %v383 = vpop.f32.mrf.mxu0
  %v384 = vadd.f32 0.0, %v383
  %v385 = vpop.f32.mrf.mxu0
  %v386 = vadd.f32 0.0, %v385
  %387 = vmatmul.bf16.gmra.mxu0 %v215
  %v388 = vpop.f32.mrf.mxu0
  %v389 = vadd.f32 0.0, %v388
  %v390 = vpop.f32.mrf.mxu0
  %v391 = vadd.f32 0.0, %v390
  %392 = vmatmul.bf16.gmra.mxu0 %v216
  %v393 = vpop.f32.mrf.mxu0
  %v394 = vadd.f32 0.0, %v393
  %v395 = vpop.f32.mrf.mxu0
  %v396 = vadd.f32 0.0, %v395
  %397 = vmatmul.bf16.gmra.mxu0 %v217
  %v398 = vpop.f32.mrf.mxu0
  %v399 = vadd.f32 0.0, %v398
  %v400 = vpop.f32.mrf.mxu0
  %v401 = vadd.f32 0.0, %v400
  %402 = vdwg.mxu0
  %403 = vmatpush.bf16.msra.mxu0 %v297
  %404 = vmatpush.bf16.msra.mxu0 %v295
  %405 = vmatpush.bf16.msra.mxu0 %v293
  %406 = vmatpush.bf16.msra.mxu0 %v291
  %407 = vmatpush.bf16.msra.mxu0 %v289
  %408 = vmatpush.bf16.msra.mxu0 %v287
  %409 = vmatpush.bf16.msra.mxu0 %v285
  %410 = vmatpush.bf16.msra.mxu0 %v283
  %411 = vmatmul.bf16.gmra.mxu0 %v202
  %v412 = vpop.f32.mrf.mxu0
  %v413 = vadd.f32 0.0, %v412
  %v414 = vpop.f32.mrf.mxu0
  %v415 = vadd.f32 0.0, %v414
  %416 = vmatmul.bf16.gmra.mxu0 %v203
  %v417 = vpop.f32.mrf.mxu0
  %v418 = vadd.f32 0.0, %v417
  %v419 = vpop.f32.mrf.mxu0
  %v420 = vadd.f32 0.0, %v419
  %421 = vmatmul.bf16.gmra.mxu0 %v204
  %v422 = vpop.f32.mrf.mxu0
  %v423 = vadd.f32 0.0, %v422
  %v424 = vpop.f32.mrf.mxu0
  %v425 = vadd.f32 0.0, %v424
  %426 = vmatmul.bf16.gmra.mxu0 %v205
  %v427 = vpop.f32.mrf.mxu0
  %v428 = vadd.f32 0.0, %v427
  %v429 = vpop.f32.mrf.mxu0
  %v430 = vadd.f32 0.0, %v429
  %431 = vmatmul.bf16.gmra.mxu0 %v206
  %v432 = vpop.f32.mrf.mxu0
  %v433 = vadd.f32 0.0, %v432
  %v434 = vpop.f32.mrf.mxu0
  %v435 = vadd.f32 0.0, %v434
  %436 = vmatmul.bf16.gmra.mxu0 %v207
  %v437 = vpop.f32.mrf.mxu0
  %v438 = vadd.f32 0.0, %v437
  %v439 = vpop.f32.mrf.mxu0
  %v440 = vadd.f32 0.0, %v439
  %441 = vmatmul.bf16.gmra.mxu0 %v208
  %v442 = vpop.f32.mrf.mxu0
  %v443 = vadd.f32 0.0, %v442
  %v444 = vpop.f32.mrf.mxu0
  %v445 = vadd.f32 0.0, %v444
  %446 = vmatmul.bf16.gmra.mxu0 %v209
  %v447 = vpop.f32.mrf.mxu0
  %v448 = vadd.f32 0.0, %v447
  %v449 = vpop.f32.mrf.mxu0
  %v450 = vadd.f32 0.0, %v449
  %451 = vmatmul.bf16.gmra.mxu0 %v210
  %v452 = vpop.f32.mrf.mxu0
  %v453 = vadd.f32 0.0, %v452
  %v454 = vpop.f32.mrf.mxu0
  %v455 = vadd.f32 0.0, %v454
  %456 = vmatmul.bf16.gmra.mxu0 %v211
  %v457 = vpop.f32.mrf.mxu0
  %v458 = vadd.f32 0.0, %v457
  %v459 = vpop.f32.mrf.mxu0
  %v460 = vadd.f32 0.0, %v459
  %461 = vmatmul.bf16.gmra.mxu0 %v212
  %v462 = vpop.f32.mrf.mxu0
  %v463 = vadd.f32 0.0, %v462
  %v464 = vpop.f32.mrf.mxu0
  %v465 = vadd.f32 0.0, %v464
  %466 = vmatmul.bf16.gmra.mxu0 %v213
  %v467 = vpop.f32.mrf.mxu0
  %v468 = vadd.f32 0.0, %v467
  %v469 = vpop.f32.mrf.mxu0
  %v470 = vadd.f32 0.0, %v469
  %471 = vmatmul.bf16.gmra.mxu0 %v214
  %v472 = vpop.f32.mrf.mxu0
  %v473 = vadd.f32 0.0, %v472
  %v474 = vpop.f32.mrf.mxu0
  %v475 = vadd.f32 0.0, %v474
  %476 = vmatmul.bf16.gmra.mxu0 %v215
  %v477 = vpop.f32.mrf.mxu0
  %v478 = vadd.f32 0.0, %v477
  %v479 = vpop.f32.mrf.mxu0
  %v480 = vadd.f32 0.0, %v479
  %481 = vmatmul.bf16.gmra.mxu0 %v216
  %v482 = vpop.f32.mrf.mxu0
  %v483 = vadd.f32 0.0, %v482
  %v484 = vpop.f32.mrf.mxu0
  %v485 = vadd.f32 0.0, %v484
  %486 = vmatmul.bf16.gmra.mxu0 %v217
  %v487 = vpop.f32.mrf.mxu0
  %v488 = vadd.f32 0.0, %v487
  %v489 = vpop.f32.mrf.mxu0
  %v490 = vadd.f32 0.0, %v489
  %491 = vdwg.mxu0
  %v492 = vpack.c.bf16 %v326, %v324
  %v493 = vpack.c.bf16 %v415, %v413
  %v494 = vpack.c.bf16 %v331, %v329
  %v495 = vpack.c.bf16 %v420, %v418
  %v496 = vpack.c.bf16 %v336, %v334
  %v497 = vpack.c.bf16 %v425, %v423
  %v498 = vpack.c.bf16 %v341, %v339
  %v499 = vpack.c.bf16 %v430, %v428
  %v500 = vpack.c.bf16 %v346, %v344
  %v501 = vpack.c.bf16 %v435, %v433
  %v502 = vpack.c.bf16 %v351, %v349
  %v503 = vpack.c.bf16 %v440, %v438
  %v504 = vpack.c.bf16 %v356, %v354
  %v505 = vpack.c.bf16 %v445, %v443
  %v506 = vpack.c.bf16 %v361, %v359
  %v507 = vpack.c.bf16 %v450, %v448
  %v508 = vpack.c.bf16 %v366, %v364
  %v509 = vpack.c.bf16 %v455, %v453
  %v510 = vpack.c.bf16 %v371, %v369
  %v511 = vpack.c.bf16 %v460, %v458
  %v512 = vpack.c.bf16 %v376, %v374
  %v513 = vpack.c.bf16 %v465, %v463
  %v514 = vpack.c.bf16 %v381, %v379
  %v515 = vpack.c.bf16 %v470, %v468
  %v516 = vpack.c.bf16 %v386, %v384
  %v517 = vpack.c.bf16 %v475, %v473
  %v518 = vpack.c.bf16 %v391, %v389
  %v519 = vpack.c.bf16 %v480, %v478
  %v520 = vpack.c.bf16 %v396, %v394
  %v521 = vpack.c.bf16 %v485, %v483
  %v522 = vpack.c.bf16 %v401, %v399
  %v523 = vpack.c.bf16 %v490, %v488
  %v524 = vld [vmem:[#allocation2] sm:$0xff]
  %v525 = vld [vmem:[#allocation2 + $0x8] sm:$0xff]
  %v526 = vld [vmem:[#allocation2 + $0x10] sm:$0xff]
  %v527 = vld [vmem:[#allocation2 + $0x18] sm:$0xff]
  %v528 = vld [vmem:[#allocation2 + $0x20] sm:$0xff]
  %v529 = vld [vmem:[#allocation2 + $0x28] sm:$0xff]
  %v530 = vld [vmem:[#allocation2 + $0x30] sm:$0xff]
  %v531 = vld [vmem:[#allocation2 + $0x38] sm:$0xff]
  %v532 = vld [vmem:[#allocation2 + $0x40] sm:$0xff]
  %v533 = vld [vmem:[#allocation2 + $0x48] sm:$0xff]
  %v534 = vld [vmem:[#allocation2 + $0x50] sm:$0xff]
  %v535 = vld [vmem:[#allocation2 + $0x58] sm:$0xff]
  %v536 = vld [vmem:[#allocation2 + $0x60] sm:$0xff]
  %v537 = vld [vmem:[#allocation2 + $0x68] sm:$0xff]
  %v538 = vld [vmem:[#allocation2 + $0x70] sm:$0xff]
  %v539 = vld [vmem:[#allocation2 + $0x78] sm:$0xff]
  %v540 = vld [vmem:[#allocation2 + $0x80] sm:$0xff]
  %v541 = vld [vmem:[#allocation2 + $0x88] sm:$0xff]
  %v542 = vld [vmem:[#allocation2 + $0x90] sm:$0xff]
  %v543 = vld [vmem:[#allocation2 + $0x98] sm:$0xff]
  %v544 = vld [vmem:[#allocation2 + $0xa0] sm:$0xff]
  %v545 = vld [vmem:[#allocation2 + $0xa8] sm:$0xff]
  %v546 = vld [vmem:[#allocation2 + $0xb0] sm:$0xff]
  %v547 = vld [vmem:[#allocation2 + $0xb8] sm:$0xff]
  %v548 = vld [vmem:[#allocation2 + $0xc0] sm:$0xff]
  %v549 = vld [vmem:[#allocation2 + $0xc8] sm:$0xff]
  %v550 = vld [vmem:[#allocation2 + $0xd0] sm:$0xff]
  %v551 = vld [vmem:[#allocation2 + $0xd8] sm:$0xff]
  %v552 = vld [vmem:[#allocation2 + $0xe0] sm:$0xff]
  %v553 = vld [vmem:[#allocation2 + $0xe8] sm:$0xff]
  %v554 = vld [vmem:[#allocation2 + $0xf0] sm:$0xff]
  %v555 = vld [vmem:[#allocation2 + $0xf8] sm:$0xff]
  %v556 = vld [vmem:[#allocation2 + $0x100] sm:$0xff]
  %v557 = vld [vmem:[#allocation2 + $0x108] sm:$0xff]
  %v558 = vld [vmem:[#allocation2 + $0x110] sm:$0xff]
  %v559 = vld [vmem:[#allocation2 + $0x118] sm:$0xff]
  %v560 = vld [vmem:[#allocation2 + $0x120] sm:$0xff]
  %v561 = vld [vmem:[#allocation2 + $0x128] sm:$0xff]
  %v562 = vld [vmem:[#allocation2 + $0x130] sm:$0xff]
  %v563 = vld [vmem:[#allocation2 + $0x138] sm:$0xff]
  %v564 = vld [vmem:[#allocation2 + $0x140] sm:$0xff]
  %v565 = vld [vmem:[#allocation2 + $0x148] sm:$0xff]
  %v566 = vld [vmem:[#allocation2 + $0x150] sm:$0xff]
  %v567 = vld [vmem:[#allocation2 + $0x158] sm:$0xff]
  %v568 = vld [vmem:[#allocation2 + $0x160] sm:$0xff]
  %v569 = vld [vmem:[#allocation2 + $0x168] sm:$0xff]
  %v570 = vld [vmem:[#allocation2 + $0x170] sm:$0xff]
  %v571 = vld [vmem:[#allocation2 + $0x178] sm:$0xff]
  %v572 = vld [vmem:[#allocation2 + $0x180] sm:$0xff]
  %v573 = vld [vmem:[#allocation2 + $0x188] sm:$0xff]
  %v574 = vld [vmem:[#allocation2 + $0x190] sm:$0xff]
  %v575 = vld [vmem:[#allocation2 + $0x198] sm:$0xff]
  %v576 = vld [vmem:[#allocation2 + $0x1a0] sm:$0xff]
  %v577 = vld [vmem:[#allocation2 + $0x1a8] sm:$0xff]
  %v578 = vld [vmem:[#allocation2 + $0x1b0] sm:$0xff]
  %v579 = vld [vmem:[#allocation2 + $0x1b8] sm:$0xff]
  %v580 = vld [vmem:[#allocation2 + $0x1c0] sm:$0xff]
  %v581 = vld [vmem:[#allocation2 + $0x1c8] sm:$0xff]
  %v582 = vld [vmem:[#allocation2 + $0x1d0] sm:$0xff]
  %v583 = vld [vmem:[#allocation2 + $0x1d8] sm:$0xff]
  %v584 = vld [vmem:[#allocation2 + $0x1e0] sm:$0xff]
  %v585 = vld [vmem:[#allocation2 + $0x1e8] sm:$0xff]
  %v586 = vld [vmem:[#allocation2 + $0x1f0] sm:$0xff]
  %v587 = vld [vmem:[#allocation2 + $0x1f8] sm:$0xff]
  %v588 = vld [vmem:[%s0] sm:$0xff]
  %v589 = vld [vmem:[%s0 + $0x8] sm:$0xff]
  %v590 = vld [vmem:[%s0 + $0x10] sm:$0xff]
  %v591 = vld [vmem:[%s0 + $0x18] sm:$0xff]
  %v592 = vld [vmem:[%s0 + $0x20] sm:$0xff]
  %v593 = vld [vmem:[%s0 + $0x28] sm:$0xff]
  %v594 = vld [vmem:[%s0 + $0x30] sm:$0xff]
  %v595 = vld [vmem:[%s0 + $0x38] sm:$0xff]
  %v596 = vld [vmem:[%s0 + $0x40] sm:$0xff]
  %v597 = vld [vmem:[%s0 + $0x48] sm:$0xff]
  %v598 = vld [vmem:[%s0 + $0x50] sm:$0xff]
  %v599 = vld [vmem:[%s0 + $0x58] sm:$0xff]
  %v600 = vld [vmem:[%s0 + $0x60] sm:$0xff]
  %v601 = vld [vmem:[%s0 + $0x68] sm:$0xff]
  %v602 = vld [vmem:[%s0 + $0x70] sm:$0xff]
  %v603 = vld [vmem:[%s0 + $0x78] sm:$0xff]
  %v604 = vld [vmem:[%s0 + $0x80] sm:$0xff]
  %v605 = vld [vmem:[%s0 + $0x88] sm:$0xff]
  %v606 = vld [vmem:[%s0 + $0x90] sm:$0xff]
  %v607 = vld [vmem:[%s0 + $0x98] sm:$0xff]
  %v608 = vld [vmem:[%s0 + $0xa0] sm:$0xff]
  %v609 = vld [vmem:[%s0 + $0xa8] sm:$0xff]
  %v610 = vld [vmem:[%s0 + $0xb0] sm:$0xff]
  %v611 = vld [vmem:[%s0 + $0xb8] sm:$0xff]
  %v612 = vld [vmem:[%s0 + $0xc0] sm:$0xff]
  %v613 = vld [vmem:[%s0 + $0xc8] sm:$0xff]
  %v614 = vld [vmem:[%s0 + $0xd0] sm:$0xff]
  %v615 = vld [vmem:[%s0 + $0xd8] sm:$0xff]
  %v616 = vld [vmem:[%s0 + $0xe0] sm:$0xff]
  %v617 = vld [vmem:[%s0 + $0xe8] sm:$0xff]
  %v618 = vld [vmem:[%s0 + $0xf0] sm:$0xff]
  %v619 = vld [vmem:[%s0 + $0xf8] sm:$0xff]
  %v652 = vunpack.c.l.b16 %v588
  %v653 = vunpack.c.h.b16 %v588
  %v654 = vunpack.c.l.b16 %v589
  %v655 = vunpack.c.h.b16 %v589
  %v656 = vunpack.c.l.b16 %v590
  %v657 = vunpack.c.h.b16 %v590
  %v658 = vunpack.c.l.b16 %v591
  %v659 = vunpack.c.h.b16 %v591
  %v660 = vunpack.c.l.b16 %v592
  %v661 = vunpack.c.h.b16 %v592
  %v662 = vunpack.c.l.b16 %v593
  %v663 = vunpack.c.h.b16 %v593
  %v664 = vunpack.c.l.b16 %v594
  %v665 = vunpack.c.h.b16 %v594
  %v666 = vunpack.c.l.b16 %v595
  %v667 = vunpack.c.h.b16 %v595
  %v668 = vunpack.c.l.b16 %v596
  %v669 = vunpack.c.h.b16 %v596
  %v670 = vunpack.c.l.b16 %v597
  %v671 = vunpack.c.h.b16 %v597
  %v672 = vunpack.c.l.b16 %v598
  %v673 = vunpack.c.h.b16 %v598
  %v674 = vunpack.c.l.b16 %v599
  %v675 = vunpack.c.h.b16 %v599
  %v676 = vunpack.c.l.b16 %v600
  %v677 = vunpack.c.h.b16 %v600
  %v678 = vunpack.c.l.b16 %v601
  %v679 = vunpack.c.h.b16 %v601
  %v680 = vunpack.c.l.b16 %v602
  %v681 = vunpack.c.h.b16 %v602
  %v682 = vunpack.c.l.b16 %v603
  %v683 = vunpack.c.h.b16 %v603
  %v684 = vunpack.c.l.b16 %v604
  %v685 = vunpack.c.h.b16 %v604
  %v686 = vunpack.c.l.b16 %v605
  %v687 = vunpack.c.h.b16 %v605
  %v688 = vunpack.c.l.b16 %v606
  %v689 = vunpack.c.h.b16 %v606
  %v690 = vunpack.c.l.b16 %v607
  %v691 = vunpack.c.h.b16 %v607
  %v692 = vunpack.c.l.b16 %v608
  %v693 = vunpack.c.h.b16 %v608
  %v694 = vunpack.c.l.b16 %v609
  %v695 = vunpack.c.h.b16 %v609
  %v696 = vunpack.c.l.b16 %v610
  %v697 = vunpack.c.h.b16 %v610
  %v698 = vunpack.c.l.b16 %v611
  %v699 = vunpack.c.h.b16 %v611
  %v700 = vunpack.c.l.b16 %v612
  %v701 = vunpack.c.h.b16 %v612
  %v702 = vunpack.c.l.b16 %v613
  %v703 = vunpack.c.h.b16 %v613
  %v704 = vunpack.c.l.b16 %v614
  %v705 = vunpack.c.h.b16 %v614
  %v706 = vunpack.c.l.b16 %v615
  %v707 = vunpack.c.h.b16 %v615
  %v708 = vunpack.c.l.b16 %v616
  %v709 = vunpack.c.h.b16 %v616
  %v710 = vunpack.c.l.b16 %v617
  %v711 = vunpack.c.h.b16 %v617
  %v712 = vunpack.c.l.b16 %v618
  %v713 = vunpack.c.h.b16 %v618
  %v714 = vunpack.c.l.b16 %v619
  %v715 = vunpack.c.h.b16 %v619
  %v716 = vpack.c.b16 %v654, %v652
  %v717 = vpack.c.b16 %v655, %v653
  %v718 = vpack.c.b16 %v658, %v656
  %v719 = vpack.c.b16 %v659, %v657
  %v720 = vpack.c.b16 %v662, %v660
  %v721 = vpack.c.b16 %v663, %v661
  %v722 = vpack.c.b16 %v666, %v664
  %v723 = vpack.c.b16 %v667, %v665
  %v724 = vpack.c.b16 %v670, %v668
  %v725 = vpack.c.b16 %v671, %v669
  %v726 = vpack.c.b16 %v674, %v672
  %v727 = vpack.c.b16 %v675, %v673
  %v728 = vpack.c.b16 %v678, %v676
  %v729 = vpack.c.b16 %v679, %v677
  %v730 = vpack.c.b16 %v682, %v680
  %v731 = vpack.c.b16 %v683, %v681
  %v732 = vpack.c.b16 %v686, %v684
  %v733 = vpack.c.b16 %v687, %v685
  %v734 = vpack.c.b16 %v690, %v688
  %v735 = vpack.c.b16 %v691, %v689
  %v736 = vpack.c.b16 %v694, %v692
  %v737 = vpack.c.b16 %v695, %v693
  %v738 = vpack.c.b16 %v698, %v696
  %v739 = vpack.c.b16 %v699, %v697
  %v740 = vpack.c.b16 %v702, %v700
  %v741 = vpack.c.b16 %v703, %v701
  %v742 = vpack.c.b16 %v706, %v704
  %v743 = vpack.c.b16 %v707, %v705
  %v744 = vpack.c.b16 %v710, %v708
  %v745 = vpack.c.b16 %v711, %v709
  %v746 = vpack.c.b16 %v714, %v712
  %v747 = vpack.c.b16 %v715, %v713
  %780 = vmatpush.bf16.msra.mxu0 %v506
  %781 = vmatpush.bf16.msra.mxu0 %v504
  %782 = vmatpush.bf16.msra.mxu0 %v502
  %783 = vmatpush.bf16.msra.mxu0 %v500
  %784 = vmatpush.bf16.msra.mxu0 %v498
  %785 = vmatpush.bf16.msra.mxu0 %v496
  %786 = vmatpush.bf16.msra.mxu0 %v494
  %787 = vmatpush.bf16.msra.mxu0 %v492
  %788 = vmatmul.bf16.gmra.mxu0 %v716
  %v789 = vpop.f32.mrf.mxu0
  %v790 = vadd.f32 0.0, %v789
  %v791 = vpop.f32.mrf.mxu0
  %v792 = vadd.f32 0.0, %v791
  %793 = vmatmul.bf16.gmra.mxu0 %v718
  %v794 = vpop.f32.mrf.mxu0
  %v795 = vadd.f32 0.0, %v794
  %v796 = vpop.f32.mrf.mxu0
  %v797 = vadd.f32 0.0, %v796
  %798 = vmatmul.bf16.gmra.mxu0 %v720
  %v799 = vpop.f32.mrf.mxu0
  %v800 = vadd.f32 0.0, %v799
  %v801 = vpop.f32.mrf.mxu0
  %v802 = vadd.f32 0.0, %v801
  %803 = vmatmul.bf16.gmra.mxu0 %v722
  %v804 = vpop.f32.mrf.mxu0
  %v805 = vadd.f32 0.0, %v804
  %v806 = vpop.f32.mrf.mxu0
  %v807 = vadd.f32 0.0, %v806
  %808 = vmatmul.bf16.gmra.mxu0 %v724
  %v809 = vpop.f32.mrf.mxu0
  %v810 = vadd.f32 0.0, %v809
  %v811 = vpop.f32.mrf.mxu0
  %v812 = vadd.f32 0.0, %v811
  %813 = vmatmul.bf16.gmra.mxu0 %v726
  %v814 = vpop.f32.mrf.mxu0
  %v815 = vadd.f32 0.0, %v814
  %v816 = vpop.f32.mrf.mxu0
  %v817 = vadd.f32 0.0, %v816
  %818 = vmatmul.bf16.gmra.mxu0 %v728
  %v819 = vpop.f32.mrf.mxu0
  %v820 = vadd.f32 0.0, %v819
  %v821 = vpop.f32.mrf.mxu0
  %v822 = vadd.f32 0.0, %v821
  %823 = vmatmul.bf16.gmra.mxu0 %v730
  %v824 = vpop.f32.mrf.mxu0
  %v825 = vadd.f32 0.0, %v824
  %v826 = vpop.f32.mrf.mxu0
  %v827 = vadd.f32 0.0, %v826
  %828 = vmatmul.bf16.gmra.mxu0 %v732
  %v829 = vpop.f32.mrf.mxu0
  %v830 = vadd.f32 0.0, %v829
  %v831 = vpop.f32.mrf.mxu0
  %v832 = vadd.f32 0.0, %v831
  %833 = vmatmul.bf16.gmra.mxu0 %v734
  %v834 = vpop.f32.mrf.mxu0
  %v835 = vadd.f32 0.0, %v834
  %v836 = vpop.f32.mrf.mxu0
  %v837 = vadd.f32 0.0, %v836
  %838 = vmatmul.bf16.gmra.mxu0 %v736
  %v839 = vpop.f32.mrf.mxu0
  %v840 = vadd.f32 0.0, %v839
  %v841 = vpop.f32.mrf.mxu0
  %v842 = vadd.f32 0.0, %v841
  %843 = vmatmul.bf16.gmra.mxu0 %v738
  %v844 = vpop.f32.mrf.mxu0
  %v845 = vadd.f32 0.0, %v844
  %v846 = vpop.f32.mrf.mxu0
  %v847 = vadd.f32 0.0, %v846
  %848 = vmatmul.bf16.gmra.mxu0 %v740
  %v849 = vpop.f32.mrf.mxu0
  %v850 = vadd.f32 0.0, %v849
  %v851 = vpop.f32.mrf.mxu0
  %v852 = vadd.f32 0.0, %v851
  %853 = vmatmul.bf16.gmra.mxu0 %v742
  %v854 = vpop.f32.mrf.mxu0
  %v855 = vadd.f32 0.0, %v854
  %v856 = vpop.f32.mrf.mxu0
  %v857 = vadd.f32 0.0, %v856
  %858 = vmatmul.bf16.gmra.mxu0 %v744
  %v859 = vpop.f32.mrf.mxu0
  %v860 = vadd.f32 0.0, %v859
  %v861 = vpop.f32.mrf.mxu0
  %v862 = vadd.f32 0.0, %v861
  %863 = vmatmul.bf16.gmra.mxu0 %v746
  %v864 = vpop.f32.mrf.mxu0
  %v865 = vadd.f32 0.0, %v864
  %v866 = vpop.f32.mrf.mxu0
  %v867 = vadd.f32 0.0, %v866
  %868 = vdwg.mxu0
  %869 = vmatpush.bf16.msra.mxu0 %v522
  %870 = vmatpush.bf16.msra.mxu0 %v520
  %871 = vmatpush.bf16.msra.mxu0 %v518
  %872 = vmatpush.bf16.msra.mxu0 %v516
  %873 = vmatpush.bf16.msra.mxu0 %v514
  %874 = vmatpush.bf16.msra.mxu0 %v512
  %875 = vmatpush.bf16.msra.mxu0 %v510
  %876 = vmatpush.bf16.msra.mxu0 %v508
  %877 = vmatmul.bf16.gmra.mxu0 %v717
  %v878 = vpop.f32.mrf.mxu0
  %v879 = vadd.f32 %v790, %v878
  %v880 = vpop.f32.mrf.mxu0
  %v881 = vadd.f32 %v792, %v880
  %882 = vmatmul.bf16.gmra.mxu0 %v719
  %v883 = vpop.f32.mrf.mxu0
  %v884 = vadd.f32 %v795, %v883
  %v885 = vpop.f32.mrf.mxu0
  %v886 = vadd.f32 %v797, %v885
  %887 = vmatmul.bf16.gmra.mxu0 %v721
  %v888 = vpop.f32.mrf.mxu0
  %v889 = vadd.f32 %v800, %v888
  %v890 = vpop.f32.mrf.mxu0
  %v891 = vadd.f32 %v802, %v890
  %892 = vmatmul.bf16.gmra.mxu0 %v723
  %v893 = vpop.f32.mrf.mxu0
  %v894 = vadd.f32 %v805, %v893
  %v895 = vpop.f32.mrf.mxu0
  %v896 = vadd.f32 %v807, %v895
  %897 = vmatmul.bf16.gmra.mxu0 %v725
  %v898 = vpop.f32.mrf.mxu0
  %v899 = vadd.f32 %v810, %v898
  %v900 = vpop.f32.mrf.mxu0
  %v901 = vadd.f32 %v812, %v900
  %902 = vmatmul.bf16.gmra.mxu0 %v727
  %v903 = vpop.f32.mrf.mxu0
  %v904 = vadd.f32 %v815, %v903
  %v905 = vpop.f32.mrf.mxu0
  %v906 = vadd.f32 %v817, %v905
  %907 = vmatmul.bf16.gmra.mxu0 %v729
  %v908 = vpop.f32.mrf.mxu0
  %v909 = vadd.f32 %v820, %v908
  %v910 = vpop.f32.mrf.mxu0
  %v911 = vadd.f32 %v822, %v910
  %912 = vmatmul.bf16.gmra.mxu0 %v731
  %v913 = vpop.f32.mrf.mxu0
  %v914 = vadd.f32 %v825, %v913
  %v915 = vpop.f32.mrf.mxu0
  %v916 = vadd.f32 %v827, %v915
  %917 = vmatmul.bf16.gmra.mxu0 %v733
  %v918 = vpop.f32.mrf.mxu0
  %v919 = vadd.f32 %v830, %v918
  %v920 = vpop.f32.mrf.mxu0
  %v921 = vadd.f32 %v832, %v920
  %922 = vmatmul.bf16.gmra.mxu0 %v735
  %v923 = vpop.f32.mrf.mxu0
  %v924 = vadd.f32 %v835, %v923
  %v925 = vpop.f32.mrf.mxu0
  %v926 = vadd.f32 %v837, %v925
  %927 = vmatmul.bf16.gmra.mxu0 %v737
  %v928 = vpop.f32.mrf.mxu0
  %v929 = vadd.f32 %v840, %v928
  %v930 = vpop.f32.mrf.mxu0
  %v931 = vadd.f32 %v842, %v930
  %932 = vmatmul.bf16.gmra.mxu0 %v739
  %v933 = vpop.f32.mrf.mxu0
  %v934 = vadd.f32 %v845, %v933
  %v935 = vpop.f32.mrf.mxu0
  %v936 = vadd.f32 %v847, %v935
  %937 = vmatmul.bf16.gmra.mxu0 %v741
  %v938 = vpop.f32.mrf.mxu0
  %v939 = vadd.f32 %v850, %v938
  %v940 = vpop.f32.mrf.mxu0
  %v941 = vadd.f32 %v852, %v940
  %942 = vmatmul.bf16.gmra.mxu0 %v743
  %v943 = vpop.f32.mrf.mxu0
  %v944 = vadd.f32 %v855, %v943
  %v945 = vpop.f32.mrf.mxu0
  %v946 = vadd.f32 %v857, %v945
  %947 = vmatmul.bf16.gmra.mxu0 %v745
  %v948 = vpop.f32.mrf.mxu0
  %v949 = vadd.f32 %v860, %v948
  %v950 = vpop.f32.mrf.mxu0
  %v951 = vadd.f32 %v862, %v950
  %952 = vmatmul.bf16.gmra.mxu0 %v747
  %v953 = vpop.f32.mrf.mxu0
  %v954 = vadd.f32 %v865, %v953
  %v955 = vpop.f32.mrf.mxu0
  %v956 = vadd.f32 %v867, %v955
  %957 = vdwg.mxu0
  %958 = vmatpush.bf16.msra.mxu0 %v507
  %959 = vmatpush.bf16.msra.mxu0 %v505
  %960 = vmatpush.bf16.msra.mxu0 %v503
  %961 = vmatpush.bf16.msra.mxu0 %v501
  %962 = vmatpush.bf16.msra.mxu0 %v499
  %963 = vmatpush.bf16.msra.mxu0 %v497
  %964 = vmatpush.bf16.msra.mxu0 %v495
  %965 = vmatpush.bf16.msra.mxu0 %v493
  %966 = vmatmul.bf16.gmra.mxu0 %v716
  %v967 = vpop.f32.mrf.mxu0
  %v968 = vadd.f32 0.0, %v967
  %v969 = vpop.f32.mrf.mxu0
  %v970 = vadd.f32 0.0, %v969
  %971 = vmatmul.bf16.gmra.mxu0 %v718
  %v972 = vpop.f32.mrf.mxu0
  %v973 = vadd.f32 0.0, %v972
  %v974 = vpop.f32.mrf.mxu0
  %v975 = vadd.f32 0.0, %v974
  %976 = vmatmul.bf16.gmra.mxu0 %v720
  %v977 = vpop.f32.mrf.mxu0
  %v978 = vadd.f32 0.0, %v977
  %v979 = vpop.f32.mrf.mxu0
  %v980 = vadd.f32 0.0, %v979
  %981 = vmatmul.bf16.gmra.mxu0 %v722
  %v982 = vpop.f32.mrf.mxu0
  %v983 = vadd.f32 0.0, %v982
  %v984 = vpop.f32.mrf.mxu0
  %v985 = vadd.f32 0.0, %v984
  %986 = vmatmul.bf16.gmra.mxu0 %v724
  %v987 = vpop.f32.mrf.mxu0
  %v988 = vadd.f32 0.0, %v987
  %v989 = vpop.f32.mrf.mxu0
  %v990 = vadd.f32 0.0, %v989
  %991 = vmatmul.bf16.gmra.mxu0 %v726
  %v992 = vpop.f32.mrf.mxu0
  %v993 = vadd.f32 0.0, %v992
  %v994 = vpop.f32.mrf.mxu0
  %v995 = vadd.f32 0.0, %v994
  %996 = vmatmul.bf16.gmra.mxu0 %v728
  %v997 = vpop.f32.mrf.mxu0
  %v998 = vadd.f32 0.0, %v997
  %v999 = vpop.f32.mrf.mxu0
  %v1000 = vadd.f32 0.0, %v999
  %1001 = vmatmul.bf16.gmra.mxu0 %v730
  %v1002 = vpop.f32.mrf.mxu0
  %v1003 = vadd.f32 0.0, %v1002
  %v1004 = vpop.f32.mrf.mxu0
  %v1005 = vadd.f32 0.0, %v1004
  %1006 = vmatmul.bf16.gmra.mxu0 %v732
  %v1007 = vpop.f32.mrf.mxu0
  %v1008 = vadd.f32 0.0, %v1007
  %v1009 = vpop.f32.mrf.mxu0
  %v1010 = vadd.f32 0.0, %v1009
  %1011 = vmatmul.bf16.gmra.mxu0 %v734
  %v1012 = vpop.f32.mrf.mxu0
  %v1013 = vadd.f32 0.0, %v1012
  %v1014 = vpop.f32.mrf.mxu0
  %v1015 = vadd.f32 0.0, %v1014
  %1016 = vmatmul.bf16.gmra.mxu0 %v736
  %v1017 = vpop.f32.mrf.mxu0
  %v1018 = vadd.f32 0.0, %v1017
  %v1019 = vpop.f32.mrf.mxu0
  %v1020 = vadd.f32 0.0, %v1019
  %1021 = vmatmul.bf16.gmra.mxu0 %v738
  %v1022 = vpop.f32.mrf.mxu0
  %v1023 = vadd.f32 0.0, %v1022
  %v1024 = vpop.f32.mrf.mxu0
  %v1025 = vadd.f32 0.0, %v1024
  %1026 = vmatmul.bf16.gmra.mxu0 %v740
  %v1027 = vpop.f32.mrf.mxu0
  %v1028 = vadd.f32 0.0, %v1027
  %v1029 = vpop.f32.mrf.mxu0
  %v1030 = vadd.f32 0.0, %v1029
  %1031 = vmatmul.bf16.gmra.mxu0 %v742
  %v1032 = vpop.f32.mrf.mxu0
  %v1033 = vadd.f32 0.0, %v1032
  %v1034 = vpop.f32.mrf.mxu0
  %v1035 = vadd.f32 0.0, %v1034
  %1036 = vmatmul.bf16.gmra.mxu0 %v744
  %v1037 = vpop.f32.mrf.mxu0
  %v1038 = vadd.f32 0.0, %v1037
  %v1039 = vpop.f32.mrf.mxu0
  %v1040 = vadd.f32 0.0, %v1039
  %1041 = vmatmul.bf16.gmra.mxu0 %v746
  %v1042 = vpop.f32.mrf.mxu0
  %v1043 = vadd.f32 0.0, %v1042
  %v1044 = vpop.f32.mrf.mxu0
  %v1045 = vadd.f32 0.0, %v1044
  %1046 = vdwg.mxu0
  %1047 = vmatpush.bf16.msra.mxu0 %v523
  %1048 = vmatpush.bf16.msra.mxu0 %v521
  %1049 = vmatpush.bf16.msra.mxu0 %v519
  %1050 = vmatpush.bf16.msra.mxu0 %v517
  %1051 = vmatpush.bf16.msra.mxu0 %v515
  %1052 = vmatpush.bf16.msra.mxu0 %v513
  %1053 = vmatpush.bf16.msra.mxu0 %v511
  %1054 = vmatpush.bf16.msra.mxu0 %v509
  %1055 = vmatmul.bf16.gmra.mxu0 %v717
  %v1056 = vpop.f32.mrf.mxu0
  %v1057 = vadd.f32 %v968, %v1056
  %v1058 = vpop.f32.mrf.mxu0
  %v1059 = vadd.f32 %v970, %v1058
  %1060 = vmatmul.bf16.gmra.mxu0 %v719
  %v1061 = vpop.f32.mrf.mxu0
  %v1062 = vadd.f32 %v973, %v1061
  %v1063 = vpop.f32.mrf.mxu0
  %v1064 = vadd.f32 %v975, %v1063
  %1065 = vmatmul.bf16.gmra.mxu0 %v721
  %v1066 = vpop.f32.mrf.mxu0
  %v1067 = vadd.f32 %v978, %v1066
  %v1068 = vpop.f32.mrf.mxu0
  %v1069 = vadd.f32 %v980, %v1068
  %1070 = vmatmul.bf16.gmra.mxu0 %v723
  %v1071 = vpop.f32.mrf.mxu0
  %v1072 = vadd.f32 %v983, %v1071
  %v1073 = vpop.f32.mrf.mxu0
  %v1074 = vadd.f32 %v985, %v1073
  %1075 = vmatmul.bf16.gmra.mxu0 %v725
  %v1076 = vpop.f32.mrf.mxu0
  %v1077 = vadd.f32 %v988, %v1076
  %v1078 = vpop.f32.mrf.mxu0
  %v1079 = vadd.f32 %v990, %v1078
  %1080 = vmatmul.bf16.gmra.mxu0 %v727
  %v1081 = vpop.f32.mrf.mxu0
  %v1082 = vadd.f32 %v993, %v1081
  %v1083 = vpop.f32.mrf.mxu0
  %v1084 = vadd.f32 %v995, %v1083
  %1085 = vmatmul.bf16.gmra.mxu0 %v729
  %v1086 = vpop.f32.mrf.mxu0
  %v1087 = vadd.f32 %v998, %v1086
  %v1088 = vpop.f32.mrf.mxu0
  %v1089 = vadd.f32 %v1000, %v1088
  %1090 = vmatmul.bf16.gmra.mxu0 %v731
  %v1091 = vpop.f32.mrf.mxu0
  %v1092 = vadd.f32 %v1003, %v1091
  %v1093 = vpop.f32.mrf.mxu0
  %v1094 = vadd.f32 %v1005, %v1093
  %1095 = vmatmul.bf16.gmra.mxu0 %v733
  %v1096 = vpop.f32.mrf.mxu0
  %v1097 = vadd.f32 %v1008, %v1096
  %v1098 = vpop.f32.mrf.mxu0
  %v1099 = vadd.f32 %v1010, %v1098
  %1100 = vmatmul.bf16.gmra.mxu0 %v735
  %v1101 = vpop.f32.mrf.mxu0
  %v1102 = vadd.f32 %v1013, %v1101
  %v1103 = vpop.f32.mrf.mxu0
  %v1104 = vadd.f32 %v1015, %v1103
  %1105 = vmatmul.bf16.gmra.mxu0 %v737
  %v1106 = vpop.f32.mrf.mxu0
  %v1107 = vadd.f32 %v1018, %v1106
  %v1108 = vpop.f32.mrf.mxu0
  %v1109 = vadd.f32 %v1020, %v1108
  %1110 = vmatmul.bf16.gmra.mxu0 %v739
  %v1111 = vpop.f32.mrf.mxu0
  %v1112 = vadd.f32 %v1023, %v1111
  %v1113 = vpop.f32.mrf.mxu0
  %v1114 = vadd.f32 %v1025, %v1113
  %1115 = vmatmul.bf16.gmra.mxu0 %v741
  %v1116 = vpop.f32.mrf.mxu0
  %v1117 = vadd.f32 %v1028, %v1116
  %v1118 = vpop.f32.mrf.mxu0
  %v1119 = vadd.f32 %v1030, %v1118
  %1120 = vmatmul.bf16.gmra.mxu0 %v743
  %v1121 = vpop.f32.mrf.mxu0
  %v1122 = vadd.f32 %v1033, %v1121
  %v1123 = vpop.f32.mrf.mxu0
  %v1124 = vadd.f32 %v1035, %v1123
  %1125 = vmatmul.bf16.gmra.mxu0 %v745
  %v1126 = vpop.f32.mrf.mxu0
  %v1127 = vadd.f32 %v1038, %v1126
  %v1128 = vpop.f32.mrf.mxu0
  %v1129 = vadd.f32 %v1040, %v1128
  %1130 = vmatmul.bf16.gmra.mxu0 %v747
  %v1131 = vpop.f32.mrf.mxu0
  %v1132 = vadd.f32 %v1043, %v1131
  %v1133 = vpop.f32.mrf.mxu0
  %v1134 = vadd.f32 %v1045, %v1133
  %1135 = vdwg.mxu0
  %v1136 = vadd.f32 %v524, %v879
  %v1137 = vadd.f32 %v525, %v1057
  %v1138 = vadd.f32 %v526, %v881
  %v1139 = vadd.f32 %v527, %v1059
  %v1140 = vadd.f32 %v528, %v884
  %v1141 = vadd.f32 %v529, %v1062
  %v1142 = vadd.f32 %v530, %v886
  %v1143 = vadd.f32 %v531, %v1064
  %v1144 = vadd.f32 %v532, %v889
  %v1145 = vadd.f32 %v533, %v1067
  %v1146 = vadd.f32 %v534, %v891
  %v1147 = vadd.f32 %v535, %v1069
  %v1148 = vadd.f32 %v536, %v894
  %v1149 = vadd.f32 %v537, %v1072
  %v1150 = vadd.f32 %v538, %v896
  %v1151 = vadd.f32 %v539, %v1074
  %v1152 = vadd.f32 %v540, %v899
  %v1153 = vadd.f32 %v541, %v1077
  %v1154 = vadd.f32 %v542, %v901
  %v1155 = vadd.f32 %v543, %v1079
  %v1156 = vadd.f32 %v544, %v904
  %v1157 = vadd.f32 %v545, %v1082
  %v1158 = vadd.f32 %v546, %v906
  %v1159 = vadd.f32 %v547, %v1084
  %v1160 = vadd.f32 %v548, %v909
  %v1161 = vadd.f32 %v549, %v1087
  %v1162 = vadd.f32 %v550, %v911
  %v1163 = vadd.f32 %v551, %v1089
  %v1164 = vadd.f32 %v552, %v914
  %v1165 = vadd.f32 %v553, %v1092
  %v1166 = vadd.f32 %v554, %v916
  %v1167 = vadd.f32 %v555, %v1094
  %v1168 = vadd.f32 %v556, %v919
  %v1169 = vadd.f32 %v557, %v1097
  %v1170 = vadd.f32 %v558, %v921
  %v1171 = vadd.f32 %v559, %v1099
  %v1172 = vadd.f32 %v560, %v924
  %v1173 = vadd.f32 %v561, %v1102
  %v1174 = vadd.f32 %v562, %v926
  %v1175 = vadd.f32 %v563, %v1104
  %v1176 = vadd.f32 %v564, %v929
  %v1177 = vadd.f32 %v565, %v1107
  %v1178 = vadd.f32 %v566, %v931
  %v1179 = vadd.f32 %v567, %v1109
  %v1180 = vadd.f32 %v568, %v934
  %v1181 = vadd.f32 %v569, %v1112
  %v1182 = vadd.f32 %v570, %v936
  %v1183 = vadd.f32 %v571, %v1114
  %v1184 = vadd.f32 %v572, %v939
  %v1185 = vadd.f32 %v573, %v1117
  %v1186 = vadd.f32 %v574, %v941
  %v1187 = vadd.f32 %v575, %v1119
  %v1188 = vadd.f32 %v576, %v944
  %v1189 = vadd.f32 %v577, %v1122
  %v1190 = vadd.f32 %v578, %v946
  %v1191 = vadd.f32 %v579, %v1124
  %v1192 = vadd.f32 %v580, %v949
  %v1193 = vadd.f32 %v581, %v1127
  %v1194 = vadd.f32 %v582, %v951
  %v1195 = vadd.f32 %v583, %v1129
  %v1196 = vadd.f32 %v584, %v954
  %v1197 = vadd.f32 %v585, %v1132
  %v1198 = vadd.f32 %v586, %v956
  %v1199 = vadd.f32 %v587, %v1134
  %1200 = vst [vmem:[#allocation2] sm:$0xff] %v1136
  %1201 = vst [vmem:[#allocation2 + $0x8] sm:$0xff] %v1137
  %1202 = vst [vmem:[#allocation2 + $0x10] sm:$0xff] %v1138
  %1203 = vst [vmem:[#allocation2 + $0x18] sm:$0xff] %v1139
  %1204 = vst [vmem:[#allocation2 + $0x20] sm:$0xff] %v1140
  %1205 = vst [vmem:[#allocation2 + $0x28] sm:$0xff] %v1141
  %1206 = vst [vmem:[#allocation2 + $0x30] sm:$0xff] %v1142
  %1207 = vst [vmem:[#allocation2 + $0x38] sm:$0xff] %v1143
  %1208 = vst [vmem:[#allocation2 + $0x40] sm:$0xff] %v1144
  %1209 = vst [vmem:[#allocation2 + $0x48] sm:$0xff] %v1145
  %1210 = vst [vmem:[#allocation2 + $0x50] sm:$0xff] %v1146
  %1211 = vst [vmem:[#allocation2 + $0x58] sm:$0xff] %v1147
  %1212 = vst [vmem:[#allocation2 + $0x60] sm:$0xff] %v1148
  %1213 = vst [vmem:[#allocation2 + $0x68] sm:$0xff] %v1149
  %1214 = vst [vmem:[#allocation2 + $0x70] sm:$0xff] %v1150
  %1215 = vst [vmem:[#allocation2 + $0x78] sm:$0xff] %v1151
  %1216 = vst [vmem:[#allocation2 + $0x80] sm:$0xff] %v1152
  %1217 = vst [vmem:[#allocation2 + $0x88] sm:$0xff] %v1153
  %1218 = vst [vmem:[#allocation2 + $0x90] sm:$0xff] %v1154
  %1219 = vst [vmem:[#allocation2 + $0x98] sm:$0xff] %v1155
  %1220 = vst [vmem:[#allocation2 + $0xa0] sm:$0xff] %v1156
  %1221 = vst [vmem:[#allocation2 + $0xa8] sm:$0xff] %v1157
  %1222 = vst [vmem:[#allocation2 + $0xb0] sm:$0xff] %v1158
  %1223 = vst [vmem:[#allocation2 + $0xb8] sm:$0xff] %v1159
  %1224 = vst [vmem:[#allocation2 + $0xc0] sm:$0xff] %v1160
  %1225 = vst [vmem:[#allocation2 + $0xc8] sm:$0xff] %v1161
  %1226 = vst [vmem:[#allocation2 + $0xd0] sm:$0xff] %v1162
  %1227 = vst [vmem:[#allocation2 + $0xd8] sm:$0xff] %v1163
  %1228 = vst [vmem:[#allocation2 + $0xe0] sm:$0xff] %v1164
  %1229 = vst [vmem:[#allocation2 + $0xe8] sm:$0xff] %v1165
  %1230 = vst [vmem:[#allocation2 + $0xf0] sm:$0xff] %v1166
  %1231 = vst [vmem:[#allocation2 + $0xf8] sm:$0xff] %v1167
  %1232 = vst [vmem:[#allocation2 + $0x100] sm:$0xff] %v1168
  %1233 = vst [vmem:[#allocation2 + $0x108] sm:$0xff] %v1169
  %1234 = vst [vmem:[#allocation2 + $0x110] sm:$0xff] %v1170
  %1235 = vst [vmem:[#allocation2 + $0x118] sm:$0xff] %v1171
  %1236 = vst [vmem:[#allocation2 + $0x120] sm:$0xff] %v1172
  %1237 = vst [vmem:[#allocation2 + $0x128] sm:$0xff] %v1173
  %1238 = vst [vmem:[#allocation2 + $0x130] sm:$0xff] %v1174
  %1239 = vst [vmem:[#allocation2 + $0x138] sm:$0xff] %v1175
  %1240 = vst [vmem:[#allocation2 + $0x140] sm:$0xff] %v1176
  %1241 = vst [vmem:[#allocation2 + $0x148] sm:$0xff] %v1177
  %1242 = vst [vmem:[#allocation2 + $0x150] sm:$0xff] %v1178
  %1243 = vst [vmem:[#allocation2 + $0x158] sm:$0xff] %v1179
  %1244 = vst [vmem:[#allocation2 + $0x160] sm:$0xff] %v1180
  %1245 = vst [vmem:[#allocation2 + $0x168] sm:$0xff] %v1181
  %1246 = vst [vmem:[#allocation2 + $0x170] sm:$0xff] %v1182
  %1247 = vst [vmem:[#allocation2 + $0x178] sm:$0xff] %v1183
  %1248 = vst [vmem:[#allocation2 + $0x180] sm:$0xff] %v1184
  %1249 = vst [vmem:[#allocation2 + $0x188] sm:$0xff] %v1185
  %1250 = vst [vmem:[#allocation2 + $0x190] sm:$0xff] %v1186
  %1251 = vst [vmem:[#allocation2 + $0x198] sm:$0xff] %v1187
  %1252 = vst [vmem:[#allocation2 + $0x1a0] sm:$0xff] %v1188
  %1253 = vst [vmem:[#allocation2 + $0x1a8] sm:$0xff] %v1189
  %1254 = vst [vmem:[#allocation2 + $0x1b0] sm:$0xff] %v1190
  %1255 = vst [vmem:[#allocation2 + $0x1b8] sm:$0xff] %v1191
  %1256 = vst [vmem:[#allocation2 + $0x1c0] sm:$0xff] %v1192
  %1257 = vst [vmem:[#allocation2 + $0x1c8] sm:$0xff] %v1193
  %1258 = vst [vmem:[#allocation2 + $0x1d0] sm:$0xff] %v1194
  %1259 = vst [vmem:[#allocation2 + $0x1d8] sm:$0xff] %v1195
  %1260 = vst [vmem:[#allocation2 + $0x1e0] sm:$0xff] %v1196
  %1261 = vst [vmem:[#allocation2 + $0x1e8] sm:$0xff] %v1197
  %1262 = vst [vmem:[#allocation2 + $0x1f0] sm:$0xff] %v1198
  %1263 = vst [vmem:[#allocation2 + $0x1f8] sm:$0xff] %v1199
  // Predicated region
  $region22: #{vgae_forward.4} parent=0 // pred_check
    %p1264 = pneg %p17
  $region23: #{vgae_forward.4} parent=0 // pred_check_branch
    %1266 = sbr.rel (%p1264) target = $region25
  $region24: #{vgae_forward.4} parent=0 // pred_region
    %v1267 = vld [vmem:[#allocation2] sm:$0xff]
    %v1268 = vld [vmem:[#allocation2 + $0x8] sm:$0xff]
    %v1269 = vld [vmem:[#allocation2 + $0x10] sm:$0xff]
    %v1270 = vld [vmem:[#allocation2 + $0x18] sm:$0xff]
    %v1271 = vld [vmem:[#allocation2 + $0x20] sm:$0xff]
    %v1272 = vld [vmem:[#allocation2 + $0x28] sm:$0xff]
    %v1273 = vld [vmem:[#allocation2 + $0x30] sm:$0xff]
    %v1274 = vld [vmem:[#allocation2 + $0x38] sm:$0xff]
    %v1275 = vld [vmem:[#allocation2 + $0x40] sm:$0xff]
    %v1276 = vld [vmem:[#allocation2 + $0x48] sm:$0xff]
    %v1277 = vld [vmem:[#allocation2 + $0x50] sm:$0xff]
    %v1278 = vld [vmem:[#allocation2 + $0x58] sm:$0xff]
    %v1279 = vld [vmem:[#allocation2 + $0x60] sm:$0xff]
    %v1280 = vld [vmem:[#allocation2 + $0x68] sm:$0xff]
    %v1281 = vld [vmem:[#allocation2 + $0x70] sm:$0xff]
    %v1282 = vld [vmem:[#allocation2 + $0x78] sm:$0xff]
    %v1283 = vld [vmem:[#allocation2 + $0x80] sm:$0xff]
    %v1284 = vld [vmem:[#allocation2 + $0x88] sm:$0xff]
    %v1285 = vld [vmem:[#allocation2 + $0x90] sm:$0xff]
    %v1286 = vld [vmem:[#allocation2 + $0x98] sm:$0xff]
    %v1287 = vld [vmem:[#allocation2 + $0xa0] sm:$0xff]
    %v1288 = vld [vmem:[#allocation2 + $0xa8] sm:$0xff]
    %v1289 = vld [vmem:[#allocation2 + $0xb0] sm:$0xff]
    %v1290 = vld [vmem:[#allocation2 + $0xb8] sm:$0xff]
    %v1291 = vld [vmem:[#allocation2 + $0xc0] sm:$0xff]
    %v1292 = vld [vmem:[#allocation2 + $0xc8] sm:$0xff]
    %v1293 = vld [vmem:[#allocation2 + $0xd0] sm:$0xff]
    %v1294 = vld [vmem:[#allocation2 + $0xd8] sm:$0xff]
    %v1295 = vld [vmem:[#allocation2 + $0xe0] sm:$0xff]
    %v1296 = vld [vmem:[#allocation2 + $0xe8] sm:$0xff]
    %v1297 = vld [vmem:[#allocation2 + $0xf0] sm:$0xff]
    %v1298 = vld [vmem:[#allocation2 + $0xf8] sm:$0xff]
    %v1299 = vld [vmem:[#allocation2 + $0x100] sm:$0xff]
    %v1300 = vld [vmem:[#allocation2 + $0x108] sm:$0xff]
    %v1301 = vld [vmem:[#allocation2 + $0x110] sm:$0xff]
    %v1302 = vld [vmem:[#allocation2 + $0x118] sm:$0xff]
    %v1303 = vld [vmem:[#allocation2 + $0x120] sm:$0xff]
    %v1304 = vld [vmem:[#allocation2 + $0x128] sm:$0xff]
    %v1305 = vld [vmem:[#allocation2 + $0x130] sm:$0xff]
    %v1306 = vld [vmem:[#allocation2 + $0x138] sm:$0xff]
    %v1307 = vld [vmem:[#allocation2 + $0x140] sm:$0xff]
    %v1308 = vld [vmem:[#allocation2 + $0x148] sm:$0xff]
    %v1309 = vld [vmem:[#allocation2 + $0x150] sm:$0xff]
    %v1310 = vld [vmem:[#allocation2 + $0x158] sm:$0xff]
    %v1311 = vld [vmem:[#allocation2 + $0x160] sm:$0xff]
    %v1312 = vld [vmem:[#allocation2 + $0x168] sm:$0xff]
    %v1313 = vld [vmem:[#allocation2 + $0x170] sm:$0xff]
    %v1314 = vld [vmem:[#allocation2 + $0x178] sm:$0xff]
    %v1315 = vld [vmem:[#allocation2 + $0x180] sm:$0xff]
    %v1316 = vld [vmem:[#allocation2 + $0x188] sm:$0xff]
    %v1317 = vld [vmem:[#allocation2 + $0x190] sm:$0xff]
    %v1318 = vld [vmem:[#allocation2 + $0x198] sm:$0xff]
    %v1319 = vld [vmem:[#allocation2 + $0x1a0] sm:$0xff]
    %v1320 = vld [vmem:[#allocation2 + $0x1a8] sm:$0xff]
    %v1321 = vld [vmem:[#allocation2 + $0x1b0] sm:$0xff]
    %v1322 = vld [vmem:[#allocation2 + $0x1b8] sm:$0xff]
    %v1323 = vld [vmem:[#allocation2 + $0x1c0] sm:$0xff]
    %v1324 = vld [vmem:[#allocation2 + $0x1c8] sm:$0xff]
    %v1325 = vld [vmem:[#allocation2 + $0x1d0] sm:$0xff]
    %v1326 = vld [vmem:[#allocation2 + $0x1d8] sm:$0xff]
    %v1327 = vld [vmem:[#allocation2 + $0x1e0] sm:$0xff]
    %v1328 = vld [vmem:[#allocation2 + $0x1e8] sm:$0xff]
    %v1329 = vld [vmem:[#allocation2 + $0x1f0] sm:$0xff]
    %v1330 = vld [vmem:[#allocation2 + $0x1f8] sm:$0xff]
    %v1331 = vld [vmem:[%s3] sm:$0xff]
    %v1332 = vld [vmem:[%s3 + $0x8] sm:$0xff]
    %v1333 = vld [vmem:[%s3 + $0x10] sm:$0xff]
    %v1334 = vld [vmem:[%s3 + $0x18] sm:$0xff]
    %v1335 = vld [vmem:[%s3 + $0x20] sm:$0xff]
    %v1336 = vld [vmem:[%s3 + $0x28] sm:$0xff]
    %v1337 = vld [vmem:[%s3 + $0x30] sm:$0xff]
    %v1338 = vld [vmem:[%s3 + $0x38] sm:$0xff]
    %v1339 = vld [vmem:[%s3 + $0x40] sm:$0xff]
    %v1340 = vld [vmem:[%s3 + $0x48] sm:$0xff]
    %v1341 = vld [vmem:[%s3 + $0x50] sm:$0xff]
    %v1342 = vld [vmem:[%s3 + $0x58] sm:$0xff]
    %v1343 = vld [vmem:[%s3 + $0x60] sm:$0xff]
    %v1344 = vld [vmem:[%s3 + $0x68] sm:$0xff]
    %v1345 = vld [vmem:[%s3 + $0x70] sm:$0xff]
    %v1346 = vld [vmem:[%s3 + $0x78] sm:$0xff]
    %v1347 = vld [vmem:[%s3 + $0x80] sm:$0xff]
    %v1348 = vld [vmem:[%s3 + $0x88] sm:$0xff]
    %v1349 = vld [vmem:[%s3 + $0x90] sm:$0xff]
    %v1350 = vld [vmem:[%s3 + $0x98] sm:$0xff]
    %v1351 = vld [vmem:[%s3 + $0xa0] sm:$0xff]
    %v1352 = vld [vmem:[%s3 + $0xa8] sm:$0xff]
    %v1353 = vld [vmem:[%s3 + $0xb0] sm:$0xff]
    %v1354 = vld [vmem:[%s3 + $0xb8] sm:$0xff]
    %v1355 = vld [vmem:[%s3 + $0xc0] sm:$0xff]
    %v1356 = vld [vmem:[%s3 + $0xc8] sm:$0xff]
    %v1357 = vld [vmem:[%s3 + $0xd0] sm:$0xff]
    %v1358 = vld [vmem:[%s3 + $0xd8] sm:$0xff]
    %v1359 = vld [vmem:[%s3 + $0xe0] sm:$0xff]
    %v1360 = vld [vmem:[%s3 + $0xe8] sm:$0xff]
    %v1361 = vld [vmem:[%s3 + $0xf0] sm:$0xff]
    %v1362 = vld [vmem:[%s3 + $0xf8] sm:$0xff]
    %v1363 = vmul.f32 %v1268, 1.442695
    %v1364 = vpow.pop %v1363
    %v1365 = vmul.f32 %v1270, 1.442695
    %v1366 = vpow.pop %v1365
    %v1367 = vmul.f32 %v1272, 1.442695
    %v1368 = vpow.pop %v1367
    %v1369 = vmul.f32 %v1274, 1.442695
    %v1370 = vpow.pop %v1369
    %v1371 = vmul.f32 %v1276, 1.442695
    %v1372 = vpow.pop %v1371
    %v1373 = vmul.f32 %v1278, 1.442695
    %v1374 = vpow.pop %v1373
    %v1375 = vmul.f32 %v1280, 1.442695
    %v1376 = vpow.pop %v1375
    %v1377 = vmul.f32 %v1282, 1.442695
    %v1378 = vpow.pop %v1377
    %v1379 = vmul.f32 %v1284, 1.442695
    %v1380 = vpow.pop %v1379
    %v1381 = vmul.f32 %v1286, 1.442695
    %v1382 = vpow.pop %v1381
    %v1383 = vmul.f32 %v1288, 1.442695
    %v1384 = vpow.pop %v1383
    %v1385 = vmul.f32 %v1290, 1.442695
    %v1386 = vpow.pop %v1385
    %v1387 = vmul.f32 %v1292, 1.442695
    %v1388 = vpow.pop %v1387
    %v1389 = vmul.f32 %v1294, 1.442695
    %v1390 = vpow.pop %v1389
    %v1391 = vmul.f32 %v1296, 1.442695
    %v1392 = vpow.pop %v1391
    %v1393 = vmul.f32 %v1298, 1.442695
    %v1394 = vpow.pop %v1393
    %v1395 = vmul.f32 %v1300, 1.442695
    %v1396 = vpow.pop %v1395
    %v1397 = vmul.f32 %v1302, 1.442695
    %v1398 = vpow.pop %v1397
    %v1399 = vmul.f32 %v1304, 1.442695
    %v1400 = vpow.pop %v1399
    %v1401 = vmul.f32 %v1306, 1.442695
    %v1402 = vpow.pop %v1401
    %v1403 = vmul.f32 %v1308, 1.442695
    %v1404 = vpow.pop %v1403
    %v1405 = vmul.f32 %v1310, 1.442695
    %v1406 = vpow.pop %v1405
    %v1407 = vmul.f32 %v1312, 1.442695
    %v1408 = vpow.pop %v1407
    %v1409 = vmul.f32 %v1314, 1.442695
    %v1410 = vpow.pop %v1409
    %v1411 = vmul.f32 %v1316, 1.442695
    %v1412 = vpow.pop %v1411
    %v1413 = vmul.f32 %v1318, 1.442695
    %v1414 = vpow.pop %v1413
    %v1415 = vmul.f32 %v1320, 1.442695
    %v1416 = vpow.pop %v1415
    %v1417 = vmul.f32 %v1322, 1.442695
    %v1418 = vpow.pop %v1417
    %v1419 = vmul.f32 %v1324, 1.442695
    %v1420 = vpow.pop %v1419
    %v1421 = vmul.f32 %v1326, 1.442695
    %v1422 = vpow.pop %v1421
    %v1423 = vmul.f32 %v1328, 1.442695
    %v1424 = vpow.pop %v1423
    %v1425 = vmul.f32 %v1330, 1.442695
    %v1426 = vpow.pop %v1425
    %v1427 = vmul.f32 %v1331, %v1364
    %v1428 = vmul.f32 %v1332, %v1366
    %v1429 = vmul.f32 %v1333, %v1368
    %v1430 = vmul.f32 %v1334, %v1370
    %v1431 = vmul.f32 %v1335, %v1372
    %v1432 = vmul.f32 %v1336, %v1374
    %v1433 = vmul.f32 %v1337, %v1376
    %v1434 = vmul.f32 %v1338, %v1378
    %v1435 = vmul.f32 %v1339, %v1380
    %v1436 = vmul.f32 %v1340, %v1382
    %v1437 = vmul.f32 %v1341, %v1384
    %v1438 = vmul.f32 %v1342, %v1386
    %v1439 = vmul.f32 %v1343, %v1388
    %v1440 = vmul.f32 %v1344, %v1390
    %v1441 = vmul.f32 %v1345, %v1392
    %v1442 = vmul.f32 %v1346, %v1394
    %v1443 = vmul.f32 %v1347, %v1396
    %v1444 = vmul.f32 %v1348, %v1398
    %v1445 = vmul.f32 %v1349, %v1400
    %v1446 = vmul.f32 %v1350, %v1402
    %v1447 = vmul.f32 %v1351, %v1404
    %v1448 = vmul.f32 %v1352, %v1406
    %v1449 = vmul.f32 %v1353, %v1408
    %v1450 = vmul.f32 %v1354, %v1410
    %v1451 = vmul.f32 %v1355, %v1412
    %v1452 = vmul.f32 %v1356, %v1414
    %v1453 = vmul.f32 %v1357, %v1416
    %v1454 = vmul.f32 %v1358, %v1418
    %v1455 = vmul.f32 %v1359, %v1420
    %v1456 = vmul.f32 %v1360, %v1422
    %v1457 = vmul.f32 %v1361, %v1424
    %v1458 = vmul.f32 %v1362, %v1426
    %v1459 = vadd.f32 %v1427, %v1267
    %v1460 = vadd.f32 %v1428, %v1269
    %v1461 = vadd.f32 %v1429, %v1271
    %v1462 = vadd.f32 %v1430, %v1273
    %v1463 = vadd.f32 %v1431, %v1275
    %v1464 = vadd.f32 %v1432, %v1277
    %v1465 = vadd.f32 %v1433, %v1279
    %v1466 = vadd.f32 %v1434, %v1281
    %v1467 = vadd.f32 %v1435, %v1283
    %v1468 = vadd.f32 %v1436, %v1285
    %v1469 = vadd.f32 %v1437, %v1287
    %v1470 = vadd.f32 %v1438, %v1289
    %v1471 = vadd.f32 %v1439, %v1291
    %v1472 = vadd.f32 %v1440, %v1293
    %v1473 = vadd.f32 %v1441, %v1295
    %v1474 = vadd.f32 %v1442, %v1297
    %v1475 = vadd.f32 %v1443, %v1299
    %v1476 = vadd.f32 %v1444, %v1301
    %v1477 = vadd.f32 %v1445, %v1303
    %v1478 = vadd.f32 %v1446, %v1305
    %v1479 = vadd.f32 %v1447, %v1307
    %v1480 = vadd.f32 %v1448, %v1309
    %v1481 = vadd.f32 %v1449, %v1311
    %v1482 = vadd.f32 %v1450, %v1313
    %v1483 = vadd.f32 %v1451, %v1315
    %v1484 = vadd.f32 %v1452, %v1317
    %v1485 = vadd.f32 %v1453, %v1319
    %v1486 = vadd.f32 %v1454, %v1321
    %v1487 = vadd.f32 %v1455, %v1323
    %v1488 = vadd.f32 %v1456, %v1325
    %v1489 = vadd.f32 %v1457, %v1327
    %v1490 = vadd.f32 %v1458, %v1329
    %v1491 = vpack.c.bf16 %v1459, %v1459
    %v1492 = vpack.c.bf16 %v1460, %v1460
    %v1493 = vpack.c.bf16 %v1461, %v1461
    %v1494 = vpack.c.bf16 %v1462, %v1462
    %v1495 = vpack.c.bf16 %v1463, %v1463
    %v1496 = vpack.c.bf16 %v1464, %v1464
    %v1497 = vpack.c.bf16 %v1465, %v1465
    %v1498 = vpack.c.bf16 %v1466, %v1466
    %v1499 = vpack.c.bf16 %v1467, %v1467
    %v1500 = vpack.c.bf16 %v1468, %v1468
    %v1501 = vpack.c.bf16 %v1469, %v1469
    %v1502 = vpack.c.bf16 %v1470, %v1470
    %v1503 = vpack.c.bf16 %v1471, %v1471
    %v1504 = vpack.c.bf16 %v1472, %v1472
    %v1505 = vpack.c.bf16 %v1473, %v1473
    %v1506 = vpack.c.bf16 %v1474, %v1474
    %v1507 = vpack.c.bf16 %v1475, %v1475
    %v1508 = vpack.c.bf16 %v1476, %v1476
    %v1509 = vpack.c.bf16 %v1477, %v1477
    %v1510 = vpack.c.bf16 %v1478, %v1478
    %v1511 = vpack.c.bf16 %v1479, %v1479
    %v1512 = vpack.c.bf16 %v1480, %v1480
    %v1513 = vpack.c.bf16 %v1481, %v1481
    %v1514 = vpack.c.bf16 %v1482, %v1482
    %v1515 = vpack.c.bf16 %v1483, %v1483
    %v1516 = vpack.c.bf16 %v1484, %v1484
    %v1517 = vpack.c.bf16 %v1485, %v1485
    %v1518 = vpack.c.bf16 %v1486, %v1486
    %v1519 = vpack.c.bf16 %v1487, %v1487
    %v1520 = vpack.c.bf16 %v1488, %v1488
    %v1521 = vpack.c.bf16 %v1489, %v1489
    %v1522 = vpack.c.bf16 %v1490, %v1490
    %1523 = vst [vmem:[%s4] sm:$0xf] %v1491
    %1524 = vst [vmem:[%s4 + $0x4] sm:$0xf] %v1492
    %1525 = vst [vmem:[%s4 + $0x8] sm:$0xf] %v1493
    %1526 = vst [vmem:[%s4 + $0xc] sm:$0xf] %v1494
    %1527 = vst [vmem:[%s4 + $0x10] sm:$0xf] %v1495
    %1528 = vst [vmem:[%s4 + $0x14] sm:$0xf] %v1496
    %1529 = vst [vmem:[%s4 + $0x18] sm:$0xf] %v1497
    %1530 = vst [vmem:[%s4 + $0x1c] sm:$0xf] %v1498
    %1531 = vst [vmem:[%s4 + $0x20] sm:$0xf] %v1499
    %1532 = vst [vmem:[%s4 + $0x24] sm:$0xf] %v1500
    %1533 = vst [vmem:[%s4 + $0x28] sm:$0xf] %v1501
    %1534 = vst [vmem:[%s4 + $0x2c] sm:$0xf] %v1502
    %1535 = vst [vmem:[%s4 + $0x30] sm:$0xf] %v1503
    %1536 = vst [vmem:[%s4 + $0x34] sm:$0xf] %v1504
    %1537 = vst [vmem:[%s4 + $0x38] sm:$0xf] %v1505
    %1538 = vst [vmem:[%s4 + $0x3c] sm:$0xf] %v1506
    %1539 = vst [vmem:[%s4 + $0x40] sm:$0xf] %v1507
    %1540 = vst [vmem:[%s4 + $0x44] sm:$0xf] %v1508
    %1541 = vst [vmem:[%s4 + $0x48] sm:$0xf] %v1509
    %1542 = vst [vmem:[%s4 + $0x4c] sm:$0xf] %v1510
    %1543 = vst [vmem:[%s4 + $0x50] sm:$0xf] %v1511
    %1544 = vst [vmem:[%s4 + $0x54] sm:$0xf] %v1512
    %1545 = vst [vmem:[%s4 + $0x58] sm:$0xf] %v1513
    %1546 = vst [vmem:[%s4 + $0x5c] sm:$0xf] %v1514
    %1547 = vst [vmem:[%s4 + $0x60] sm:$0xf] %v1515
    %1548 = vst [vmem:[%s4 + $0x64] sm:$0xf] %v1516
    %1549 = vst [vmem:[%s4 + $0x68] sm:$0xf] %v1517
    %1550 = vst [vmem:[%s4 + $0x6c] sm:$0xf] %v1518
    %1551 = vst [vmem:[%s4 + $0x70] sm:$0xf] %v1519
    %1552 = vst [vmem:[%s4 + $0x74] sm:$0xf] %v1520
    %1553 = vst [vmem:[%s4 + $0x78] sm:$0xf] %v1521
    %1554 = vst [vmem:[%s4 + $0x7c] sm:$0xf] %v1522
  $region25: #{vgae_forward.4} parent=0 // pred_fallthru
    _
  // Predicated region
  $region26: #{vgae_forward.4} parent=0 // pred_check
    _
  $region27: #{vgae_forward.4} parent=0 // pred_check_branch
    %1556 = sbr.rel (0) target = $region29
  $region28: #{vgae_forward.4} parent=0 // pred_region
    _
  $region29: #{vgae_forward.4} parent=0 // pred_fallthru
    _
  // Predicated region
  $region30: #{vgae_forward.4} parent=0 // pred_check
    _
  $region31: #{vgae_forward.4} parent=0 // pred_check_branch
    %1558 = sbr.rel (0) target = $region33
  $region32: #{vgae_forward.4} parent=0 // pred_region
    _
  $region33: #{vgae_forward.4} parent=0 // pred_fallthru
    _

</llo_original>
